<compile_context>
chip_gen: v6e
topology: v6e:2x2x1
jax: 0.10.0
libtpu: 0.0.40
codegen_flags: <defaults>
</compile_context>

<pallas_src>
import jax
import jax.numpy as jnp
from jax.experimental import pallas as pl
from jax.experimental.pallas import tpu as pltpu


# ----------------------------------------------------------------------------
# The fused Pallas kernel (one grid step == B_TILE images)
# ----------------------------------------------------------------------------
def _make_stem_block_kernel(h, w, b_tile):
    h1, w1 = h // 2, w // 2        # stem1 / conv1 spatial
    h2, w2 = h1 // 2, w1 // 2      # maxpool / conv2 / stem3 spatial

    def kernel(x_ref, w1_ref, b1_ref, wc1_ref, bc1_ref,
               w2_ref, b2_ref, w3a_ref, w3b_ref, b3_ref,
               o_ref, y1_ref, z_ref):
        f32 = jnp.float32
        B = b_tile

        # ---- stem1: Conv 3x3 s2 p1 (1 -> 16) + folded BN + ReLU.
        # x_ref is the zero-padded, parity-split input prepared in the wrapper:
        #   x_ref[b, ph, pw, a, c] == x_pad[b, 2a + ph, 2c + pw]
        # so every tap (kh, kw) is a contiguous static window (no strides here).
        acc1 = jnp.zeros((B, h1, w1, 16), f32)
        for kh in range(3):
            for kw in range(3):
                xt = x_ref[:, kh % 2, kw % 2,
                           pl.ds(kh // 2, h1), pl.ds(kw // 2, w1)]   # (B, h1, w1)
                # Cin == 1: the tap's contribution is a broadcast multiply over
                # the 16 output channels (trivial VPU work, no MXU needed).
                acc1 = acc1 + xt[..., None] * w1_ref[kh * 3 + kw]
        y1 = jnp.maximum(acc1 + b1_ref[...], 0.0)                    # (B, h1, w1, 16)
        y1_ref[...] = y1                       # stashed for the strided maxpool reads

        # ---- branch 2a: conv1 1x1 (16 -> 16) + folded BN + ReLU  (MXU).
        y1_flat = y1.reshape(B * h1 * w1, 16)
        z = jnp.dot(y1_flat, wc1_ref[...], preferred_element_type=f32) + bc1_ref[...]
        z = jnp.maximum(z, 0.0)

        # Stash conv1's output zero-padded (pad=1) for the 3x3 stride-2 conv2.
        z_ref[...] = jnp.zeros_like(z_ref)
        z_ref[:, 1:h1 + 1, 1:w1 + 1, :] = z.reshape(B, h1, w1, 16)

        # ---- branch 2b: conv2 3x3 s2 p1 (16 -> 16) + folded BN + ReLU.
        # 9 strided window reads from VMEM + 16x16 channel matmuls, f32 accumulate.
        acc2 = jnp.zeros((B * h2 * w2, 16), f32)
        for kh in range(3):
            for kw in range(3):
                zt = z_ref[:, pl.ds(kh, h2, 2), pl.ds(kw, w2, 2), :]  # (B, h2, w2, 16)
                acc2 = acc2 + jnp.dot(zt.reshape(B * h2 * w2, 16),
                                      w2_ref[kh * 3 + kw],
                                      preferred_element_type=f32)
        y2 = jnp.maximum(acc2 + b2_ref[...], 0.0)                     # (B*h2*w2, 16)

        # ---- branch 1: MaxPool2d(2, 2) = elementwise max of 4 strided windows.
        x1 = y1_ref[:, pl.ds(0, h2, 2), pl.ds(0, w2, 2), :]
        for ph, pw in ((0, 1), (1, 0), (1, 1)):
            x1 = jnp.maximum(x1, y1_ref[:, pl.ds(ph, h2, 2), pl.ds(pw, w2, 2), :])
        x1 = x1.reshape(B * h2 * w2, 16)

        # ---- stem3 1x1 (32 -> 32) on concat([pool, conv]) -- concat-free split.
        out = (jnp.dot(x1, w3a_ref[...], preferred_element_type=f32)
               + jnp.dot(y2, w3b_ref[...], preferred_element_type=f32)
               + b3_ref[...])
        o_ref[...] = jnp.maximum(out, 0.0).reshape(B, h2 * w2, 32)

    return kernel


# ----------------------------------------------------------------------------
# Eval-mode BN folding
# ----------------------------------------------------------------------------
def _fold_bn(gamma, beta, mean, var, bias, eps=1e-5):
    scale = gamma / jnp.sqrt(var + eps)
    shift = (bias - mean) * scale + beta
    return scale, shift.reshape(1, -1)


# ----------------------------------------------------------------------------
# StemBlock forward (Pallas)
# ----------------------------------------------------------------------------
def stem_block_pallas(x_nchw, params, *, b_tile=None):
    n, cin, h, w = x_nchw.shape
    assert cin == 1, "StemBlock.stem1 expects a single input channel"
    assert h % 4 == 0 and w % 4 == 0, "spatial dims must be divisible by 4"
    h1, w1 = h // 2, w // 2
    h2, w2 = h1 // 2, w1 // 2

    if b_tile is None:
        # Largest divisor of n that keeps >= 2 grid steps (v7x has 2 TCs) and <= 8.
        b_tile = 1
        for cand in range(min(8, max(1, n // 2)), 0, -1):
            if n % cand == 0:
                b_tile = cand
                break
    assert n % b_tile == 0, (n, b_tile)

    # Zero-pad (pad=1) and parity-split the input in the wrapper (pure layout
    # plumbing on a tiny array): x_ps[n, ph, pw, a, b] == x_pad[n, 2a+ph, 2b+pw],
    # so every in-kernel stem1 tap is a contiguous window (no lane-strided reads).
    x = x_nchw.astype(jnp.float32).reshape(n, h, w)
    x_pad = jnp.pad(x, ((0, 0), (1, 1), (1, 1)))
    x_ps = x_pad.reshape(n, h1 + 1, 2, w1 + 1, 2).transpose(0, 2, 4, 1, 3)

    # Fold eval-mode BN scale into the conv weights (one-time wrapper ops).
    s1, b1 = _fold_bn(*params["bn_stem1"], params["stem1_b"])
    w1f = jnp.transpose(params["stem1_w"][:, 0], (1, 2, 0)).reshape(9, 16) * s1

    sc1, bc1 = _fold_bn(*params["bn_conv1"], params["conv1_b"])
    wc1f = params["conv1_w"][:, :, 0, 0].T * sc1

    s2, b2 = _fold_bn(*params["bn_conv2"], params["conv2_b"])
    w2f = jnp.transpose(params["conv2_w"], (2, 3, 1, 0)).reshape(9, 16, 16) * s2

    s3, b3 = _fold_bn(*params["bn_stem3"], params["stem3_b"])
    w3 = params["stem3_w"][:, :, 0, 0].T * s3        # (32 in, 32 out), BN folded
    w3a, w3b = w3[:16], w3[16:]                      # pool-branch / conv-branch rows

    def const(nd):
        return lambda i: (0,) * nd

    out = pl.pallas_call(
        _make_stem_block_kernel(h, w, b_tile),
        out_shape=jax.ShapeDtypeStruct((n, h2 * w2, 32), jnp.float32),
        grid=(n // b_tile,),
        in_specs=[
            pl.BlockSpec((b_tile, 2, 2, h1 + 1, w1 + 1),
                         lambda i: (i, 0, 0, 0, 0)),   # x (padded + parity-split)
            pl.BlockSpec((9, 16), const(2)),           # stem1 weights (BN folded)
            pl.BlockSpec((1, 16), const(2)),           # stem1 shift
            pl.BlockSpec((16, 16), const(2)),          # conv1 weights (BN folded)
            pl.BlockSpec((1, 16), const(2)),           # conv1 shift
            pl.BlockSpec((9, 16, 16), const(3)),       # conv2 weights (BN folded)
            pl.BlockSpec((1, 16), const(2)),           # conv2 shift
            pl.BlockSpec((16, 32), const(2)),          # stem3 weights (pool rows)
            pl.BlockSpec((16, 32), const(2)),          # stem3 weights (conv rows)
            pl.BlockSpec((1, 32), const(2)),           # stem3 shift
        ],
        out_specs=pl.BlockSpec((b_tile, h2 * w2, 32), lambda i: (i, 0, 0)),
        scratch_shapes=[
            pltpu.VMEM((b_tile, h1, w1, 16), jnp.float32),           # stem1 output
            pltpu.VMEM((b_tile, h1 + 2, w1 + 2, 16), jnp.float32),   # conv1 out, padded
        ],
        compiler_params=pltpu.CompilerParams(
            dimension_semantics=("parallel",)),
    )(x_ps, w1f, b1, wc1f, bc1, w2f, b2, w3a, w3b, b3)

    out = out.reshape(n, h2, w2, 32)
    return jnp.transpose(out, (0, 3, 1, 2))            # NHWC -> NCHW


# ----------------------------------------------------------------------------
# Pure-JAX reference (numerical sanity check, eval-mode BN)
# ----------------------------------------------------------------------------
def stem_block_reference(x_nchw, params):
    x = jnp.transpose(x_nchw, (0, 2, 3, 1)).astype(jnp.float32)
    dn = ("NHWC", "HWIO", "NHWC")

    def conv(x, w, b, stride, pad):
        w_hwio = jnp.transpose(w, (2, 3, 1, 0))
        y = jax.lax.conv_general_dilated(
            x, w_hwio, window_strides=(stride, stride),
            padding=[(pad, pad), (pad, pad)], dimension_numbers=dn,
            precision=jax.lax.Precision.HIGHEST)
        return y + b.reshape(1, 1, 1, -1)

    def bn_relu(x, bn, eps=1e-5):
        gamma, beta, mean, var = bn
        y = (x - mean) / jnp.sqrt(var + eps) * gamma + beta
        return jnp.maximum(y, 0.0)

    y = bn_relu(conv(x, params["stem1_w"], params["stem1_b"], 2, 1), params["bn_stem1"])
    x1 = jax.lax.reduce_window(y, -jnp.inf, jax.lax.max, (1, 2, 2, 1), (1, 2, 2, 1), "VALID")
    y2 = bn_relu(conv(y, params["conv1_w"], params["conv1_b"], 1, 0), params["bn_conv1"])
    y2 = bn_relu(conv(y2, params["conv2_w"], params["conv2_b"], 2, 1), params["bn_conv2"])
    cat = jnp.concatenate([x1, y2], axis=-1)
    out = bn_relu(conv(cat, params["stem3_w"], params["stem3_b"], 1, 0), params["bn_stem3"])
    return jnp.transpose(out, (0, 3, 1, 2))


# ----------------------------------------------------------------------------
# Deterministic parameter init (shapes follow the PyTorch module __init__)
# ----------------------------------------------------------------------------
def init_params(key):
    ks = jax.random.split(key, 12)

    def w(k, shape):
        return 0.1 * jax.random.normal(k, shape, jnp.float32)

    def bn(k, c):
        k1, k2, k3, k4 = jax.random.split(k, 4)
        gamma = 1.0 + 0.1 * jax.random.normal(k1, (c,), jnp.float32)
        beta = 0.1 * jax.random.normal(k2, (c,), jnp.float32)
        mean = 0.1 * jax.random.normal(k3, (c,), jnp.float32)
        var = 0.5 + 0.1 * jnp.abs(jax.random.normal(k4, (c,), jnp.float32))
        return (gamma, beta, mean, var)

    return {
        "stem1_w": w(ks[0], (16, 1, 3, 3)),  "stem1_b": w(ks[1], (16,)),
        "bn_stem1": bn(ks[2], 16),
        "conv1_w": w(ks[3], (16, 16, 1, 1)), "conv1_b": w(ks[4], (16,)),
        "bn_conv1": bn(ks[5], 16),
        "conv2_w": w(ks[6], (16, 16, 3, 3)), "conv2_b": w(ks[7], (16,)),
        "bn_conv2": bn(ks[8], 16),
        "stem3_w": w(ks[9], (32, 32, 1, 1)), "stem3_b": w(ks[10], (32,)),
        "bn_stem3": bn(ks[11], 32),
    }


if __name__ == "__main__":
    key = jax.random.PRNGKey(0)
    kx, kp = jax.random.split(key)
    # batch 8 so the grid has 2 steps of B_TILE=4 (both v7x TCs get work,
    # matmul M = 4*8*8 = 256 rows per step).
    x = jax.random.normal(kx, (8, 1, 16, 16), jnp.float32)  # NCHW, like torch
    params = init_params(kp)

    fwd = jax.jit(stem_block_pallas)
    out = fwd(x, params)
    jax.block_until_ready(out)

    ref = stem_block_reference(x, params)
    assert out.shape == (8, 32, 4, 4), out.shape
    # Default-precision MXU matmuls round f32 inputs to bf16 passes; the spatial
    # gathers themselves are now exact (windows / max), so the error budget is
    # only the 4 small channel contractions.
    assert bool(jnp.allclose(out, ref, atol=2e-2, rtol=2e-2)), \
        float(jnp.max(jnp.abs(out - ref)))
    print("KERNEL_OK")
</pallas_src>

<mosaic_0001>
module attributes {stable_mosaic.version = 11 : i64} {
  func.func @kernel(%arg0: i32, %arg1: memref<4x2x2x9x9xf32, #tpu.memory_space<vmem>>, %arg2: memref<9x16xf32, #tpu.memory_space<vmem>>, %arg3: memref<1x16xf32, #tpu.memory_space<vmem>>, %arg4: memref<16x16xf32, #tpu.memory_space<vmem>>, %arg5: memref<1x16xf32, #tpu.memory_space<vmem>>, %arg6: memref<9x16x16xf32, #tpu.memory_space<vmem>>, %arg7: memref<1x16xf32, #tpu.memory_space<vmem>>, %arg8: memref<16x32xf32, #tpu.memory_space<vmem>>, %arg9: memref<16x32xf32, #tpu.memory_space<vmem>>, %arg10: memref<1x32xf32, #tpu.memory_space<vmem>>, %arg11: memref<4x16x32xf32, #tpu.memory_space<vmem>>, %arg12: memref<4x8x8x16xf32, #tpu.memory_space<vmem>>, %arg13: memref<4x10x10x16xf32, #tpu.memory_space<vmem>>) attributes {dimension_semantics = [#tpu.dimension_semantics<parallel>], iteration_bounds = array<i64: 2>, scalar_prefetch = 0 : i64, scratch_operands = 2 : i64, tpu.core_type = #tpu.core_type<tc>, window_params = [{transform_indices = @transform_0, window_bounds = array<i64: 4, 2, 2, 9, 9>}, {pipeline_mode = #tpu.pipeline_mode<synchronous>, transform_indices = @transform_1, window_bounds = array<i64: 9, 16>}, {pipeline_mode = #tpu.pipeline_mode<synchronous>, transform_indices = @transform_2, window_bounds = array<i64: 1, 16>}, {pipeline_mode = #tpu.pipeline_mode<synchronous>, transform_indices = @transform_3, window_bounds = array<i64: 16, 16>}, {pipeline_mode = #tpu.pipeline_mode<synchronous>, transform_indices = @transform_4, window_bounds = array<i64: 1, 16>}, {pipeline_mode = #tpu.pipeline_mode<synchronous>, transform_indices = @transform_5, window_bounds = array<i64: 9, 16, 16>}, {pipeline_mode = #tpu.pipeline_mode<synchronous>, transform_indices = @transform_6, window_bounds = array<i64: 1, 16>}, {pipeline_mode = #tpu.pipeline_mode<synchronous>, transform_indices = @transform_7, window_bounds = array<i64: 16, 32>}, {pipeline_mode = #tpu.pipeline_mode<synchronous>, transform_indices = @transform_8, window_bounds = array<i64: 16, 32>}, {pipeline_mode = #tpu.pipeline_mode<synchronous>, transform_indices = @transform_9, window_bounds = array<i64: 1, 32>}, {transform_indices = @transform_10, window_bounds = array<i64: 4, 16, 32>}]} {
    %cst = arith.constant 0.000000e+00 : f32
    %0 = vector.broadcast %cst : f32 to vector<4x8x8x16xf32>
    %c0 = arith.constant 0 : index
    %c0_0 = arith.constant 0 : index
    %c0_1 = arith.constant 0 : index
    %c0_2 = arith.constant 0 : index
    %c0_3 = arith.constant 0 : index
    %1 = vector.load %arg1[%c0, %c0_0, %c0_1, %c0_2, %c0_3] : memref<4x2x2x9x9xf32, #tpu.memory_space<vmem>>, vector<4x1x1x8x8xf32>
    %2 = vector.shape_cast %1 : vector<4x1x1x8x8xf32> to vector<4x8x8xf32>
    %3 = vector.shape_cast %2 : vector<4x8x8xf32> to vector<4x8x8x1xf32>
    %c0_4 = arith.constant 0 : index
    %c0_5 = arith.constant 0 : index
    %4 = vector.load %arg2[%c0_4, %c0_5] : memref<9x16xf32, #tpu.memory_space<vmem>>, vector<1x16xf32>
    %5 = vector.shape_cast %4 : vector<1x16xf32> to vector<16xf32>
    %6 = vector.shape_cast %5 : vector<16xf32> to vector<1x1x1x16xf32>
    %7 = vector.broadcast %3 : vector<4x8x8x1xf32> to vector<4x8x8x16xf32>
    %8 = vector.broadcast %6 : vector<1x1x1x16xf32> to vector<4x8x8x16xf32>
    %9 = arith.mulf %7, %8 : vector<4x8x8x16xf32>
    %10 = arith.addf %0, %9 : vector<4x8x8x16xf32>
    %c0_6 = arith.constant 0 : index
    %c0_7 = arith.constant 0 : index
    %c1 = arith.constant 1 : index
    %c0_8 = arith.constant 0 : index
    %c0_9 = arith.constant 0 : index
    %11 = vector.load %arg1[%c0_6, %c0_7, %c1, %c0_8, %c0_9] : memref<4x2x2x9x9xf32, #tpu.memory_space<vmem>>, vector<4x1x1x8x8xf32>
    %12 = vector.shape_cast %11 : vector<4x1x1x8x8xf32> to vector<4x8x8xf32>
    %13 = vector.shape_cast %12 : vector<4x8x8xf32> to vector<4x8x8x1xf32>
    %c1_10 = arith.constant 1 : index
    %c0_11 = arith.constant 0 : index
    %14 = vector.load %arg2[%c1_10, %c0_11] : memref<9x16xf32, #tpu.memory_space<vmem>>, vector<1x16xf32>
    %15 = vector.shape_cast %14 : vector<1x16xf32> to vector<16xf32>
    %16 = vector.shape_cast %15 : vector<16xf32> to vector<1x1x1x16xf32>
    %17 = vector.broadcast %13 : vector<4x8x8x1xf32> to vector<4x8x8x16xf32>
    %18 = vector.broadcast %16 : vector<1x1x1x16xf32> to vector<4x8x8x16xf32>
    %19 = arith.mulf %17, %18 : vector<4x8x8x16xf32>
    %20 = arith.addf %10, %19 : vector<4x8x8x16xf32>
    %c0_12 = arith.constant 0 : index
    %c0_13 = arith.constant 0 : index
    %c0_14 = arith.constant 0 : index
    %c0_15 = arith.constant 0 : index
    %c1_16 = arith.constant 1 : index
    %21 = vector.load %arg1[%c0_12, %c0_13, %c0_14, %c0_15, %c1_16] : memref<4x2x2x9x9xf32, #tpu.memory_space<vmem>>, vector<4x1x1x8x8xf32>
    %22 = vector.shape_cast %21 : vector<4x1x1x8x8xf32> to vector<4x8x8xf32>
    %23 = vector.shape_cast %22 : vector<4x8x8xf32> to vector<4x8x8x1xf32>
    %c2 = arith.constant 2 : index
    %c0_17 = arith.constant 0 : index
    %24 = vector.load %arg2[%c2, %c0_17] : memref<9x16xf32, #tpu.memory_space<vmem>>, vector<1x16xf32>
    %25 = vector.shape_cast %24 : vector<1x16xf32> to vector<16xf32>
    %26 = vector.shape_cast %25 : vector<16xf32> to vector<1x1x1x16xf32>
    %27 = vector.broadcast %23 : vector<4x8x8x1xf32> to vector<4x8x8x16xf32>
    %28 = vector.broadcast %26 : vector<1x1x1x16xf32> to vector<4x8x8x16xf32>
    %29 = arith.mulf %27, %28 : vector<4x8x8x16xf32>
    %30 = arith.addf %20, %29 : vector<4x8x8x16xf32>
    %c0_18 = arith.constant 0 : index
    %c1_19 = arith.constant 1 : index
    %c0_20 = arith.constant 0 : index
    %c0_21 = arith.constant 0 : index
    %c0_22 = arith.constant 0 : index
    %31 = vector.load %arg1[%c0_18, %c1_19, %c0_20, %c0_21, %c0_22] : memref<4x2x2x9x9xf32, #tpu.memory_space<vmem>>, vector<4x1x1x8x8xf32>
    %32 = vector.shape_cast %31 : vector<4x1x1x8x8xf32> to vector<4x8x8xf32>
    %33 = vector.shape_cast %32 : vector<4x8x8xf32> to vector<4x8x8x1xf32>
    %c3 = arith.constant 3 : index
    %c0_23 = arith.constant 0 : index
    %34 = vector.load %arg2[%c3, %c0_23] : memref<9x16xf32, #tpu.memory_space<vmem>>, vector<1x16xf32>
    %35 = vector.shape_cast %34 : vector<1x16xf32> to vector<16xf32>
    %36 = vector.shape_cast %35 : vector<16xf32> to vector<1x1x1x16xf32>
    %37 = vector.broadcast %33 : vector<4x8x8x1xf32> to vector<4x8x8x16xf32>
    %38 = vector.broadcast %36 : vector<1x1x1x16xf32> to vector<4x8x8x16xf32>
    %39 = arith.mulf %37, %38 : vector<4x8x8x16xf32>
    %40 = arith.addf %30, %39 : vector<4x8x8x16xf32>
    %c0_24 = arith.constant 0 : index
    %c1_25 = arith.constant 1 : index
    %c1_26 = arith.constant 1 : index
    %c0_27 = arith.constant 0 : index
    %c0_28 = arith.constant 0 : index
    %41 = vector.load %arg1[%c0_24, %c1_25, %c1_26, %c0_27, %c0_28] : memref<4x2x2x9x9xf32, #tpu.memory_space<vmem>>, vector<4x1x1x8x8xf32>
    %42 = vector.shape_cast %41 : vector<4x1x1x8x8xf32> to vector<4x8x8xf32>
    %43 = vector.shape_cast %42 : vector<4x8x8xf32> to vector<4x8x8x1xf32>
    %c4 = arith.constant 4 : index
    %c0_29 = arith.constant 0 : index
    %44 = vector.load %arg2[%c4, %c0_29] : memref<9x16xf32, #tpu.memory_space<vmem>>, vector<1x16xf32>
    %45 = vector.shape_cast %44 : vector<1x16xf32> to vector<16xf32>
    %46 = vector.shape_cast %45 : vector<16xf32> to vector<1x1x1x16xf32>
    %47 = vector.broadcast %43 : vector<4x8x8x1xf32> to vector<4x8x8x16xf32>
    %48 = vector.broadcast %46 : vector<1x1x1x16xf32> to vector<4x8x8x16xf32>
    %49 = arith.mulf %47, %48 : vector<4x8x8x16xf32>
    %50 = arith.addf %40, %49 : vector<4x8x8x16xf32>
    %c0_30 = arith.constant 0 : index
    %c1_31 = arith.constant 1 : index
    %c0_32 = arith.constant 0 : index
    %c0_33 = arith.constant 0 : index
    %c1_34 = arith.constant 1 : index
    %51 = vector.load %arg1[%c0_30, %c1_31, %c0_32, %c0_33, %c1_34] : memref<4x2x2x9x9xf32, #tpu.memory_space<vmem>>, vector<4x1x1x8x8xf32>
    %52 = vector.shape_cast %51 : vector<4x1x1x8x8xf32> to vector<4x8x8xf32>
    %53 = vector.shape_cast %52 : vector<4x8x8xf32> to vector<4x8x8x1xf32>
    %c5 = arith.constant 5 : index
    %c0_35 = arith.constant 0 : index
    %54 = vector.load %arg2[%c5, %c0_35] : memref<9x16xf32, #tpu.memory_space<vmem>>, vector<1x16xf32>
    %55 = vector.shape_cast %54 : vector<1x16xf32> to vector<16xf32>
    %56 = vector.shape_cast %55 : vector<16xf32> to vector<1x1x1x16xf32>
    %57 = vector.broadcast %53 : vector<4x8x8x1xf32> to vector<4x8x8x16xf32>
    %58 = vector.broadcast %56 : vector<1x1x1x16xf32> to vector<4x8x8x16xf32>
    %59 = arith.mulf %57, %58 : vector<4x8x8x16xf32>
    %60 = arith.addf %50, %59 : vector<4x8x8x16xf32>
    %c0_36 = arith.constant 0 : index
    %c0_37 = arith.constant 0 : index
    %c0_38 = arith.constant 0 : index
    %c1_39 = arith.constant 1 : index
    %c0_40 = arith.constant 0 : index
    %61 = vector.load %arg1[%c0_36, %c0_37, %c0_38, %c1_39, %c0_40] : memref<4x2x2x9x9xf32, #tpu.memory_space<vmem>>, vector<4x1x1x8x8xf32>
    %62 = vector.shape_cast %61 : vector<4x1x1x8x8xf32> to vector<4x8x8xf32>
    %63 = vector.shape_cast %62 : vector<4x8x8xf32> to vector<4x8x8x1xf32>
    %c6 = arith.constant 6 : index
    %c0_41 = arith.constant 0 : index
    %64 = vector.load %arg2[%c6, %c0_41] : memref<9x16xf32, #tpu.memory_space<vmem>>, vector<1x16xf32>
    %65 = vector.shape_cast %64 : vector<1x16xf32> to vector<16xf32>
    %66 = vector.shape_cast %65 : vector<16xf32> to vector<1x1x1x16xf32>
    %67 = vector.broadcast %63 : vector<4x8x8x1xf32> to vector<4x8x8x16xf32>
    %68 = vector.broadcast %66 : vector<1x1x1x16xf32> to vector<4x8x8x16xf32>
    %69 = arith.mulf %67, %68 : vector<4x8x8x16xf32>
    %70 = arith.addf %60, %69 : vector<4x8x8x16xf32>
    %c0_42 = arith.constant 0 : index
    %c0_43 = arith.constant 0 : index
    %c1_44 = arith.constant 1 : index
    %c1_45 = arith.constant 1 : index
    %c0_46 = arith.constant 0 : index
    %71 = vector.load %arg1[%c0_42, %c0_43, %c1_44, %c1_45, %c0_46] : memref<4x2x2x9x9xf32, #tpu.memory_space<vmem>>, vector<4x1x1x8x8xf32>
    %72 = vector.shape_cast %71 : vector<4x1x1x8x8xf32> to vector<4x8x8xf32>
    %73 = vector.shape_cast %72 : vector<4x8x8xf32> to vector<4x8x8x1xf32>
    %c7 = arith.constant 7 : index
    %c0_47 = arith.constant 0 : index
    %74 = vector.load %arg2[%c7, %c0_47] : memref<9x16xf32, #tpu.memory_space<vmem>>, vector<1x16xf32>
    %75 = vector.shape_cast %74 : vector<1x16xf32> to vector<16xf32>
    %76 = vector.shape_cast %75 : vector<16xf32> to vector<1x1x1x16xf32>
    %77 = vector.broadcast %73 : vector<4x8x8x1xf32> to vector<4x8x8x16xf32>
    %78 = vector.broadcast %76 : vector<1x1x1x16xf32> to vector<4x8x8x16xf32>
    %79 = arith.mulf %77, %78 : vector<4x8x8x16xf32>
    %80 = arith.addf %70, %79 : vector<4x8x8x16xf32>
    %c0_48 = arith.constant 0 : index
    %c0_49 = arith.constant 0 : index
    %c0_50 = arith.constant 0 : index
    %c1_51 = arith.constant 1 : index
    %c1_52 = arith.constant 1 : index
    %81 = vector.load %arg1[%c0_48, %c0_49, %c0_50, %c1_51, %c1_52] : memref<4x2x2x9x9xf32, #tpu.memory_space<vmem>>, vector<4x1x1x8x8xf32>
    %82 = vector.shape_cast %81 : vector<4x1x1x8x8xf32> to vector<4x8x8xf32>
    %83 = vector.shape_cast %82 : vector<4x8x8xf32> to vector<4x8x8x1xf32>
    %c8 = arith.constant 8 : index
    %c0_53 = arith.constant 0 : index
    %84 = vector.load %arg2[%c8, %c0_53] : memref<9x16xf32, #tpu.memory_space<vmem>>, vector<1x16xf32>
    %85 = vector.shape_cast %84 : vector<1x16xf32> to vector<16xf32>
    %86 = vector.shape_cast %85 : vector<16xf32> to vector<1x1x1x16xf32>
    %87 = vector.broadcast %83 : vector<4x8x8x1xf32> to vector<4x8x8x16xf32>
    %88 = vector.broadcast %86 : vector<1x1x1x16xf32> to vector<4x8x8x16xf32>
    %89 = arith.mulf %87, %88 : vector<4x8x8x16xf32>
    %90 = arith.addf %80, %89 : vector<4x8x8x16xf32>
    %c0_54 = arith.constant 0 : index
    %c0_55 = arith.constant 0 : index
    %91 = vector.load %arg3[%c0_54, %c0_55] : memref<1x16xf32, #tpu.memory_space<vmem>>, vector<1x16xf32>
    %92 = vector.shape_cast %91 : vector<1x16xf32> to vector<1x1x1x16xf32>
    %93 = vector.broadcast %92 : vector<1x1x1x16xf32> to vector<4x8x8x16xf32>
    %94 = arith.addf %90, %93 : vector<4x8x8x16xf32>
    %cst_56 = arith.constant 0.000000e+00 : f32
    %95 = vector.broadcast %cst_56 : f32 to vector<4x8x8x16xf32>
    %96 = arith.maximumf %94, %95 : vector<4x8x8x16xf32>
    %c0_57 = arith.constant 0 : index
    %c0_58 = arith.constant 0 : index
    %c0_59 = arith.constant 0 : index
    %c0_60 = arith.constant 0 : index
    %97 = vector.load %arg12[%c0_57, %c0_58, %c0_59, %c0_60] : memref<4x8x8x16xf32, #tpu.memory_space<vmem>>, vector<4x8x8x16xf32>
    tpu.vector_store %arg12[%c0_57, %c0_58, %c0_59, %c0_60], %96 {strides = array<i32>} : memref<4x8x8x16xf32, #tpu.memory_space<vmem>>, vector<4x8x8x16xf32>,
    %98 = vector.shape_cast %96 : vector<4x8x8x16xf32> to vector<256x16xf32>
    %c0_61 = arith.constant 0 : index
    %c0_62 = arith.constant 0 : index
    %99 = vector.load %arg4[%c0_61, %c0_62] : memref<16x16xf32, #tpu.memory_space<vmem>>, vector<16x16xf32>
    %cst_63 = arith.constant dense<0.000000e+00> : vector<256x16xf32>
    %100 = tpu.matmul %98, %99, %cst_63 {dimension_numbers = #tpu.dot_dimension_numbers<[1], [0], [0], [1], [0, 0, 1, 1], [], []>} : vector<256x16xf32>, vector<16x16xf32>, vector<256x16xf32> -> vector<256x16xf32>
    %c0_64 = arith.constant 0 : index
    %c0_65 = arith.constant 0 : index
    %101 = vector.load %arg5[%c0_64, %c0_65] : memref<1x16xf32, #tpu.memory_space<vmem>>, vector<1x16xf32>
    %102 = vector.broadcast %101 : vector<1x16xf32> to vector<256x16xf32>
    %103 = arith.addf %100, %102 : vector<256x16xf32>
    %cst_66 = arith.constant 0.000000e+00 : f32
    %104 = vector.broadcast %cst_66 : f32 to vector<256x16xf32>
    %105 = arith.maximumf %103, %104 : vector<256x16xf32>
    %cst_67 = arith.constant 0.000000e+00 : f32
    %106 = vector.broadcast %cst_67 : f32 to vector<4x10x10x16xf32>
    %c0_68 = arith.constant 0 : index
    %c0_69 = arith.constant 0 : index
    %c0_70 = arith.constant 0 : index
    %c0_71 = arith.constant 0 : index
    %107 = vector.load %arg13[%c0_68, %c0_69, %c0_70, %c0_71] : memref<4x10x10x16xf32, #tpu.memory_space<vmem>>, vector<4x10x10x16xf32>
    tpu.vector_store %arg13[%c0_68, %c0_69, %c0_70, %c0_71], %106 {strides = array<i32>} : memref<4x10x10x16xf32, #tpu.memory_space<vmem>>, vector<4x10x10x16xf32>,
    %108 = vector.shape_cast %105 : vector<256x16xf32> to vector<4x8x8x16xf32>
    %c0_72 = arith.constant 0 : index
    %c1_73 = arith.constant 1 : index
    %c1_74 = arith.constant 1 : index
    %c0_75 = arith.constant 0 : index
    %109 = vector.load %arg13[%c0_72, %c1_73, %c1_74, %c0_75] : memref<4x10x10x16xf32, #tpu.memory_space<vmem>>, vector<4x8x8x16xf32>
    tpu.vector_store %arg13[%c0_72, %c1_73, %c1_74, %c0_75], %108 {strides = array<i32>} : memref<4x10x10x16xf32, #tpu.memory_space<vmem>>, vector<4x8x8x16xf32>,
    %cst_76 = arith.constant 0.000000e+00 : f32
    %110 = vector.broadcast %cst_76 : f32 to vector<64x16xf32>
    %c0_77 = arith.constant 0 : index
    %c0_78 = arith.constant 0 : index
    %c0_79 = arith.constant 0 : index
    %c0_80 = arith.constant 0 : index
    %111 = tpu.strided_load %arg13[%c0_77, %c0_78, %c0_79, %c0_80] {strides = array<i32: 1, 2, 2, 1>} : memref<4x10x10x16xf32, #tpu.memory_space<vmem>>, vector<4x4x4x16xf32>
    %112 = vector.shape_cast %111 : vector<4x4x4x16xf32> to vector<64x16xf32>
    %c0_81 = arith.constant 0 : index
    %c0_82 = arith.constant 0 : index
    %c0_83 = arith.constant 0 : index
    %113 = vector.load %arg6[%c0_81, %c0_82, %c0_83] : memref<9x16x16xf32, #tpu.memory_space<vmem>>, vector<1x16x16xf32>
    %114 = vector.shape_cast %113 : vector<1x16x16xf32> to vector<16x16xf32>
    %cst_84 = arith.constant dense<0.000000e+00> : vector<64x16xf32>
    %115 = tpu.matmul %112, %114, %cst_84 {dimension_numbers = #tpu.dot_dimension_numbers<[1], [0], [0], [1], [0, 0, 1, 1], [], []>} : vector<64x16xf32>, vector<16x16xf32>, vector<64x16xf32> -> vector<64x16xf32>
    %116 = arith.addf %110, %115 : vector<64x16xf32>
    %c0_85 = arith.constant 0 : index
    %c0_86 = arith.constant 0 : index
    %c1_87 = arith.constant 1 : index
    %c0_88 = arith.constant 0 : index
    %117 = tpu.strided_load %arg13[%c0_85, %c0_86, %c1_87, %c0_88] {strides = array<i32: 1, 2, 2, 1>} : memref<4x10x10x16xf32, #tpu.memory_space<vmem>>, vector<4x4x4x16xf32>
    %118 = vector.shape_cast %117 : vector<4x4x4x16xf32> to vector<64x16xf32>
    %c1_89 = arith.constant 1 : index
    %c0_90 = arith.constant 0 : index
    %c0_91 = arith.constant 0 : index
    %119 = vector.load %arg6[%c1_89, %c0_90, %c0_91] : memref<9x16x16xf32, #tpu.memory_space<vmem>>, vector<1x16x16xf32>
    %120 = vector.shape_cast %119 : vector<1x16x16xf32> to vector<16x16xf32>
    %cst_92 = arith.constant dense<0.000000e+00> : vector<64x16xf32>
    %121 = tpu.matmul %118, %120, %cst_92 {dimension_numbers = #tpu.dot_dimension_numbers<[1], [0], [0], [1], [0, 0, 1, 1], [], []>} : vector<64x16xf32>, vector<16x16xf32>, vector<64x16xf32> -> vector<64x16xf32>
    %122 = arith.addf %116, %121 : vector<64x16xf32>
    %c0_93 = arith.constant 0 : index
    %c0_94 = arith.constant 0 : index
    %c2_95 = arith.constant 2 : index
    %c0_96 = arith.constant 0 : index
    %123 = tpu.strided_load %arg13[%c0_93, %c0_94, %c2_95, %c0_96] {strides = array<i32: 1, 2, 2, 1>} : memref<4x10x10x16xf32, #tpu.memory_space<vmem>>, vector<4x4x4x16xf32>
    %124 = vector.shape_cast %123 : vector<4x4x4x16xf32> to vector<64x16xf32>
    %c2_97 = arith.constant 2 : index
    %c0_98 = arith.constant 0 : index
    %c0_99 = arith.constant 0 : index
    %125 = vector.load %arg6[%c2_97, %c0_98, %c0_99] : memref<9x16x16xf32, #tpu.memory_space<vmem>>, vector<1x16x16xf32>
    %126 = vector.shape_cast %125 : vector<1x16x16xf32> to vector<16x16xf32>
    %cst_100 = arith.constant dense<0.000000e+00> : vector<64x16xf32>
    %127 = tpu.matmul %124, %126, %cst_100 {dimension_numbers = #tpu.dot_dimension_numbers<[1], [0], [0], [1], [0, 0, 1, 1], [], []>} : vector<64x16xf32>, vector<16x16xf32>, vector<64x16xf32> -> vector<64x16xf32>
    %128 = arith.addf %122, %127 : vector<64x16xf32>
    %c0_101 = arith.constant 0 : index
    %c1_102 = arith.constant 1 : index
    %c0_103 = arith.constant 0 : index
    %c0_104 = arith.constant 0 : index
    %129 = tpu.strided_load %arg13[%c0_101, %c1_102, %c0_103, %c0_104] {strides = array<i32: 1, 2, 2, 1>} : memref<4x10x10x16xf32, #tpu.memory_space<vmem>>, vector<4x4x4x16xf32>
    %130 = vector.shape_cast %129 : vector<4x4x4x16xf32> to vector<64x16xf32>
    %c3_105 = arith.constant 3 : index
    %c0_106 = arith.constant 0 : index
    %c0_107 = arith.constant 0 : index
    %131 = vector.load %arg6[%c3_105, %c0_106, %c0_107] : memref<9x16x16xf32, #tpu.memory_space<vmem>>, vector<1x16x16xf32>
    %132 = vector.shape_cast %131 : vector<1x16x16xf32> to vector<16x16xf32>
    %cst_108 = arith.constant dense<0.000000e+00> : vector<64x16xf32>
    %133 = tpu.matmul %130, %132, %cst_108 {dimension_numbers = #tpu.dot_dimension_numbers<[1], [0], [0], [1], [0, 0, 1, 1], [], []>} : vector<64x16xf32>, vector<16x16xf32>, vector<64x16xf32> -> vector<64x16xf32>
    %134 = arith.addf %128, %133 : vector<64x16xf32>
    %c0_109 = arith.constant 0 : index
    %c1_110 = arith.constant 1 : index
    %c1_111 = arith.constant 1 : index
    %c0_112 = arith.constant 0 : index
    %135 = tpu.strided_load %arg13[%c0_109, %c1_110, %c1_111, %c0_112] {strides = array<i32: 1, 2, 2, 1>} : memref<4x10x10x16xf32, #tpu.memory_space<vmem>>, vector<4x4x4x16xf32>
    %136 = vector.shape_cast %135 : vector<4x4x4x16xf32> to vector<64x16xf32>
    %c4_113 = arith.constant 4 : index
    %c0_114 = arith.constant 0 : index
    %c0_115 = arith.constant 0 : index
    %137 = vector.load %arg6[%c4_113, %c0_114, %c0_115] : memref<9x16x16xf32, #tpu.memory_space<vmem>>, vector<1x16x16xf32>
    %138 = vector.shape_cast %137 : vector<1x16x16xf32> to vector<16x16xf32>
    %cst_116 = arith.constant dense<0.000000e+00> : vector<64x16xf32>
    %139 = tpu.matmul %136, %138, %cst_116 {dimension_numbers = #tpu.dot_dimension_numbers<[1], [0], [0], [1], [0, 0, 1, 1], [], []>} : vector<64x16xf32>, vector<16x16xf32>, vector<64x16xf32> -> vector<64x16xf32>
    %140 = arith.addf %134, %139 : vector<64x16xf32>
    %c0_117 = arith.constant 0 : index
    %c1_118 = arith.constant 1 : index
    %c2_119 = arith.constant 2 : index
    %c0_120 = arith.constant 0 : index
    %141 = tpu.strided_load %arg13[%c0_117, %c1_118, %c2_119, %c0_120] {strides = array<i32: 1, 2, 2, 1>} : memref<4x10x10x16xf32, #tpu.memory_space<vmem>>, vector<4x4x4x16xf32>
    %142 = vector.shape_cast %141 : vector<4x4x4x16xf32> to vector<64x16xf32>
    %c5_121 = arith.constant 5 : index
    %c0_122 = arith.constant 0 : index
    %c0_123 = arith.constant 0 : index
    %143 = vector.load %arg6[%c5_121, %c0_122, %c0_123] : memref<9x16x16xf32, #tpu.memory_space<vmem>>, vector<1x16x16xf32>
    %144 = vector.shape_cast %143 : vector<1x16x16xf32> to vector<16x16xf32>
    %cst_124 = arith.constant dense<0.000000e+00> : vector<64x16xf32>
    %145 = tpu.matmul %142, %144, %cst_124 {dimension_numbers = #tpu.dot_dimension_numbers<[1], [0], [0], [1], [0, 0, 1, 1], [], []>} : vector<64x16xf32>, vector<16x16xf32>, vector<64x16xf32> -> vector<64x16xf32>
    %146 = arith.addf %140, %145 : vector<64x16xf32>
    %c0_125 = arith.constant 0 : index
    %c2_126 = arith.constant 2 : index
    %c0_127 = arith.constant 0 : index
    %c0_128 = arith.constant 0 : index
    %147 = tpu.strided_load %arg13[%c0_125, %c2_126, %c0_127, %c0_128] {strides = array<i32: 1, 2, 2, 1>} : memref<4x10x10x16xf32, #tpu.memory_space<vmem>>, vector<4x4x4x16xf32>
    %148 = vector.shape_cast %147 : vector<4x4x4x16xf32> to vector<64x16xf32>
    %c6_129 = arith.constant 6 : index
    %c0_130 = arith.constant 0 : index
    %c0_131 = arith.constant 0 : index
    %149 = vector.load %arg6[%c6_129, %c0_130, %c0_131] : memref<9x16x16xf32, #tpu.memory_space<vmem>>, vector<1x16x16xf32>
    %150 = vector.shape_cast %149 : vector<1x16x16xf32> to vector<16x16xf32>
    %cst_132 = arith.constant dense<0.000000e+00> : vector<64x16xf32>
    %151 = tpu.matmul %148, %150, %cst_132 {dimension_numbers = #tpu.dot_dimension_numbers<[1], [0], [0], [1], [0, 0, 1, 1], [], []>} : vector<64x16xf32>, vector<16x16xf32>, vector<64x16xf32> -> vector<64x16xf32>
    %152 = arith.addf %146, %151 : vector<64x16xf32>
    %c0_133 = arith.constant 0 : index
    %c2_134 = arith.constant 2 : index
    %c1_135 = arith.constant 1 : index
    %c0_136 = arith.constant 0 : index
    %153 = tpu.strided_load %arg13[%c0_133, %c2_134, %c1_135, %c0_136] {strides = array<i32: 1, 2, 2, 1>} : memref<4x10x10x16xf32, #tpu.memory_space<vmem>>, vector<4x4x4x16xf32>
    %154 = vector.shape_cast %153 : vector<4x4x4x16xf32> to vector<64x16xf32>
    %c7_137 = arith.constant 7 : index
    %c0_138 = arith.constant 0 : index
    %c0_139 = arith.constant 0 : index
    %155 = vector.load %arg6[%c7_137, %c0_138, %c0_139] : memref<9x16x16xf32, #tpu.memory_space<vmem>>, vector<1x16x16xf32>
    %156 = vector.shape_cast %155 : vector<1x16x16xf32> to vector<16x16xf32>
    %cst_140 = arith.constant dense<0.000000e+00> : vector<64x16xf32>
    %157 = tpu.matmul %154, %156, %cst_140 {dimension_numbers = #tpu.dot_dimension_numbers<[1], [0], [0], [1], [0, 0, 1, 1], [], []>} : vector<64x16xf32>, vector<16x16xf32>, vector<64x16xf32> -> vector<64x16xf32>
    %158 = arith.addf %152, %157 : vector<64x16xf32>
    %c0_141 = arith.constant 0 : index
    %c2_142 = arith.constant 2 : index
    %c2_143 = arith.constant 2 : index
    %c0_144 = arith.constant 0 : index
    %159 = tpu.strided_load %arg13[%c0_141, %c2_142, %c2_143, %c0_144] {strides = array<i32: 1, 2, 2, 1>} : memref<4x10x10x16xf32, #tpu.memory_space<vmem>>, vector<4x4x4x16xf32>
    %160 = vector.shape_cast %159 : vector<4x4x4x16xf32> to vector<64x16xf32>
    %c8_145 = arith.constant 8 : index
    %c0_146 = arith.constant 0 : index
    %c0_147 = arith.constant 0 : index
    %161 = vector.load %arg6[%c8_145, %c0_146, %c0_147] : memref<9x16x16xf32, #tpu.memory_space<vmem>>, vector<1x16x16xf32>
    %162 = vector.shape_cast %161 : vector<1x16x16xf32> to vector<16x16xf32>
    %cst_148 = arith.constant dense<0.000000e+00> : vector<64x16xf32>
    %163 = tpu.matmul %160, %162, %cst_148 {dimension_numbers = #tpu.dot_dimension_numbers<[1], [0], [0], [1], [0, 0, 1, 1], [], []>} : vector<64x16xf32>, vector<16x16xf32>, vector<64x16xf32> -> vector<64x16xf32>
    %164 = arith.addf %158, %163 : vector<64x16xf32>
    %c0_149 = arith.constant 0 : index
    %c0_150 = arith.constant 0 : index
    %165 = vector.load %arg7[%c0_149, %c0_150] : memref<1x16xf32, #tpu.memory_space<vmem>>, vector<1x16xf32>
    %166 = vector.broadcast %165 : vector<1x16xf32> to vector<64x16xf32>
    %167 = arith.addf %164, %166 : vector<64x16xf32>
    %cst_151 = arith.constant 0.000000e+00 : f32
    %168 = vector.broadcast %cst_151 : f32 to vector<64x16xf32>
    %169 = arith.maximumf %167, %168 : vector<64x16xf32>
    %c0_152 = arith.constant 0 : index
    %c0_153 = arith.constant 0 : index
    %c0_154 = arith.constant 0 : index
    %c0_155 = arith.constant 0 : index
    %170 = tpu.strided_load %arg12[%c0_152, %c0_153, %c0_154, %c0_155] {strides = array<i32: 1, 2, 2, 1>} : memref<4x8x8x16xf32, #tpu.memory_space<vmem>>, vector<4x4x4x16xf32>
    %c0_156 = arith.constant 0 : index
    %c0_157 = arith.constant 0 : index
    %c1_158 = arith.constant 1 : index
    %c0_159 = arith.constant 0 : index
    %171 = tpu.strided_load %arg12[%c0_156, %c0_157, %c1_158, %c0_159] {strides = array<i32: 1, 2, 2, 1>} : memref<4x8x8x16xf32, #tpu.memory_space<vmem>>, vector<4x4x4x16xf32>
    %172 = arith.maximumf %170, %171 : vector<4x4x4x16xf32>
    %c0_160 = arith.constant 0 : index
    %c1_161 = arith.constant 1 : index
    %c0_162 = arith.constant 0 : index
    %c0_163 = arith.constant 0 : index
    %173 = tpu.strided_load %arg12[%c0_160, %c1_161, %c0_162, %c0_163] {strides = array<i32: 1, 2, 2, 1>} : memref<4x8x8x16xf32, #tpu.memory_space<vmem>>, vector<4x4x4x16xf32>
    %174 = arith.maximumf %172, %173 : vector<4x4x4x16xf32>
    %c0_164 = arith.constant 0 : index
    %c1_165 = arith.constant 1 : index
    %c1_166 = arith.constant 1 : index
    %c0_167 = arith.constant 0 : index
    %175 = tpu.strided_load %arg12[%c0_164, %c1_165, %c1_166, %c0_167] {strides = array<i32: 1, 2, 2, 1>} : memref<4x8x8x16xf32, #tpu.memory_space<vmem>>, vector<4x4x4x16xf32>
    %176 = arith.maximumf %174, %175 : vector<4x4x4x16xf32>
    %177 = vector.shape_cast %176 : vector<4x4x4x16xf32> to vector<64x16xf32>
    %c0_168 = arith.constant 0 : index
    %c0_169 = arith.constant 0 : index
    %178 = vector.load %arg8[%c0_168, %c0_169] : memref<16x32xf32, #tpu.memory_space<vmem>>, vector<16x32xf32>
    %cst_170 = arith.constant dense<0.000000e+00> : vector<64x32xf32>
    %179 = tpu.matmul %177, %178, %cst_170 {dimension_numbers = #tpu.dot_dimension_numbers<[1], [0], [0], [1], [0, 0, 1, 1], [], []>} : vector<64x16xf32>, vector<16x32xf32>, vector<64x32xf32> -> vector<64x32xf32>
    %c0_171 = arith.constant 0 : index
    %c0_172 = arith.constant 0 : index
    %180 = vector.load %arg9[%c0_171, %c0_172] : memref<16x32xf32, #tpu.memory_space<vmem>>, vector<16x32xf32>
    %cst_173 = arith.constant dense<0.000000e+00> : vector<64x32xf32>
    %181 = tpu.matmul %169, %180, %cst_173 {dimension_numbers = #tpu.dot_dimension_numbers<[1], [0], [0], [1], [0, 0, 1, 1], [], []>} : vector<64x16xf32>, vector<16x32xf32>, vector<64x32xf32> -> vector<64x32xf32>
    %182 = arith.addf %179, %181 : vector<64x32xf32>
    %c0_174 = arith.constant 0 : index
    %c0_175 = arith.constant 0 : index
    %183 = vector.load %arg10[%c0_174, %c0_175] : memref<1x32xf32, #tpu.memory_space<vmem>>, vector<1x32xf32>
    %184 = vector.broadcast %183 : vector<1x32xf32> to vector<64x32xf32>
    %185 = arith.addf %182, %184 : vector<64x32xf32>
    %cst_176 = arith.constant 0.000000e+00 : f32
    %186 = vector.broadcast %cst_176 : f32 to vector<64x32xf32>
    %187 = arith.maximumf %185, %186 : vector<64x32xf32>
    %188 = vector.shape_cast %187 : vector<64x32xf32> to vector<4x16x32xf32>
    %c0_177 = arith.constant 0 : index
    %c0_178 = arith.constant 0 : index
    %c0_179 = arith.constant 0 : index
    %189 = vector.load %arg11[%c0_177, %c0_178, %c0_179] : memref<4x16x32xf32, #tpu.memory_space<vmem>>, vector<4x16x32xf32>
    tpu.vector_store %arg11[%c0_177, %c0_178, %c0_179], %188 {strides = array<i32>} : memref<4x16x32xf32, #tpu.memory_space<vmem>>, vector<4x16x32xf32>,
    return
  }
  func.func @transform_0(%arg0: i32) -> (i32, i32, i32, i32, i32) {
    %c0_i32 = arith.constant 0 : i32
    %c0_i32_0 = arith.constant 0 : i32
    %c0_i32_1 = arith.constant 0 : i32
    %c0_i32_2 = arith.constant 0 : i32
    %c0_i32_3 = arith.constant 0 : i32
    return %arg0, %c0_i32, %c0_i32_0, %c0_i32_1, %c0_i32_2 : i32, i32, i32, i32, i32
  }
  func.func @transform_1(%arg0: i32) -> (i32, i32) {
    %c0_i32 = arith.constant 0 : i32
    %c0_i32_0 = arith.constant 0 : i32
    %c0_i32_1 = arith.constant 0 : i32
    return %c0_i32, %c0_i32_0 : i32, i32
  }
  func.func @transform_2(%arg0: i32) -> (i32, i32) {
    %c0_i32 = arith.constant 0 : i32
    %c0_i32_0 = arith.constant 0 : i32
    %c0_i32_1 = arith.constant 0 : i32
    return %c0_i32, %c0_i32_0 : i32, i32
  }
  func.func @transform_3(%arg0: i32) -> (i32, i32) {
    %c0_i32 = arith.constant 0 : i32
    %c0_i32_0 = arith.constant 0 : i32
    %c0_i32_1 = arith.constant 0 : i32
    return %c0_i32, %c0_i32_0 : i32, i32
  }
  func.func @transform_4(%arg0: i32) -> (i32, i32) {
    %c0_i32 = arith.constant 0 : i32
    %c0_i32_0 = arith.constant 0 : i32
    %c0_i32_1 = arith.constant 0 : i32
    return %c0_i32, %c0_i32_0 : i32, i32
  }
  func.func @transform_5(%arg0: i32) -> (i32, i32, i32) {
    %c0_i32 = arith.constant 0 : i32
    %c0_i32_0 = arith.constant 0 : i32
    %c0_i32_1 = arith.constant 0 : i32
    %c0_i32_2 = arith.constant 0 : i32
    return %c0_i32, %c0_i32_0, %c0_i32_1 : i32, i32, i32
  }
  func.func @transform_6(%arg0: i32) -> (i32, i32) {
    %c0_i32 = arith.constant 0 : i32
    %c0_i32_0 = arith.constant 0 : i32
    %c0_i32_1 = arith.constant 0 : i32
    return %c0_i32, %c0_i32_0 : i32, i32
  }
  func.func @transform_7(%arg0: i32) -> (i32, i32) {
    %c0_i32 = arith.constant 0 : i32
    %c0_i32_0 = arith.constant 0 : i32
    %c0_i32_1 = arith.constant 0 : i32
    return %c0_i32, %c0_i32_0 : i32, i32
  }
  func.func @transform_8(%arg0: i32) -> (i32, i32) {
    %c0_i32 = arith.constant 0 : i32
    %c0_i32_0 = arith.constant 0 : i32
    %c0_i32_1 = arith.constant 0 : i32
    return %c0_i32, %c0_i32_0 : i32, i32
  }
  func.func @transform_9(%arg0: i32) -> (i32, i32) {
    %c0_i32 = arith.constant 0 : i32
    %c0_i32_0 = arith.constant 0 : i32
    %c0_i32_1 = arith.constant 0 : i32
    return %c0_i32, %c0_i32_0 : i32, i32
  }
  func.func @transform_10(%arg0: i32) -> (i32, i32, i32) {
    %c0_i32 = arith.constant 0 : i32
    %c0_i32_0 = arith.constant 0 : i32
    %c0_i32_1 = arith.constant 0 : i32
    return %arg0, %c0_i32, %c0_i32_0 : i32, i32, i32
  }
}

</mosaic_0001>

<llo_original>
// kernel: stem_block_pallas.1
$region0: #{stem_block_pallas.1}
  #allocation0 [shape = 'u32[]', space=smem, size = 0x4, offset = 0x4, fixed_abs, tag = 'smem constant byte address 0x4 - core index']
  #allocation1 [shape = 'u32[144,128]{1,0:T(1,128)}', space=vmem, size = 0x12000, scoped, tag = 'internal scratch']
  #allocation2 [shape = 'f32[4,8,8,16]{3,2,1,0:T(8,128)}', space=vmem, size = 0x20000, scoped, tag = 'scratch operand']
  #allocation3 [shape = 'f32[4,10,10,16]{3,2,1,0:T(8,128)}', space=vmem, size = 0x50000, scoped, tag = 'scratch operand']
  %s0 = inlined_call_operand.vmem [shape: f32[8,2,2,9,9], index: 0, kind: input, shape index: {}]
  %s1 = inlined_call_operand.vmem [shape: f32[9,16], index: 1, kind: input, shape index: {}]
  %s2 = inlined_call_operand.vmem [shape: f32[1,16], index: 2, kind: input, shape index: {}]
  %s3 = inlined_call_operand.vmem [shape: f32[16,16], index: 3, kind: input, shape index: {}]
  %s4 = inlined_call_operand.vmem [shape: f32[1,16], index: 4, kind: input, shape index: {}]
  %s5 = inlined_call_operand.vmem [shape: f32[9,16,16], index: 5, kind: input, shape index: {}]
  %s6 = inlined_call_operand.vmem [shape: f32[1,16], index: 6, kind: input, shape index: {}]
  %s7 = inlined_call_operand.vmem [shape: f32[16,32], index: 7, kind: input, shape index: {}]
  %s8 = inlined_call_operand.vmem [shape: f32[16,32], index: 8, kind: input, shape index: {}]
  %s9 = inlined_call_operand.vmem [shape: f32[1,32], index: 9, kind: input, shape index: {}]
  %s10 = inlined_call_operand.hbm [shape: f32[8,16,32], index: 10, kind: output, shape index: {}]
  %s11 = sld [smem:[#allocation0]]
  $region73: #{stem_block_pallas.1} parent=0
    _
  %s13 = ssub.s32 1, %s11
  %s14 = scalar_select 0, %s13, %s11
  $region1: #{stem_block_pallas.1} parent=0
    #allocation4 [shape = 'u8[65536]{0}', space=vmem, size = 0x10000, scoped, tag = 'output window, operand 0']
    #allocation5 [shape = 's32[2]{0}', space=sflag, size = 0x8, scoped, tag = 'scoped memory for stem_block_pallas.1']
    %15 = vsyncpa [#allocation5], 0
    %s16 = scalar_lea.sflag [#allocation5], 1
    %17 = vsyncpa %s16, 0
    loop: start=0, step=1, limit=4
    $region2: #{stem_block_pallas.1} parent=1 // loop_pre_header
      _
    $region3: #{stem_block_pallas.1} parent=1 // loop_header
      %s19 = sphi 0, %s23
      %p20 = scmp.ge.s32.totalorder %s19, 4
      %s29 = sphi 0, %s31
      %s32 = sphi 0, %s29
      %s33 = sphi 0, %s32
      %s49 = sphi 0, %s33
      %s53 = sphi 0, %s53
      %s55 = sphi 0, %s53
      %s56 = sphi 0, %s55
      %s70 = sphi 0, %s56
      %s74 = sphi 0, %s74
      %s76 = sphi 0, %s74
      %s77 = sphi 0, %s76
      %s91 = sphi 0, %s77
      %s95 = sphi 0, %s95
      %s97 = sphi 0, %s95
      %s98 = sphi 0, %s97
      %s112 = sphi 0, %s98
      %s116 = sphi 0, %s116
      %s118 = sphi 0, %s116
      %s119 = sphi 0, %s118
      %s133 = sphi 0, %s119
      %s137 = sphi 0, %s137
      %s139 = sphi 0, %s137
      %s140 = sphi 0, %s139
      %s154 = sphi 0, %s140
      %s158 = sphi 0, %s158
      %s160 = sphi 0, %s158
      %s161 = sphi 0, %s160
      %s175 = sphi 0, %s161
      %s179 = sphi 0, %s179
      %s181 = sphi 0, %s179
      %s182 = sphi 0, %s181
      %s196 = sphi 0, %s182
      %s200 = sphi 0, %s200
      %s202 = sphi 0, %s200
      %s203 = sphi 0, %s202
      %s217 = sphi 0, %s203
      %s221 = sphi 0, %s221
      %s223 = sphi 0, %s221
      %s224 = sphi 0, %s223
      %s238 = sphi 0, %s224
      %s244 = sphi 0, %s246
      %s247 = sphi 0, %s244
      %s248 = sphi 0, %s247
      %s264 = sphi 0, %s248
    $region4: #{stem_block_pallas.1} parent=1 // loop_header_branch
      %22 = sbr.rel (%p20) target = $region8
    $region5: #{stem_block_pallas.1} parent=1 // loop_body
      %s24 = ssub.s32 %s19, 1
      %s25 = ssub.s32 %s19, 2
      %s26 = sadd.s32 %s19, 1
      %s27 = ssub.s32 %s19, %s26
      %p28 = scmp.eq.s32.totalorder %s27, 0
      %s30 = sadd.s32 %s29, 1
      %s31 = scalar_select %p28, %s29, %s30
      %p34 = pneg %p28
      %p35 = scmp.eq.s32.totalorder %s19, 1
      %p36 = por %p34, %p35
      %p37 = scmp.ne.s32.totalorder %s29, %s32
      %p38 = scmp.eq.s32.totalorder %s19, 0
      %p39 = por %p37, %p38
      %p40 = scmp.ne.s32.totalorder %s29, %s32
      %p41 = scmp.eq.s32.totalorder %s24, 1
      %p42 = por %p40, %p41
      %p43 = scmp.ne.s32.totalorder %s32, %s33
      %p44 = scmp.eq.s32.totalorder %s24, 0
      %p45 = por %p43, %p44
      %p46 = scmp.ne.s32.totalorder %s32, %s33
      %p47 = scmp.eq.s32.totalorder %s25, 1
      %p48 = por %p46, %p47
      %p50 = scmp.ne.s32.totalorder %s33, %s49
      %p51 = scmp.eq.s32.totalorder %s25, 0
      %p52 = por %p50, %p51
      %s54 = sadd.s32 %s53, 1
      %p57 = scmp.eq.s32.totalorder %s19, 1
      %p58 = scmp.ne.s32.totalorder %s53, %s55
      %p59 = scmp.eq.s32.totalorder %s19, 0
      %p60 = por %p58, %p59
      %p61 = scmp.ne.s32.totalorder %s53, %s55
      %p62 = scmp.eq.s32.totalorder %s24, 1
      %p63 = por %p61, %p62
      %p64 = scmp.ne.s32.totalorder %s55, %s56
      %p65 = scmp.eq.s32.totalorder %s24, 0
      %p66 = por %p64, %p65
      %p67 = scmp.ne.s32.totalorder %s55, %s56
      %p68 = scmp.eq.s32.totalorder %s25, 1
      %p69 = por %p67, %p68
      %p71 = scmp.ne.s32.totalorder %s56, %s70
      %p72 = scmp.eq.s32.totalorder %s25, 0
      %p73 = por %p71, %p72
      %s75 = sadd.s32 %s74, 1
      %p78 = scmp.eq.s32.totalorder %s19, 1
      %p79 = scmp.ne.s32.totalorder %s74, %s76
      %p80 = scmp.eq.s32.totalorder %s19, 0
      %p81 = por %p79, %p80
      %p82 = scmp.ne.s32.totalorder %s74, %s76
      %p83 = scmp.eq.s32.totalorder %s24, 1
      %p84 = por %p82, %p83
      %p85 = scmp.ne.s32.totalorder %s76, %s77
      %p86 = scmp.eq.s32.totalorder %s24, 0
      %p87 = por %p85, %p86
      %p88 = scmp.ne.s32.totalorder %s76, %s77
      %p89 = scmp.eq.s32.totalorder %s25, 1
      %p90 = por %p88, %p89
      %p92 = scmp.ne.s32.totalorder %s77, %s91
      %p93 = scmp.eq.s32.totalorder %s25, 0
      %p94 = por %p92, %p93
      %s96 = sadd.s32 %s95, 1
      %p99 = scmp.eq.s32.totalorder %s19, 1
      %p100 = scmp.ne.s32.totalorder %s95, %s97
      %p101 = scmp.eq.s32.totalorder %s19, 0
      %p102 = por %p100, %p101
      %p103 = scmp.ne.s32.totalorder %s95, %s97
      %p104 = scmp.eq.s32.totalorder %s24, 1
      %p105 = por %p103, %p104
      %p106 = scmp.ne.s32.totalorder %s97, %s98
      %p107 = scmp.eq.s32.totalorder %s24, 0
      %p108 = por %p106, %p107
      %p109 = scmp.ne.s32.totalorder %s97, %s98
      %p110 = scmp.eq.s32.totalorder %s25, 1
      %p111 = por %p109, %p110
      %p113 = scmp.ne.s32.totalorder %s98, %s112
      %p114 = scmp.eq.s32.totalorder %s25, 0
      %p115 = por %p113, %p114
      %s117 = sadd.s32 %s116, 1
      %p120 = scmp.eq.s32.totalorder %s19, 1
      %p121 = scmp.ne.s32.totalorder %s116, %s118
      %p122 = scmp.eq.s32.totalorder %s19, 0
      %p123 = por %p121, %p122
      %p124 = scmp.ne.s32.totalorder %s116, %s118
      %p125 = scmp.eq.s32.totalorder %s24, 1
      %p126 = por %p124, %p125
      %p127 = scmp.ne.s32.totalorder %s118, %s119
      %p128 = scmp.eq.s32.totalorder %s24, 0
      %p129 = por %p127, %p128
      %p130 = scmp.ne.s32.totalorder %s118, %s119
      %p131 = scmp.eq.s32.totalorder %s25, 1
      %p132 = por %p130, %p131
      %p134 = scmp.ne.s32.totalorder %s119, %s133
      %p135 = scmp.eq.s32.totalorder %s25, 0
      %p136 = por %p134, %p135
      %s138 = sadd.s32 %s137, 1
      %p141 = scmp.eq.s32.totalorder %s19, 1
      %p142 = scmp.ne.s32.totalorder %s137, %s139
      %p143 = scmp.eq.s32.totalorder %s19, 0
      %p144 = por %p142, %p143
      %p145 = scmp.ne.s32.totalorder %s137, %s139
      %p146 = scmp.eq.s32.totalorder %s24, 1
      %p147 = por %p145, %p146
      %p148 = scmp.ne.s32.totalorder %s139, %s140
      %p149 = scmp.eq.s32.totalorder %s24, 0
      %p150 = por %p148, %p149
      %p151 = scmp.ne.s32.totalorder %s139, %s140
      %p152 = scmp.eq.s32.totalorder %s25, 1
      %p153 = por %p151, %p152
      %p155 = scmp.ne.s32.totalorder %s140, %s154
      %p156 = scmp.eq.s32.totalorder %s25, 0
      %p157 = por %p155, %p156
      %s159 = sadd.s32 %s158, 1
      %p162 = scmp.eq.s32.totalorder %s19, 1
      %p163 = scmp.ne.s32.totalorder %s158, %s160
      %p164 = scmp.eq.s32.totalorder %s19, 0
      %p165 = por %p163, %p164
      %p166 = scmp.ne.s32.totalorder %s158, %s160
      %p167 = scmp.eq.s32.totalorder %s24, 1
      %p168 = por %p166, %p167
      %p169 = scmp.ne.s32.totalorder %s160, %s161
      %p170 = scmp.eq.s32.totalorder %s24, 0
      %p171 = por %p169, %p170
      %p172 = scmp.ne.s32.totalorder %s160, %s161
      %p173 = scmp.eq.s32.totalorder %s25, 1
      %p174 = por %p172, %p173
      %p176 = scmp.ne.s32.totalorder %s161, %s175
      %p177 = scmp.eq.s32.totalorder %s25, 0
      %p178 = por %p176, %p177
      %s180 = sadd.s32 %s179, 1
      %p183 = scmp.eq.s32.totalorder %s19, 1
      %p184 = scmp.ne.s32.totalorder %s179, %s181
      %p185 = scmp.eq.s32.totalorder %s19, 0
      %p186 = por %p184, %p185
      %p187 = scmp.ne.s32.totalorder %s179, %s181
      %p188 = scmp.eq.s32.totalorder %s24, 1
      %p189 = por %p187, %p188
      %p190 = scmp.ne.s32.totalorder %s181, %s182
      %p191 = scmp.eq.s32.totalorder %s24, 0
      %p192 = por %p190, %p191
      %p193 = scmp.ne.s32.totalorder %s181, %s182
      %p194 = scmp.eq.s32.totalorder %s25, 1
      %p195 = por %p193, %p194
      %p197 = scmp.ne.s32.totalorder %s182, %s196
      %p198 = scmp.eq.s32.totalorder %s25, 0
      %p199 = por %p197, %p198
      %s201 = sadd.s32 %s200, 1
      %p204 = scmp.eq.s32.totalorder %s19, 1
      %p205 = scmp.ne.s32.totalorder %s200, %s202
      %p206 = scmp.eq.s32.totalorder %s19, 0
      %p207 = por %p205, %p206
      %p208 = scmp.ne.s32.totalorder %s200, %s202
      %p209 = scmp.eq.s32.totalorder %s24, 1
      %p210 = por %p208, %p209
      %p211 = scmp.ne.s32.totalorder %s202, %s203
      %p212 = scmp.eq.s32.totalorder %s24, 0
      %p213 = por %p211, %p212
      %p214 = scmp.ne.s32.totalorder %s202, %s203
      %p215 = scmp.eq.s32.totalorder %s25, 1
      %p216 = por %p214, %p215
      %p218 = scmp.ne.s32.totalorder %s203, %s217
      %p219 = scmp.eq.s32.totalorder %s25, 0
      %p220 = por %p218, %p219
      %s222 = sadd.s32 %s221, 1
      %p225 = scmp.eq.s32.totalorder %s19, 1
      %p226 = scmp.ne.s32.totalorder %s221, %s223
      %p227 = scmp.eq.s32.totalorder %s19, 0
      %p228 = por %p226, %p227
      %p229 = scmp.ne.s32.totalorder %s221, %s223
      %p230 = scmp.eq.s32.totalorder %s24, 1
      %p231 = por %p229, %p230
      %p232 = scmp.ne.s32.totalorder %s223, %s224
      %p233 = scmp.eq.s32.totalorder %s24, 0
      %p234 = por %p232, %p233
      %p235 = scmp.ne.s32.totalorder %s223, %s224
      %p236 = scmp.eq.s32.totalorder %s25, 1
      %p237 = por %p235, %p236
      %p239 = scmp.ne.s32.totalorder %s224, %s238
      %p240 = scmp.eq.s32.totalorder %s25, 0
      %p241 = por %p239, %p240
      %s242 = ssub.s32 %s19, %s26
      %p243 = scmp.eq.s32.totalorder %s242, 0
      %s245 = sadd.s32 %s244, 1
      %s246 = scalar_select %p243, %s244, %s245
      %p249 = pneg %p243
      %p250 = scmp.eq.s32.totalorder %s19, 1
      %p251 = por %p249, %p250
      %p252 = scmp.ne.s32.totalorder %s244, %s247
      %p253 = scmp.eq.s32.totalorder %s19, 0
      %p254 = por %p252, %p253
      %p255 = scmp.ne.s32.totalorder %s244, %s247
      %p256 = scmp.eq.s32.totalorder %s24, 1
      %p257 = por %p255, %p256
      %p258 = scmp.ne.s32.totalorder %s247, %s248
      %p259 = scmp.eq.s32.totalorder %s24, 0
      %p260 = por %p258, %p259
      %p261 = scmp.ne.s32.totalorder %s247, %s248
      %p262 = scmp.eq.s32.totalorder %s25, 1
      %p263 = por %p261, %p262
      %p265 = scmp.ne.s32.totalorder %s248, %s264
      %p266 = scmp.eq.s32.totalorder %s25, 0
      %p267 = por %p265, %p266
      %p268 = scmp.le.s32.totalorder 1, %s19
      %p269 = scmp.lt.s32.totalorder %s19, 3
      %p270 = pnand %p268, %p269
      %p271 = pneg %p270
      // Predicated region
      $region9: #{stem_block_pallas.1} parent=5 // pred_check
        _
      $region10: #{stem_block_pallas.1} parent=5 // pred_check_branch
        %273 = sbr.rel (%p270) target = $region12
      $region11: #{stem_block_pallas.1} parent=5 // pred_region
        %s274 = ssub.s32 %s19, 1
        // Predicated region
        $region13: #{stem_block_pallas.1} parent=11 // pred_check
          %p275 = pneg %p66
        $region14: #{stem_block_pallas.1} parent=11 // pred_check_branch
          %277 = sbr.rel (%p275) target = $region16
        $region15: #{stem_block_pallas.1} parent=11 // pred_region
          _
        $region16: #{stem_block_pallas.1} parent=11 // pred_fallthru
          _
        // Predicated region
        $region17: #{stem_block_pallas.1} parent=11 // pred_check
          %p278 = pneg %p87
        $region18: #{stem_block_pallas.1} parent=11 // pred_check_branch
          %280 = sbr.rel (%p278) target = $region20
        $region19: #{stem_block_pallas.1} parent=11 // pred_region
          _
        $region20: #{stem_block_pallas.1} parent=11 // pred_fallthru
          _
        // Predicated region
        $region21: #{stem_block_pallas.1} parent=11 // pred_check
          %p281 = pneg %p108
        $region22: #{stem_block_pallas.1} parent=11 // pred_check_branch
          %283 = sbr.rel (%p281) target = $region24
        $region23: #{stem_block_pallas.1} parent=11 // pred_region
          _
        $region24: #{stem_block_pallas.1} parent=11 // pred_fallthru
          _
        // Predicated region
        $region25: #{stem_block_pallas.1} parent=11 // pred_check
          %p284 = pneg %p129
        $region26: #{stem_block_pallas.1} parent=11 // pred_check_branch
          %286 = sbr.rel (%p284) target = $region28
        $region27: #{stem_block_pallas.1} parent=11 // pred_region
          _
        $region28: #{stem_block_pallas.1} parent=11 // pred_fallthru
          _
        // Predicated region
        $region29: #{stem_block_pallas.1} parent=11 // pred_check
          %p287 = pneg %p150
        $region30: #{stem_block_pallas.1} parent=11 // pred_check_branch
          %289 = sbr.rel (%p287) target = $region32
        $region31: #{stem_block_pallas.1} parent=11 // pred_region
          _
        $region32: #{stem_block_pallas.1} parent=11 // pred_fallthru
          _
        // Predicated region
        $region33: #{stem_block_pallas.1} parent=11 // pred_check
          %p290 = pneg %p171
        $region34: #{stem_block_pallas.1} parent=11 // pred_check_branch
          %292 = sbr.rel (%p290) target = $region36
        $region35: #{stem_block_pallas.1} parent=11 // pred_region
          _
        $region36: #{stem_block_pallas.1} parent=11 // pred_fallthru
          _
        // Predicated region
        $region37: #{stem_block_pallas.1} parent=11 // pred_check
          %p293 = pneg %p192
        $region38: #{stem_block_pallas.1} parent=11 // pred_check_branch
          %295 = sbr.rel (%p293) target = $region40
        $region39: #{stem_block_pallas.1} parent=11 // pred_region
          _
        $region40: #{stem_block_pallas.1} parent=11 // pred_fallthru
          _
        // Predicated region
        $region41: #{stem_block_pallas.1} parent=11 // pred_check
          %p296 = pneg %p213
        $region42: #{stem_block_pallas.1} parent=11 // pred_check_branch
          %298 = sbr.rel (%p296) target = $region44
        $region43: #{stem_block_pallas.1} parent=11 // pred_region
          _
        $region44: #{stem_block_pallas.1} parent=11 // pred_fallthru
          _
        // Predicated region
        $region45: #{stem_block_pallas.1} parent=11 // pred_check
          %p299 = pneg %p234
        $region46: #{stem_block_pallas.1} parent=11 // pred_check_branch
          %301 = sbr.rel (%p299) target = $region48
        $region47: #{stem_block_pallas.1} parent=11 // pred_region
          _
        $region48: #{stem_block_pallas.1} parent=11 // pred_fallthru
          _
      $region12: #{stem_block_pallas.1} parent=5 // pred_fallthru
        _
      %p302 = scmp.lt.s32.totalorder %s19, 2
      // Predicated region
      $region49: #{stem_block_pallas.1} parent=5 // pred_check
        %p303 = pneg %p302
      $region50: #{stem_block_pallas.1} parent=5 // pred_check_branch
        %305 = sbr.rel (%p303) target = $region52
      $region51: #{stem_block_pallas.1} parent=5 // pred_region
        // Predicated region
        $region53: #{stem_block_pallas.1} parent=51 // pred_check
          %p306 = pneg %p39
        $region54: #{stem_block_pallas.1} parent=51 // pred_check_branch
          %308 = sbr.rel (%p306) target = $region56
        $region55: #{stem_block_pallas.1} parent=51 // pred_region
          %s309 = smul.u32 4, %s19
          %p310 = scmp.lt.s32.totalorder %s309, 7
          %s311 = scalar_select %p310, %s309, 7
          %s312 = smul.addr %s311, 8
          %s313 = smul.addr %s312, 8
          %s314 = scalar_lea.vmem %s0, %s313
          %s315 = smul.u32 4, %s19
        $region56: #{stem_block_pallas.1} parent=51 // pred_fallthru
          _
      $region52: #{stem_block_pallas.1} parent=5 // pred_fallthru
        _
      %p316 = scmp.le.s32.totalorder 1, %s19
      %p317 = scmp.lt.s32.totalorder %s19, 3
      %p318 = pnand %p316, %p317
      %p319 = pneg %p318
      // Predicated region
      $region57: #{stem_block_pallas.1} parent=5 // pred_check
        _
      $region58: #{stem_block_pallas.1} parent=5 // pred_check_branch
        %321 = sbr.rel (%p318) target = $region60
      $region59: #{stem_block_pallas.1} parent=5 // pred_region
        %s322 = ssub.s32 %s19, 1
        %s323 = smul.u32 4, %s24
        %p324 = scmp.lt.s32.totalorder %s323, 7
        %s325 = scalar_select %p324, %s323, 7
        %s326 = smul.addr %s325, 8
        %s327 = smul.addr %s326, 8
        %s328 = scalar_lea.vmem %s0, %s327
        %p329 = pneg %p45
        %p330 = pneg %p42
        %p331 = pneg %p66
        %p332 = pneg %p63
        %p333 = pneg %p87
        %p334 = pneg %p84
        %p335 = pneg %p108
        %p336 = pneg %p105
        %p337 = pneg %p129
        %p338 = pneg %p126
        %p339 = pneg %p150
        %p340 = pneg %p147
        %p341 = pneg %p171
        %p342 = pneg %p168
        %p343 = pneg %p192
        %p344 = pneg %p189
        %p345 = pneg %p213
        %p346 = pneg %p210
        %p347 = pneg %p234
        %p348 = pneg %p231
        %p349 = pneg %p260
        %p350 = pneg %p257
        %s351 = sand.u32 %s247, 1
        %s352 = scalar_lea.sflag [#allocation5], %s351
        %s353 = sand.u32 %s247, 1
        %s354 = smul.addr %s353, 64
        %s355 = scalar_lea.vmem [#allocation4], %s354
        %s356 = smul.u32 4, %s24
        %p357 = scmp.lt.s32.totalorder %s356, 7
        %s358 = scalar_select %p357, %s356, 7
        %s359 = smul.addr %s358, 8
        %s360 = smul.addr %s359, 8
        %s361 = scalar_lea.vmem %s0, %s360
        %s362 = smul.u32 4, %s24
        %s363 = smul.u32 4, %s24
        %v364 = vld [vmem:[%s361] sm:$0xff]
        %v365 = vld [vmem:[%s361 + $0x40] sm:$0xff]
        %v366 = vld [vmem:[%s361 + $0x80] sm:$0xff]
        %v367 = vld [vmem:[%s361 + $0xc0] sm:$0xff]
        %v368 = vlaneseq
        %v369 = vshrl.u32 %v368, 7
        %v370 = vsub.s32 0, %v369
        %v371 = vrot.slane %v364, %v370
        %373 = vbcast.lane.b32.xlu0 %v371, 256
        %v374 = vpop.permute.xlu0 %373
        %v375 = vlaneseq
        %v376 = vshrl.u32 %v375, 7
        %v377 = vsub.s32 1, %v376
        %v378 = vrot.slane %v364, %v377
        %380 = vbcast.lane.b32.xlu0 %v378, 256
        %v381 = vpop.permute.xlu0 %380
        %v382 = vlaneseq
        %v383 = vshrl.u32 %v382, 7
        %v384 = vsub.s32 2, %v383
        %v385 = vrot.slane %v364, %v384
        %387 = vbcast.lane.b32.xlu0 %v385, 256
        %v388 = vpop.permute.xlu0 %387
        %v389 = vlaneseq
        %v390 = vshrl.u32 %v389, 7
        %v391 = vsub.s32 3, %v390
        %v392 = vrot.slane %v364, %v391
        %394 = vbcast.lane.b32.xlu0 %v392, 256
        %v395 = vpop.permute.xlu0 %394
        %v396 = vlaneseq
        %v397 = vshrl.u32 %v396, 7
        %v398 = vsub.s32 4, %v397
        %v399 = vrot.slane %v364, %v398
        %401 = vbcast.lane.b32.xlu0 %v399, 256
        %v402 = vpop.permute.xlu0 %401
        %v403 = vlaneseq
        %v404 = vshrl.u32 %v403, 7
        %v405 = vsub.s32 5, %v404
        %v406 = vrot.slane %v364, %v405
        %408 = vbcast.lane.b32.xlu0 %v406, 256
        %v409 = vpop.permute.xlu0 %408
        %v410 = vlaneseq
        %v411 = vshrl.u32 %v410, 7
        %v412 = vsub.s32 6, %v411
        %v413 = vrot.slane %v364, %v412
        %415 = vbcast.lane.b32.xlu0 %v413, 256
        %v416 = vpop.permute.xlu0 %415
        %v417 = vlaneseq
        %v418 = vshrl.u32 %v417, 7
        %v419 = vsub.s32 7, %v418
        %v420 = vrot.slane %v364, %v419
        %422 = vbcast.lane.b32.xlu0 %v420, 256
        %v423 = vpop.permute.xlu0 %422
        %v424 = vlaneseq
        %v425 = vshrl.u32 %v424, 7
        %v426 = vsub.s32 0, %v425
        %v427 = vrot.slane %v365, %v426
        %429 = vbcast.lane.b32.xlu0 %v427, 256
        %v430 = vpop.permute.xlu0 %429
        %v431 = vlaneseq
        %v432 = vshrl.u32 %v431, 7
        %v433 = vsub.s32 1, %v432
        %v434 = vrot.slane %v365, %v433
        %436 = vbcast.lane.b32.xlu0 %v434, 256
        %v437 = vpop.permute.xlu0 %436
        %v438 = vlaneseq
        %v439 = vshrl.u32 %v438, 7
        %v440 = vsub.s32 2, %v439
        %v441 = vrot.slane %v365, %v440
        %443 = vbcast.lane.b32.xlu0 %v441, 256
        %v444 = vpop.permute.xlu0 %443
        %v445 = vlaneseq
        %v446 = vshrl.u32 %v445, 7
        %v447 = vsub.s32 3, %v446
        %v448 = vrot.slane %v365, %v447
        %450 = vbcast.lane.b32.xlu0 %v448, 256
        %v451 = vpop.permute.xlu0 %450
        %v452 = vlaneseq
        %v453 = vshrl.u32 %v452, 7
        %v454 = vsub.s32 4, %v453
        %v455 = vrot.slane %v365, %v454
        %457 = vbcast.lane.b32.xlu0 %v455, 256
        %v458 = vpop.permute.xlu0 %457
        %v459 = vlaneseq
        %v460 = vshrl.u32 %v459, 7
        %v461 = vsub.s32 5, %v460
        %v462 = vrot.slane %v365, %v461
        %464 = vbcast.lane.b32.xlu0 %v462, 256
        %v465 = vpop.permute.xlu0 %464
        %v466 = vlaneseq
        %v467 = vshrl.u32 %v466, 7
        %v468 = vsub.s32 6, %v467
        %v469 = vrot.slane %v365, %v468
        %471 = vbcast.lane.b32.xlu0 %v469, 256
        %v472 = vpop.permute.xlu0 %471
        %v473 = vlaneseq
        %v474 = vshrl.u32 %v473, 7
        %v475 = vsub.s32 7, %v474
        %v476 = vrot.slane %v365, %v475
        %478 = vbcast.lane.b32.xlu0 %v476, 256
        %v479 = vpop.permute.xlu0 %478
        %v480 = vlaneseq
        %v481 = vshrl.u32 %v480, 7
        %v482 = vsub.s32 0, %v481
        %v483 = vrot.slane %v366, %v482
        %485 = vbcast.lane.b32.xlu0 %v483, 256
        %v486 = vpop.permute.xlu0 %485
        %v487 = vlaneseq
        %v488 = vshrl.u32 %v487, 7
        %v489 = vsub.s32 1, %v488
        %v490 = vrot.slane %v366, %v489
        %492 = vbcast.lane.b32.xlu0 %v490, 256
        %v493 = vpop.permute.xlu0 %492
        %v494 = vlaneseq
        %v495 = vshrl.u32 %v494, 7
        %v496 = vsub.s32 2, %v495
        %v497 = vrot.slane %v366, %v496
        %499 = vbcast.lane.b32.xlu0 %v497, 256
        %v500 = vpop.permute.xlu0 %499
        %v501 = vlaneseq
        %v502 = vshrl.u32 %v501, 7
        %v503 = vsub.s32 3, %v502
        %v504 = vrot.slane %v366, %v503
        %506 = vbcast.lane.b32.xlu0 %v504, 256
        %v507 = vpop.permute.xlu0 %506
        %v508 = vlaneseq
        %v509 = vshrl.u32 %v508, 7
        %v510 = vsub.s32 4, %v509
        %v511 = vrot.slane %v366, %v510
        %513 = vbcast.lane.b32.xlu0 %v511, 256
        %v514 = vpop.permute.xlu0 %513
        %v515 = vlaneseq
        %v516 = vshrl.u32 %v515, 7
        %v517 = vsub.s32 5, %v516
        %v518 = vrot.slane %v366, %v517
        %520 = vbcast.lane.b32.xlu0 %v518, 256
        %v521 = vpop.permute.xlu0 %520
        %v522 = vlaneseq
        %v523 = vshrl.u32 %v522, 7
        %v524 = vsub.s32 6, %v523
        %v525 = vrot.slane %v366, %v524
        %527 = vbcast.lane.b32.xlu0 %v525, 256
        %v528 = vpop.permute.xlu0 %527
        %v529 = vlaneseq
        %v530 = vshrl.u32 %v529, 7
        %v531 = vsub.s32 7, %v530
        %v532 = vrot.slane %v366, %v531
        %534 = vbcast.lane.b32.xlu0 %v532, 256
        %v535 = vpop.permute.xlu0 %534
        %v536 = vlaneseq
        %v537 = vshrl.u32 %v536, 7
        %v538 = vsub.s32 0, %v537
        %v539 = vrot.slane %v367, %v538
        %541 = vbcast.lane.b32.xlu0 %v539, 256
        %v542 = vpop.permute.xlu0 %541
        %v543 = vlaneseq
        %v544 = vshrl.u32 %v543, 7
        %v545 = vsub.s32 1, %v544
        %v546 = vrot.slane %v367, %v545
        %548 = vbcast.lane.b32.xlu0 %v546, 256
        %v549 = vpop.permute.xlu0 %548
        %v550 = vlaneseq
        %v551 = vshrl.u32 %v550, 7
        %v552 = vsub.s32 2, %v551
        %v553 = vrot.slane %v367, %v552
        %555 = vbcast.lane.b32.xlu0 %v553, 256
        %v556 = vpop.permute.xlu0 %555
        %v557 = vlaneseq
        %v558 = vshrl.u32 %v557, 7
        %v559 = vsub.s32 3, %v558
        %v560 = vrot.slane %v367, %v559
        %562 = vbcast.lane.b32.xlu0 %v560, 256
        %v563 = vpop.permute.xlu0 %562
        %v564 = vlaneseq
        %v565 = vshrl.u32 %v564, 7
        %v566 = vsub.s32 4, %v565
        %v567 = vrot.slane %v367, %v566
        %569 = vbcast.lane.b32.xlu0 %v567, 256
        %v570 = vpop.permute.xlu0 %569
        %v571 = vlaneseq
        %v572 = vshrl.u32 %v571, 7
        %v573 = vsub.s32 5, %v572
        %v574 = vrot.slane %v367, %v573
        %576 = vbcast.lane.b32.xlu0 %v574, 256
        %v577 = vpop.permute.xlu0 %576
        %v578 = vlaneseq
        %v579 = vshrl.u32 %v578, 7
        %v580 = vsub.s32 6, %v579
        %v581 = vrot.slane %v367, %v580
        %583 = vbcast.lane.b32.xlu0 %v581, 256
        %v584 = vpop.permute.xlu0 %583
        %v585 = vlaneseq
        %v586 = vshrl.u32 %v585, 7
        %v587 = vsub.s32 7, %v586
        %v588 = vrot.slane %v367, %v587
        %590 = vbcast.lane.b32.xlu0 %v588, 256
        %v591 = vpop.permute.xlu0 %590
        %v592 = vld [vmem:[%s1] sm:$0x1]
        %v593 = vlaneseq
        %v594 = vshrl.u32 %v593, 7
        %v595 = vsub.s32 0, %v594
        %v596 = vrot.slane %v592, %v595
        %v597 = vmul.f32 %v374, %v596
        %v598 = vmul.f32 %v381, %v596
        %v599 = vmul.f32 %v388, %v596
        %v600 = vmul.f32 %v395, %v596
        %v601 = vmul.f32 %v402, %v596
        %v602 = vmul.f32 %v409, %v596
        %v603 = vmul.f32 %v416, %v596
        %v604 = vmul.f32 %v423, %v596
        %v605 = vmul.f32 %v430, %v596
        %v606 = vmul.f32 %v437, %v596
        %v607 = vmul.f32 %v444, %v596
        %v608 = vmul.f32 %v451, %v596
        %v609 = vmul.f32 %v458, %v596
        %v610 = vmul.f32 %v465, %v596
        %v611 = vmul.f32 %v472, %v596
        %v612 = vmul.f32 %v479, %v596
        %v613 = vmul.f32 %v486, %v596
        %v614 = vmul.f32 %v493, %v596
        %v615 = vmul.f32 %v500, %v596
        %v616 = vmul.f32 %v507, %v596
        %v617 = vmul.f32 %v514, %v596
        %v618 = vmul.f32 %v521, %v596
        %v619 = vmul.f32 %v528, %v596
        %v620 = vmul.f32 %v535, %v596
        %v621 = vmul.f32 %v542, %v596
        %v622 = vmul.f32 %v549, %v596
        %v623 = vmul.f32 %v556, %v596
        %v624 = vmul.f32 %v563, %v596
        %v625 = vmul.f32 %v570, %v596
        %v626 = vmul.f32 %v577, %v596
        %v627 = vmul.f32 %v584, %v596
        %v628 = vmul.f32 %v591, %v596
        %v629 = vadd.f32 %v597, 0.0
        %v630 = vadd.f32 %v598, 0.0
        %v631 = vadd.f32 %v599, 0.0
        %v632 = vadd.f32 %v600, 0.0
        %v633 = vadd.f32 %v601, 0.0
        %v634 = vadd.f32 %v602, 0.0
        %v635 = vadd.f32 %v603, 0.0
        %v636 = vadd.f32 %v604, 0.0
        %v637 = vadd.f32 %v605, 0.0
        %v638 = vadd.f32 %v606, 0.0
        %v639 = vadd.f32 %v607, 0.0
        %v640 = vadd.f32 %v608, 0.0
        %v641 = vadd.f32 %v609, 0.0
        %v642 = vadd.f32 %v610, 0.0
        %v643 = vadd.f32 %v611, 0.0
        %v644 = vadd.f32 %v612, 0.0
        %v645 = vadd.f32 %v613, 0.0
        %v646 = vadd.f32 %v614, 0.0
        %v647 = vadd.f32 %v615, 0.0
        %v648 = vadd.f32 %v616, 0.0
        %v649 = vadd.f32 %v617, 0.0
        %v650 = vadd.f32 %v618, 0.0
        %v651 = vadd.f32 %v619, 0.0
        %v652 = vadd.f32 %v620, 0.0
        %v653 = vadd.f32 %v621, 0.0
        %v654 = vadd.f32 %v622, 0.0
        %v655 = vadd.f32 %v623, 0.0
        %v656 = vadd.f32 %v624, 0.0
        %v657 = vadd.f32 %v625, 0.0
        %v658 = vadd.f32 %v626, 0.0
        %v659 = vadd.f32 %v627, 0.0
        %v660 = vadd.f32 %v628, 0.0
        %s661 = scalar_lea.vmem %s361, 16
        %v662 = vld [vmem:[%s661] sm:$0xff]
        %v663 = vld [vmem:[%s661 + $0x40] sm:$0xff]
        %v664 = vld [vmem:[%s661 + $0x80] sm:$0xff]
        %v665 = vld [vmem:[%s661 + $0xc0] sm:$0xff]
        %v666 = vlaneseq
        %v667 = vshrl.u32 %v666, 7
        %v668 = vsub.s32 0, %v667
        %v669 = vrot.slane %v662, %v668
        %671 = vbcast.lane.b32.xlu0 %v669, 256
        %v672 = vpop.permute.xlu0 %671
        %v673 = vlaneseq
        %v674 = vshrl.u32 %v673, 7
        %v675 = vsub.s32 1, %v674
        %v676 = vrot.slane %v662, %v675
        %678 = vbcast.lane.b32.xlu0 %v676, 256
        %v679 = vpop.permute.xlu0 %678
        %v680 = vlaneseq
        %v681 = vshrl.u32 %v680, 7
        %v682 = vsub.s32 2, %v681
        %v683 = vrot.slane %v662, %v682
        %685 = vbcast.lane.b32.xlu0 %v683, 256
        %v686 = vpop.permute.xlu0 %685
        %v687 = vlaneseq
        %v688 = vshrl.u32 %v687, 7
        %v689 = vsub.s32 3, %v688
        %v690 = vrot.slane %v662, %v689
        %692 = vbcast.lane.b32.xlu0 %v690, 256
        %v693 = vpop.permute.xlu0 %692
        %v694 = vlaneseq
        %v695 = vshrl.u32 %v694, 7
        %v696 = vsub.s32 4, %v695
        %v697 = vrot.slane %v662, %v696
        %699 = vbcast.lane.b32.xlu0 %v697, 256
        %v700 = vpop.permute.xlu0 %699
        %v701 = vlaneseq
        %v702 = vshrl.u32 %v701, 7
        %v703 = vsub.s32 5, %v702
        %v704 = vrot.slane %v662, %v703
        %706 = vbcast.lane.b32.xlu0 %v704, 256
        %v707 = vpop.permute.xlu0 %706
        %v708 = vlaneseq
        %v709 = vshrl.u32 %v708, 7
        %v710 = vsub.s32 6, %v709
        %v711 = vrot.slane %v662, %v710
        %713 = vbcast.lane.b32.xlu0 %v711, 256
        %v714 = vpop.permute.xlu0 %713
        %v715 = vlaneseq
        %v716 = vshrl.u32 %v715, 7
        %v717 = vsub.s32 7, %v716
        %v718 = vrot.slane %v662, %v717
        %720 = vbcast.lane.b32.xlu0 %v718, 256
        %v721 = vpop.permute.xlu0 %720
        %v722 = vlaneseq
        %v723 = vshrl.u32 %v722, 7
        %v724 = vsub.s32 0, %v723
        %v725 = vrot.slane %v663, %v724
        %727 = vbcast.lane.b32.xlu0 %v725, 256
        %v728 = vpop.permute.xlu0 %727
        %v729 = vlaneseq
        %v730 = vshrl.u32 %v729, 7
        %v731 = vsub.s32 1, %v730
        %v732 = vrot.slane %v663, %v731
        %734 = vbcast.lane.b32.xlu0 %v732, 256
        %v735 = vpop.permute.xlu0 %734
        %v736 = vlaneseq
        %v737 = vshrl.u32 %v736, 7
        %v738 = vsub.s32 2, %v737
        %v739 = vrot.slane %v663, %v738
        %741 = vbcast.lane.b32.xlu0 %v739, 256
        %v742 = vpop.permute.xlu0 %741
        %v743 = vlaneseq
        %v744 = vshrl.u32 %v743, 7
        %v745 = vsub.s32 3, %v744
        %v746 = vrot.slane %v663, %v745
        %748 = vbcast.lane.b32.xlu0 %v746, 256
        %v749 = vpop.permute.xlu0 %748
        %v750 = vlaneseq
        %v751 = vshrl.u32 %v750, 7
        %v752 = vsub.s32 4, %v751
        %v753 = vrot.slane %v663, %v752
        %755 = vbcast.lane.b32.xlu0 %v753, 256
        %v756 = vpop.permute.xlu0 %755
        %v757 = vlaneseq
        %v758 = vshrl.u32 %v757, 7
        %v759 = vsub.s32 5, %v758
        %v760 = vrot.slane %v663, %v759
        %762 = vbcast.lane.b32.xlu0 %v760, 256
        %v763 = vpop.permute.xlu0 %762
        %v764 = vlaneseq
        %v765 = vshrl.u32 %v764, 7
        %v766 = vsub.s32 6, %v765
        %v767 = vrot.slane %v663, %v766
        %769 = vbcast.lane.b32.xlu0 %v767, 256
        %v770 = vpop.permute.xlu0 %769
        %v771 = vlaneseq
        %v772 = vshrl.u32 %v771, 7
        %v773 = vsub.s32 7, %v772
        %v774 = vrot.slane %v663, %v773
        %776 = vbcast.lane.b32.xlu0 %v774, 256
        %v777 = vpop.permute.xlu0 %776
        %v778 = vlaneseq
        %v779 = vshrl.u32 %v778, 7
        %v780 = vsub.s32 0, %v779
        %v781 = vrot.slane %v664, %v780
        %783 = vbcast.lane.b32.xlu0 %v781, 256
        %v784 = vpop.permute.xlu0 %783
        %v785 = vlaneseq
        %v786 = vshrl.u32 %v785, 7
        %v787 = vsub.s32 1, %v786
        %v788 = vrot.slane %v664, %v787
        %790 = vbcast.lane.b32.xlu0 %v788, 256
        %v791 = vpop.permute.xlu0 %790
        %v792 = vlaneseq
        %v793 = vshrl.u32 %v792, 7
        %v794 = vsub.s32 2, %v793
        %v795 = vrot.slane %v664, %v794
        %797 = vbcast.lane.b32.xlu0 %v795, 256
        %v798 = vpop.permute.xlu0 %797
        %v799 = vlaneseq
        %v800 = vshrl.u32 %v799, 7
        %v801 = vsub.s32 3, %v800
        %v802 = vrot.slane %v664, %v801
        %804 = vbcast.lane.b32.xlu0 %v802, 256
        %v805 = vpop.permute.xlu0 %804
        %v806 = vlaneseq
        %v807 = vshrl.u32 %v806, 7
        %v808 = vsub.s32 4, %v807
        %v809 = vrot.slane %v664, %v808
        %811 = vbcast.lane.b32.xlu0 %v809, 256
        %v812 = vpop.permute.xlu0 %811
        %v813 = vlaneseq
        %v814 = vshrl.u32 %v813, 7
        %v815 = vsub.s32 5, %v814
        %v816 = vrot.slane %v664, %v815
        %818 = vbcast.lane.b32.xlu0 %v816, 256
        %v819 = vpop.permute.xlu0 %818
        %v820 = vlaneseq
        %v821 = vshrl.u32 %v820, 7
        %v822 = vsub.s32 6, %v821
        %v823 = vrot.slane %v664, %v822
        %825 = vbcast.lane.b32.xlu0 %v823, 256
        %v826 = vpop.permute.xlu0 %825
        %v827 = vlaneseq
        %v828 = vshrl.u32 %v827, 7
        %v829 = vsub.s32 7, %v828
        %v830 = vrot.slane %v664, %v829
        %832 = vbcast.lane.b32.xlu0 %v830, 256
        %v833 = vpop.permute.xlu0 %832
        %v834 = vlaneseq
        %v835 = vshrl.u32 %v834, 7
        %v836 = vsub.s32 0, %v835
        %v837 = vrot.slane %v665, %v836
        %839 = vbcast.lane.b32.xlu0 %v837, 256
        %v840 = vpop.permute.xlu0 %839
        %v841 = vlaneseq
        %v842 = vshrl.u32 %v841, 7
        %v843 = vsub.s32 1, %v842
        %v844 = vrot.slane %v665, %v843
        %846 = vbcast.lane.b32.xlu0 %v844, 256
        %v847 = vpop.permute.xlu0 %846
        %v848 = vlaneseq
        %v849 = vshrl.u32 %v848, 7
        %v850 = vsub.s32 2, %v849
        %v851 = vrot.slane %v665, %v850
        %853 = vbcast.lane.b32.xlu0 %v851, 256
        %v854 = vpop.permute.xlu0 %853
        %v855 = vlaneseq
        %v856 = vshrl.u32 %v855, 7
        %v857 = vsub.s32 3, %v856
        %v858 = vrot.slane %v665, %v857
        %860 = vbcast.lane.b32.xlu0 %v858, 256
        %v861 = vpop.permute.xlu0 %860
        %v862 = vlaneseq
        %v863 = vshrl.u32 %v862, 7
        %v864 = vsub.s32 4, %v863
        %v865 = vrot.slane %v665, %v864
        %867 = vbcast.lane.b32.xlu0 %v865, 256
        %v868 = vpop.permute.xlu0 %867
        %v869 = vlaneseq
        %v870 = vshrl.u32 %v869, 7
        %v871 = vsub.s32 5, %v870
        %v872 = vrot.slane %v665, %v871
        %874 = vbcast.lane.b32.xlu0 %v872, 256
        %v875 = vpop.permute.xlu0 %874
        %v876 = vlaneseq
        %v877 = vshrl.u32 %v876, 7
        %v878 = vsub.s32 6, %v877
        %v879 = vrot.slane %v665, %v878
        %881 = vbcast.lane.b32.xlu0 %v879, 256
        %v882 = vpop.permute.xlu0 %881
        %v883 = vlaneseq
        %v884 = vshrl.u32 %v883, 7
        %v885 = vsub.s32 7, %v884
        %v886 = vrot.slane %v665, %v885
        %888 = vbcast.lane.b32.xlu0 %v886, 256
        %v889 = vpop.permute.xlu0 %888
        %v890 = vld [vmem:[%s1 + $0x1] sm:$0x1]
        %v891 = vlaneseq
        %v892 = vshrl.u32 %v891, 7
        %v893 = vsub.s32 0, %v892
        %v894 = vrot.slane %v890, %v893
        %v895 = vmul.f32 %v672, %v894
        %v896 = vmul.f32 %v679, %v894
        %v897 = vmul.f32 %v686, %v894
        %v898 = vmul.f32 %v693, %v894
        %v899 = vmul.f32 %v700, %v894
        %v900 = vmul.f32 %v707, %v894
        %v901 = vmul.f32 %v714, %v894
        %v902 = vmul.f32 %v721, %v894
        %v903 = vmul.f32 %v728, %v894
        %v904 = vmul.f32 %v735, %v894
        %v905 = vmul.f32 %v742, %v894
        %v906 = vmul.f32 %v749, %v894
        %v907 = vmul.f32 %v756, %v894
        %v908 = vmul.f32 %v763, %v894
        %v909 = vmul.f32 %v770, %v894
        %v910 = vmul.f32 %v777, %v894
        %v911 = vmul.f32 %v784, %v894
        %v912 = vmul.f32 %v791, %v894
        %v913 = vmul.f32 %v798, %v894
        %v914 = vmul.f32 %v805, %v894
        %v915 = vmul.f32 %v812, %v894
        %v916 = vmul.f32 %v819, %v894
        %v917 = vmul.f32 %v826, %v894
        %v918 = vmul.f32 %v833, %v894
        %v919 = vmul.f32 %v840, %v894
        %v920 = vmul.f32 %v847, %v894
        %v921 = vmul.f32 %v854, %v894
        %v922 = vmul.f32 %v861, %v894
        %v923 = vmul.f32 %v868, %v894
        %v924 = vmul.f32 %v875, %v894
        %v925 = vmul.f32 %v882, %v894
        %v926 = vmul.f32 %v889, %v894
        %v927 = vadd.f32 %v629, %v895
        %v928 = vadd.f32 %v630, %v896
        %v929 = vadd.f32 %v631, %v897
        %v930 = vadd.f32 %v632, %v898
        %v931 = vadd.f32 %v633, %v899
        %v932 = vadd.f32 %v634, %v900
        %v933 = vadd.f32 %v635, %v901
        %v934 = vadd.f32 %v636, %v902
        %v935 = vadd.f32 %v637, %v903
        %v936 = vadd.f32 %v638, %v904
        %v937 = vadd.f32 %v639, %v905
        %v938 = vadd.f32 %v640, %v906
        %v939 = vadd.f32 %v641, %v907
        %v940 = vadd.f32 %v642, %v908
        %v941 = vadd.f32 %v643, %v909
        %v942 = vadd.f32 %v644, %v910
        %v943 = vadd.f32 %v645, %v911
        %v944 = vadd.f32 %v646, %v912
        %v945 = vadd.f32 %v647, %v913
        %v946 = vadd.f32 %v648, %v914
        %v947 = vadd.f32 %v649, %v915
        %v948 = vadd.f32 %v650, %v916
        %v949 = vadd.f32 %v651, %v917
        %v950 = vadd.f32 %v652, %v918
        %v951 = vadd.f32 %v653, %v919
        %v952 = vadd.f32 %v654, %v920
        %v953 = vadd.f32 %v655, %v921
        %v954 = vadd.f32 %v656, %v922
        %v955 = vadd.f32 %v657, %v923
        %v956 = vadd.f32 %v658, %v924
        %v957 = vadd.f32 %v659, %v925
        %v958 = vadd.f32 %v660, %v926
        %s960 = sor.u32 256, 1
        %961 = vbcast.lane.b32.xlu0 %v371, %s960
        %v962 = vpop.permute.xlu0 %961
        %s964 = sor.u32 256, 1
        %965 = vbcast.lane.b32.xlu0 %v378, %s964
        %v966 = vpop.permute.xlu0 %965
        %s968 = sor.u32 256, 1
        %969 = vbcast.lane.b32.xlu0 %v385, %s968
        %v970 = vpop.permute.xlu0 %969
        %s972 = sor.u32 256, 1
        %973 = vbcast.lane.b32.xlu0 %v392, %s972
        %v974 = vpop.permute.xlu0 %973
        %s976 = sor.u32 256, 1
        %977 = vbcast.lane.b32.xlu0 %v399, %s976
        %v978 = vpop.permute.xlu0 %977
        %s980 = sor.u32 256, 1
        %981 = vbcast.lane.b32.xlu0 %v406, %s980
        %v982 = vpop.permute.xlu0 %981
        %s984 = sor.u32 256, 1
        %985 = vbcast.lane.b32.xlu0 %v413, %s984
        %v986 = vpop.permute.xlu0 %985
        %s988 = sor.u32 256, 1
        %989 = vbcast.lane.b32.xlu0 %v420, %s988
        %v990 = vpop.permute.xlu0 %989
        %s992 = sor.u32 256, 1
        %993 = vbcast.lane.b32.xlu0 %v427, %s992
        %v994 = vpop.permute.xlu0 %993
        %s996 = sor.u32 256, 1
        %997 = vbcast.lane.b32.xlu0 %v434, %s996
        %v998 = vpop.permute.xlu0 %997
        %s1000 = sor.u32 256, 1
        %1001 = vbcast.lane.b32.xlu0 %v441, %s1000
        %v1002 = vpop.permute.xlu0 %1001
        %s1004 = sor.u32 256, 1
        %1005 = vbcast.lane.b32.xlu0 %v448, %s1004
        %v1006 = vpop.permute.xlu0 %1005
        %s1008 = sor.u32 256, 1
        %1009 = vbcast.lane.b32.xlu0 %v455, %s1008
        %v1010 = vpop.permute.xlu0 %1009
        %s1012 = sor.u32 256, 1
        %1013 = vbcast.lane.b32.xlu0 %v462, %s1012
        %v1014 = vpop.permute.xlu0 %1013
        %s1016 = sor.u32 256, 1
        %1017 = vbcast.lane.b32.xlu0 %v469, %s1016
        %v1018 = vpop.permute.xlu0 %1017
        %s1020 = sor.u32 256, 1
        %1021 = vbcast.lane.b32.xlu0 %v476, %s1020
        %v1022 = vpop.permute.xlu0 %1021
        %s1024 = sor.u32 256, 1
        %1025 = vbcast.lane.b32.xlu0 %v483, %s1024
        %v1026 = vpop.permute.xlu0 %1025
        %s1028 = sor.u32 256, 1
        %1029 = vbcast.lane.b32.xlu0 %v490, %s1028
        %v1030 = vpop.permute.xlu0 %1029
        %s1032 = sor.u32 256, 1
        %1033 = vbcast.lane.b32.xlu0 %v497, %s1032
        %v1034 = vpop.permute.xlu0 %1033
        %s1036 = sor.u32 256, 1
        %1037 = vbcast.lane.b32.xlu0 %v504, %s1036
        %v1038 = vpop.permute.xlu0 %1037
        %s1040 = sor.u32 256, 1
        %1041 = vbcast.lane.b32.xlu0 %v511, %s1040
        %v1042 = vpop.permute.xlu0 %1041
        %s1044 = sor.u32 256, 1
        %1045 = vbcast.lane.b32.xlu0 %v518, %s1044
        %v1046 = vpop.permute.xlu0 %1045
        %s1048 = sor.u32 256, 1
        %1049 = vbcast.lane.b32.xlu0 %v525, %s1048
        %v1050 = vpop.permute.xlu0 %1049
        %s1052 = sor.u32 256, 1
        %1053 = vbcast.lane.b32.xlu0 %v532, %s1052
        %v1054 = vpop.permute.xlu0 %1053
        %s1056 = sor.u32 256, 1
        %1057 = vbcast.lane.b32.xlu0 %v539, %s1056
        %v1058 = vpop.permute.xlu0 %1057
        %s1060 = sor.u32 256, 1
        %1061 = vbcast.lane.b32.xlu0 %v546, %s1060
        %v1062 = vpop.permute.xlu0 %1061
        %s1064 = sor.u32 256, 1
        %1065 = vbcast.lane.b32.xlu0 %v553, %s1064
        %v1066 = vpop.permute.xlu0 %1065
        %s1068 = sor.u32 256, 1
        %1069 = vbcast.lane.b32.xlu0 %v560, %s1068
        %v1070 = vpop.permute.xlu0 %1069
        %s1072 = sor.u32 256, 1
        %1073 = vbcast.lane.b32.xlu0 %v567, %s1072
        %v1074 = vpop.permute.xlu0 %1073
        %s1076 = sor.u32 256, 1
        %1077 = vbcast.lane.b32.xlu0 %v574, %s1076
        %v1078 = vpop.permute.xlu0 %1077
        %s1080 = sor.u32 256, 1
        %1081 = vbcast.lane.b32.xlu0 %v581, %s1080
        %v1082 = vpop.permute.xlu0 %1081
        %s1084 = sor.u32 256, 1
        %1085 = vbcast.lane.b32.xlu0 %v588, %s1084
        %v1086 = vpop.permute.xlu0 %1085
        %v1087 = vld [vmem:[%s1 + $0x2] sm:$0x1]
        %v1088 = vlaneseq
        %v1089 = vshrl.u32 %v1088, 7
        %v1090 = vsub.s32 0, %v1089
        %v1091 = vrot.slane %v1087, %v1090
        %v1092 = vmul.f32 %v962, %v1091
        %v1093 = vmul.f32 %v966, %v1091
        %v1094 = vmul.f32 %v970, %v1091
        %v1095 = vmul.f32 %v974, %v1091
        %v1096 = vmul.f32 %v978, %v1091
        %v1097 = vmul.f32 %v982, %v1091
        %v1098 = vmul.f32 %v986, %v1091
        %v1099 = vmul.f32 %v990, %v1091
        %v1100 = vmul.f32 %v994, %v1091
        %v1101 = vmul.f32 %v998, %v1091
        %v1102 = vmul.f32 %v1002, %v1091
        %v1103 = vmul.f32 %v1006, %v1091
        %v1104 = vmul.f32 %v1010, %v1091
        %v1105 = vmul.f32 %v1014, %v1091
        %v1106 = vmul.f32 %v1018, %v1091
        %v1107 = vmul.f32 %v1022, %v1091
        %v1108 = vmul.f32 %v1026, %v1091
        %v1109 = vmul.f32 %v1030, %v1091
        %v1110 = vmul.f32 %v1034, %v1091
        %v1111 = vmul.f32 %v1038, %v1091
        %v1112 = vmul.f32 %v1042, %v1091
        %v1113 = vmul.f32 %v1046, %v1091
        %v1114 = vmul.f32 %v1050, %v1091
        %v1115 = vmul.f32 %v1054, %v1091
        %v1116 = vmul.f32 %v1058, %v1091
        %v1117 = vmul.f32 %v1062, %v1091
        %v1118 = vmul.f32 %v1066, %v1091
        %v1119 = vmul.f32 %v1070, %v1091
        %v1120 = vmul.f32 %v1074, %v1091
        %v1121 = vmul.f32 %v1078, %v1091
        %v1122 = vmul.f32 %v1082, %v1091
        %v1123 = vmul.f32 %v1086, %v1091
        %v1124 = vadd.f32 %v927, %v1092
        %v1125 = vadd.f32 %v928, %v1093
        %v1126 = vadd.f32 %v929, %v1094
        %v1127 = vadd.f32 %v930, %v1095
        %v1128 = vadd.f32 %v931, %v1096
        %v1129 = vadd.f32 %v932, %v1097
        %v1130 = vadd.f32 %v933, %v1098
        %v1131 = vadd.f32 %v934, %v1099
        %v1132 = vadd.f32 %v935, %v1100
        %v1133 = vadd.f32 %v936, %v1101
        %v1134 = vadd.f32 %v937, %v1102
        %v1135 = vadd.f32 %v938, %v1103
        %v1136 = vadd.f32 %v939, %v1104
        %v1137 = vadd.f32 %v940, %v1105
        %v1138 = vadd.f32 %v941, %v1106
        %v1139 = vadd.f32 %v942, %v1107
        %v1140 = vadd.f32 %v943, %v1108
        %v1141 = vadd.f32 %v944, %v1109
        %v1142 = vadd.f32 %v945, %v1110
        %v1143 = vadd.f32 %v946, %v1111
        %v1144 = vadd.f32 %v947, %v1112
        %v1145 = vadd.f32 %v948, %v1113
        %v1146 = vadd.f32 %v949, %v1114
        %v1147 = vadd.f32 %v950, %v1115
        %v1148 = vadd.f32 %v951, %v1116
        %v1149 = vadd.f32 %v952, %v1117
        %v1150 = vadd.f32 %v953, %v1118
        %v1151 = vadd.f32 %v954, %v1119
        %v1152 = vadd.f32 %v955, %v1120
        %v1153 = vadd.f32 %v956, %v1121
        %v1154 = vadd.f32 %v957, %v1122
        %v1155 = vadd.f32 %v958, %v1123
        %s1156 = scalar_lea.vmem %s361, 32
        %v1157 = vld [vmem:[%s1156] sm:$0xff]
        %v1158 = vld [vmem:[%s1156 + $0x40] sm:$0xff]
        %v1159 = vld [vmem:[%s1156 + $0x80] sm:$0xff]
        %v1160 = vld [vmem:[%s1156 + $0xc0] sm:$0xff]
        %v1161 = vlaneseq
        %v1162 = vshrl.u32 %v1161, 7
        %v1163 = vsub.s32 0, %v1162
        %v1164 = vrot.slane %v1157, %v1163
        %1166 = vbcast.lane.b32.xlu0 %v1164, 256
        %v1167 = vpop.permute.xlu0 %1166
        %v1168 = vlaneseq
        %v1169 = vshrl.u32 %v1168, 7
        %v1170 = vsub.s32 1, %v1169
        %v1171 = vrot.slane %v1157, %v1170
        %1173 = vbcast.lane.b32.xlu0 %v1171, 256
        %v1174 = vpop.permute.xlu0 %1173
        %v1175 = vlaneseq
        %v1176 = vshrl.u32 %v1175, 7
        %v1177 = vsub.s32 2, %v1176
        %v1178 = vrot.slane %v1157, %v1177
        %1180 = vbcast.lane.b32.xlu0 %v1178, 256
        %v1181 = vpop.permute.xlu0 %1180
        %v1182 = vlaneseq
        %v1183 = vshrl.u32 %v1182, 7
        %v1184 = vsub.s32 3, %v1183
        %v1185 = vrot.slane %v1157, %v1184
        %1187 = vbcast.lane.b32.xlu0 %v1185, 256
        %v1188 = vpop.permute.xlu0 %1187
        %v1189 = vlaneseq
        %v1190 = vshrl.u32 %v1189, 7
        %v1191 = vsub.s32 4, %v1190
        %v1192 = vrot.slane %v1157, %v1191
        %1194 = vbcast.lane.b32.xlu0 %v1192, 256
        %v1195 = vpop.permute.xlu0 %1194
        %v1196 = vlaneseq
        %v1197 = vshrl.u32 %v1196, 7
        %v1198 = vsub.s32 5, %v1197
        %v1199 = vrot.slane %v1157, %v1198
        %1201 = vbcast.lane.b32.xlu0 %v1199, 256
        %v1202 = vpop.permute.xlu0 %1201
        %v1203 = vlaneseq
        %v1204 = vshrl.u32 %v1203, 7
        %v1205 = vsub.s32 6, %v1204
        %v1206 = vrot.slane %v1157, %v1205
        %1208 = vbcast.lane.b32.xlu0 %v1206, 256
        %v1209 = vpop.permute.xlu0 %1208
        %v1210 = vlaneseq
        %v1211 = vshrl.u32 %v1210, 7
        %v1212 = vsub.s32 7, %v1211
        %v1213 = vrot.slane %v1157, %v1212
        %1215 = vbcast.lane.b32.xlu0 %v1213, 256
        %v1216 = vpop.permute.xlu0 %1215
        %v1217 = vlaneseq
        %v1218 = vshrl.u32 %v1217, 7
        %v1219 = vsub.s32 0, %v1218
        %v1220 = vrot.slane %v1158, %v1219
        %1222 = vbcast.lane.b32.xlu0 %v1220, 256
        %v1223 = vpop.permute.xlu0 %1222
        %v1224 = vlaneseq
        %v1225 = vshrl.u32 %v1224, 7
        %v1226 = vsub.s32 1, %v1225
        %v1227 = vrot.slane %v1158, %v1226
        %1229 = vbcast.lane.b32.xlu0 %v1227, 256
        %v1230 = vpop.permute.xlu0 %1229
        %v1231 = vlaneseq
        %v1232 = vshrl.u32 %v1231, 7
        %v1233 = vsub.s32 2, %v1232
        %v1234 = vrot.slane %v1158, %v1233
        %1236 = vbcast.lane.b32.xlu0 %v1234, 256
        %v1237 = vpop.permute.xlu0 %1236
        %v1238 = vlaneseq
        %v1239 = vshrl.u32 %v1238, 7
        %v1240 = vsub.s32 3, %v1239
        %v1241 = vrot.slane %v1158, %v1240
        %1243 = vbcast.lane.b32.xlu0 %v1241, 256
        %v1244 = vpop.permute.xlu0 %1243
        %v1245 = vlaneseq
        %v1246 = vshrl.u32 %v1245, 7
        %v1247 = vsub.s32 4, %v1246
        %v1248 = vrot.slane %v1158, %v1247
        %1250 = vbcast.lane.b32.xlu0 %v1248, 256
        %v1251 = vpop.permute.xlu0 %1250
        %v1252 = vlaneseq
        %v1253 = vshrl.u32 %v1252, 7
        %v1254 = vsub.s32 5, %v1253
        %v1255 = vrot.slane %v1158, %v1254
        %1257 = vbcast.lane.b32.xlu0 %v1255, 256
        %v1258 = vpop.permute.xlu0 %1257
        %v1259 = vlaneseq
        %v1260 = vshrl.u32 %v1259, 7
        %v1261 = vsub.s32 6, %v1260
        %v1262 = vrot.slane %v1158, %v1261
        %1264 = vbcast.lane.b32.xlu0 %v1262, 256
        %v1265 = vpop.permute.xlu0 %1264
        %v1266 = vlaneseq
        %v1267 = vshrl.u32 %v1266, 7
        %v1268 = vsub.s32 7, %v1267
        %v1269 = vrot.slane %v1158, %v1268
        %1271 = vbcast.lane.b32.xlu0 %v1269, 256
        %v1272 = vpop.permute.xlu0 %1271
        %v1273 = vlaneseq
        %v1274 = vshrl.u32 %v1273, 7
        %v1275 = vsub.s32 0, %v1274
        %v1276 = vrot.slane %v1159, %v1275
        %1278 = vbcast.lane.b32.xlu0 %v1276, 256
        %v1279 = vpop.permute.xlu0 %1278
        %v1280 = vlaneseq
        %v1281 = vshrl.u32 %v1280, 7
        %v1282 = vsub.s32 1, %v1281
        %v1283 = vrot.slane %v1159, %v1282
        %1285 = vbcast.lane.b32.xlu0 %v1283, 256
        %v1286 = vpop.permute.xlu0 %1285
        %v1287 = vlaneseq
        %v1288 = vshrl.u32 %v1287, 7
        %v1289 = vsub.s32 2, %v1288
        %v1290 = vrot.slane %v1159, %v1289
        %1292 = vbcast.lane.b32.xlu0 %v1290, 256
        %v1293 = vpop.permute.xlu0 %1292
        %v1294 = vlaneseq
        %v1295 = vshrl.u32 %v1294, 7
        %v1296 = vsub.s32 3, %v1295
        %v1297 = vrot.slane %v1159, %v1296
        %1299 = vbcast.lane.b32.xlu0 %v1297, 256
        %v1300 = vpop.permute.xlu0 %1299
        %v1301 = vlaneseq
        %v1302 = vshrl.u32 %v1301, 7
        %v1303 = vsub.s32 4, %v1302
        %v1304 = vrot.slane %v1159, %v1303
        %1306 = vbcast.lane.b32.xlu0 %v1304, 256
        %v1307 = vpop.permute.xlu0 %1306
        %v1308 = vlaneseq
        %v1309 = vshrl.u32 %v1308, 7
        %v1310 = vsub.s32 5, %v1309
        %v1311 = vrot.slane %v1159, %v1310
        %1313 = vbcast.lane.b32.xlu0 %v1311, 256
        %v1314 = vpop.permute.xlu0 %1313
        %v1315 = vlaneseq
        %v1316 = vshrl.u32 %v1315, 7
        %v1317 = vsub.s32 6, %v1316
        %v1318 = vrot.slane %v1159, %v1317
        %1320 = vbcast.lane.b32.xlu0 %v1318, 256
        %v1321 = vpop.permute.xlu0 %1320
        %v1322 = vlaneseq
        %v1323 = vshrl.u32 %v1322, 7
        %v1324 = vsub.s32 7, %v1323
        %v1325 = vrot.slane %v1159, %v1324
        %1327 = vbcast.lane.b32.xlu0 %v1325, 256
        %v1328 = vpop.permute.xlu0 %1327
        %v1329 = vlaneseq
        %v1330 = vshrl.u32 %v1329, 7
        %v1331 = vsub.s32 0, %v1330
        %v1332 = vrot.slane %v1160, %v1331
        %1334 = vbcast.lane.b32.xlu0 %v1332, 256
        %v1335 = vpop.permute.xlu0 %1334
        %v1336 = vlaneseq
        %v1337 = vshrl.u32 %v1336, 7
        %v1338 = vsub.s32 1, %v1337
        %v1339 = vrot.slane %v1160, %v1338
        %1341 = vbcast.lane.b32.xlu0 %v1339, 256
        %v1342 = vpop.permute.xlu0 %1341
        %v1343 = vlaneseq
        %v1344 = vshrl.u32 %v1343, 7
        %v1345 = vsub.s32 2, %v1344
        %v1346 = vrot.slane %v1160, %v1345
        %1348 = vbcast.lane.b32.xlu0 %v1346, 256
        %v1349 = vpop.permute.xlu0 %1348
        %v1350 = vlaneseq
        %v1351 = vshrl.u32 %v1350, 7
        %v1352 = vsub.s32 3, %v1351
        %v1353 = vrot.slane %v1160, %v1352
        %1355 = vbcast.lane.b32.xlu0 %v1353, 256
        %v1356 = vpop.permute.xlu0 %1355
        %v1357 = vlaneseq
        %v1358 = vshrl.u32 %v1357, 7
        %v1359 = vsub.s32 4, %v1358
        %v1360 = vrot.slane %v1160, %v1359
        %1362 = vbcast.lane.b32.xlu0 %v1360, 256
        %v1363 = vpop.permute.xlu0 %1362
        %v1364 = vlaneseq
        %v1365 = vshrl.u32 %v1364, 7
        %v1366 = vsub.s32 5, %v1365
        %v1367 = vrot.slane %v1160, %v1366
        %1369 = vbcast.lane.b32.xlu0 %v1367, 256
        %v1370 = vpop.permute.xlu0 %1369
        %v1371 = vlaneseq
        %v1372 = vshrl.u32 %v1371, 7
        %v1373 = vsub.s32 6, %v1372
        %v1374 = vrot.slane %v1160, %v1373
        %1376 = vbcast.lane.b32.xlu0 %v1374, 256
        %v1377 = vpop.permute.xlu0 %1376
        %v1378 = vlaneseq
        %v1379 = vshrl.u32 %v1378, 7
        %v1380 = vsub.s32 7, %v1379
        %v1381 = vrot.slane %v1160, %v1380
        %1383 = vbcast.lane.b32.xlu0 %v1381, 256
        %v1384 = vpop.permute.xlu0 %1383
        %v1385 = vld [vmem:[%s1 + $0x3] sm:$0x1]
        %v1386 = vlaneseq
        %v1387 = vshrl.u32 %v1386, 7
        %v1388 = vsub.s32 0, %v1387
        %v1389 = vrot.slane %v1385, %v1388
        %v1390 = vmul.f32 %v1167, %v1389
        %v1391 = vmul.f32 %v1174, %v1389
        %v1392 = vmul.f32 %v1181, %v1389
        %v1393 = vmul.f32 %v1188, %v1389
        %v1394 = vmul.f32 %v1195, %v1389
        %v1395 = vmul.f32 %v1202, %v1389
        %v1396 = vmul.f32 %v1209, %v1389
        %v1397 = vmul.f32 %v1216, %v1389
        %v1398 = vmul.f32 %v1223, %v1389
        %v1399 = vmul.f32 %v1230, %v1389
        %v1400 = vmul.f32 %v1237, %v1389
        %v1401 = vmul.f32 %v1244, %v1389
        %v1402 = vmul.f32 %v1251, %v1389
        %v1403 = vmul.f32 %v1258, %v1389
        %v1404 = vmul.f32 %v1265, %v1389
        %v1405 = vmul.f32 %v1272, %v1389
        %v1406 = vmul.f32 %v1279, %v1389
        %v1407 = vmul.f32 %v1286, %v1389
        %v1408 = vmul.f32 %v1293, %v1389
        %v1409 = vmul.f32 %v1300, %v1389
        %v1410 = vmul.f32 %v1307, %v1389
        %v1411 = vmul.f32 %v1314, %v1389
        %v1412 = vmul.f32 %v1321, %v1389
        %v1413 = vmul.f32 %v1328, %v1389
        %v1414 = vmul.f32 %v1335, %v1389
        %v1415 = vmul.f32 %v1342, %v1389
        %v1416 = vmul.f32 %v1349, %v1389
        %v1417 = vmul.f32 %v1356, %v1389
        %v1418 = vmul.f32 %v1363, %v1389
        %v1419 = vmul.f32 %v1370, %v1389
        %v1420 = vmul.f32 %v1377, %v1389
        %v1421 = vmul.f32 %v1384, %v1389
        %v1422 = vadd.f32 %v1124, %v1390
        %v1423 = vadd.f32 %v1125, %v1391
        %v1424 = vadd.f32 %v1126, %v1392
        %v1425 = vadd.f32 %v1127, %v1393
        %v1426 = vadd.f32 %v1128, %v1394
        %v1427 = vadd.f32 %v1129, %v1395
        %v1428 = vadd.f32 %v1130, %v1396
        %v1429 = vadd.f32 %v1131, %v1397
        %v1430 = vadd.f32 %v1132, %v1398
        %v1431 = vadd.f32 %v1133, %v1399
        %v1432 = vadd.f32 %v1134, %v1400
        %v1433 = vadd.f32 %v1135, %v1401
        %v1434 = vadd.f32 %v1136, %v1402
        %v1435 = vadd.f32 %v1137, %v1403
        %v1436 = vadd.f32 %v1138, %v1404
        %v1437 = vadd.f32 %v1139, %v1405
        %v1438 = vadd.f32 %v1140, %v1406
        %v1439 = vadd.f32 %v1141, %v1407
        %v1440 = vadd.f32 %v1142, %v1408
        %v1441 = vadd.f32 %v1143, %v1409
        %v1442 = vadd.f32 %v1144, %v1410
        %v1443 = vadd.f32 %v1145, %v1411
        %v1444 = vadd.f32 %v1146, %v1412
        %v1445 = vadd.f32 %v1147, %v1413
        %v1446 = vadd.f32 %v1148, %v1414
        %v1447 = vadd.f32 %v1149, %v1415
        %v1448 = vadd.f32 %v1150, %v1416
        %v1449 = vadd.f32 %v1151, %v1417
        %v1450 = vadd.f32 %v1152, %v1418
        %v1451 = vadd.f32 %v1153, %v1419
        %v1452 = vadd.f32 %v1154, %v1420
        %v1453 = vadd.f32 %v1155, %v1421
        %s1454 = scalar_lea.vmem %s361, 48
        %v1455 = vld [vmem:[%s1454] sm:$0xff]
        %v1456 = vld [vmem:[%s1454 + $0x40] sm:$0xff]
        %v1457 = vld [vmem:[%s1454 + $0x80] sm:$0xff]
        %v1458 = vld [vmem:[%s1454 + $0xc0] sm:$0xff]
        %v1459 = vlaneseq
        %v1460 = vshrl.u32 %v1459, 7
        %v1461 = vsub.s32 0, %v1460
        %v1462 = vrot.slane %v1455, %v1461
        %1464 = vbcast.lane.b32.xlu0 %v1462, 256
        %v1465 = vpop.permute.xlu0 %1464
        %v1466 = vlaneseq
        %v1467 = vshrl.u32 %v1466, 7
        %v1468 = vsub.s32 1, %v1467
        %v1469 = vrot.slane %v1455, %v1468
        %1471 = vbcast.lane.b32.xlu0 %v1469, 256
        %v1472 = vpop.permute.xlu0 %1471
        %v1473 = vlaneseq
        %v1474 = vshrl.u32 %v1473, 7
        %v1475 = vsub.s32 2, %v1474
        %v1476 = vrot.slane %v1455, %v1475
        %1478 = vbcast.lane.b32.xlu0 %v1476, 256
        %v1479 = vpop.permute.xlu0 %1478
        %v1480 = vlaneseq
        %v1481 = vshrl.u32 %v1480, 7
        %v1482 = vsub.s32 3, %v1481
        %v1483 = vrot.slane %v1455, %v1482
        %1485 = vbcast.lane.b32.xlu0 %v1483, 256
        %v1486 = vpop.permute.xlu0 %1485
        %v1487 = vlaneseq
        %v1488 = vshrl.u32 %v1487, 7
        %v1489 = vsub.s32 4, %v1488
        %v1490 = vrot.slane %v1455, %v1489
        %1492 = vbcast.lane.b32.xlu0 %v1490, 256
        %v1493 = vpop.permute.xlu0 %1492
        %v1494 = vlaneseq
        %v1495 = vshrl.u32 %v1494, 7
        %v1496 = vsub.s32 5, %v1495
        %v1497 = vrot.slane %v1455, %v1496
        %1499 = vbcast.lane.b32.xlu0 %v1497, 256
        %v1500 = vpop.permute.xlu0 %1499
        %v1501 = vlaneseq
        %v1502 = vshrl.u32 %v1501, 7
        %v1503 = vsub.s32 6, %v1502
        %v1504 = vrot.slane %v1455, %v1503
        %1506 = vbcast.lane.b32.xlu0 %v1504, 256
        %v1507 = vpop.permute.xlu0 %1506
        %v1508 = vlaneseq
        %v1509 = vshrl.u32 %v1508, 7
        %v1510 = vsub.s32 7, %v1509
        %v1511 = vrot.slane %v1455, %v1510
        %1513 = vbcast.lane.b32.xlu0 %v1511, 256
        %v1514 = vpop.permute.xlu0 %1513
        %v1515 = vlaneseq
        %v1516 = vshrl.u32 %v1515, 7
        %v1517 = vsub.s32 0, %v1516
        %v1518 = vrot.slane %v1456, %v1517
        %1520 = vbcast.lane.b32.xlu0 %v1518, 256
        %v1521 = vpop.permute.xlu0 %1520
        %v1522 = vlaneseq
        %v1523 = vshrl.u32 %v1522, 7
        %v1524 = vsub.s32 1, %v1523
        %v1525 = vrot.slane %v1456, %v1524
        %1527 = vbcast.lane.b32.xlu0 %v1525, 256
        %v1528 = vpop.permute.xlu0 %1527
        %v1529 = vlaneseq
        %v1530 = vshrl.u32 %v1529, 7
        %v1531 = vsub.s32 2, %v1530
        %v1532 = vrot.slane %v1456, %v1531
        %1534 = vbcast.lane.b32.xlu0 %v1532, 256
        %v1535 = vpop.permute.xlu0 %1534
        %v1536 = vlaneseq
        %v1537 = vshrl.u32 %v1536, 7
        %v1538 = vsub.s32 3, %v1537
        %v1539 = vrot.slane %v1456, %v1538
        %1541 = vbcast.lane.b32.xlu0 %v1539, 256
        %v1542 = vpop.permute.xlu0 %1541
        %v1543 = vlaneseq
        %v1544 = vshrl.u32 %v1543, 7
        %v1545 = vsub.s32 4, %v1544
        %v1546 = vrot.slane %v1456, %v1545
        %1548 = vbcast.lane.b32.xlu0 %v1546, 256
        %v1549 = vpop.permute.xlu0 %1548
        %v1550 = vlaneseq
        %v1551 = vshrl.u32 %v1550, 7
        %v1552 = vsub.s32 5, %v1551
        %v1553 = vrot.slane %v1456, %v1552
        %1555 = vbcast.lane.b32.xlu0 %v1553, 256
        %v1556 = vpop.permute.xlu0 %1555
        %v1557 = vlaneseq
        %v1558 = vshrl.u32 %v1557, 7
        %v1559 = vsub.s32 6, %v1558
        %v1560 = vrot.slane %v1456, %v1559
        %1562 = vbcast.lane.b32.xlu0 %v1560, 256
        %v1563 = vpop.permute.xlu0 %1562
        %v1564 = vlaneseq
        %v1565 = vshrl.u32 %v1564, 7
        %v1566 = vsub.s32 7, %v1565
        %v1567 = vrot.slane %v1456, %v1566
        %1569 = vbcast.lane.b32.xlu0 %v1567, 256
        %v1570 = vpop.permute.xlu0 %1569
        %v1571 = vlaneseq
        %v1572 = vshrl.u32 %v1571, 7
        %v1573 = vsub.s32 0, %v1572
        %v1574 = vrot.slane %v1457, %v1573
        %1576 = vbcast.lane.b32.xlu0 %v1574, 256
        %v1577 = vpop.permute.xlu0 %1576
        %v1578 = vlaneseq
        %v1579 = vshrl.u32 %v1578, 7
        %v1580 = vsub.s32 1, %v1579
        %v1581 = vrot.slane %v1457, %v1580
        %1583 = vbcast.lane.b32.xlu0 %v1581, 256
        %v1584 = vpop.permute.xlu0 %1583
        %v1585 = vlaneseq
        %v1586 = vshrl.u32 %v1585, 7
        %v1587 = vsub.s32 2, %v1586
        %v1588 = vrot.slane %v1457, %v1587
        %1590 = vbcast.lane.b32.xlu0 %v1588, 256
        %v1591 = vpop.permute.xlu0 %1590
        %v1592 = vlaneseq
        %v1593 = vshrl.u32 %v1592, 7
        %v1594 = vsub.s32 3, %v1593
        %v1595 = vrot.slane %v1457, %v1594
        %1597 = vbcast.lane.b32.xlu0 %v1595, 256
        %v1598 = vpop.permute.xlu0 %1597
        %v1599 = vlaneseq
        %v1600 = vshrl.u32 %v1599, 7
        %v1601 = vsub.s32 4, %v1600
        %v1602 = vrot.slane %v1457, %v1601
        %1604 = vbcast.lane.b32.xlu0 %v1602, 256
        %v1605 = vpop.permute.xlu0 %1604
        %v1606 = vlaneseq
        %v1607 = vshrl.u32 %v1606, 7
        %v1608 = vsub.s32 5, %v1607
        %v1609 = vrot.slane %v1457, %v1608
        %1611 = vbcast.lane.b32.xlu0 %v1609, 256
        %v1612 = vpop.permute.xlu0 %1611
        %v1613 = vlaneseq
        %v1614 = vshrl.u32 %v1613, 7
        %v1615 = vsub.s32 6, %v1614
        %v1616 = vrot.slane %v1457, %v1615
        %1618 = vbcast.lane.b32.xlu0 %v1616, 256
        %v1619 = vpop.permute.xlu0 %1618
        %v1620 = vlaneseq
        %v1621 = vshrl.u32 %v1620, 7
        %v1622 = vsub.s32 7, %v1621
        %v1623 = vrot.slane %v1457, %v1622
        %1625 = vbcast.lane.b32.xlu0 %v1623, 256
        %v1626 = vpop.permute.xlu0 %1625
        %v1627 = vlaneseq
        %v1628 = vshrl.u32 %v1627, 7
        %v1629 = vsub.s32 0, %v1628
        %v1630 = vrot.slane %v1458, %v1629
        %1632 = vbcast.lane.b32.xlu0 %v1630, 256
        %v1633 = vpop.permute.xlu0 %1632
        %v1634 = vlaneseq
        %v1635 = vshrl.u32 %v1634, 7
        %v1636 = vsub.s32 1, %v1635
        %v1637 = vrot.slane %v1458, %v1636
        %1639 = vbcast.lane.b32.xlu0 %v1637, 256
        %v1640 = vpop.permute.xlu0 %1639
        %v1641 = vlaneseq
        %v1642 = vshrl.u32 %v1641, 7
        %v1643 = vsub.s32 2, %v1642
        %v1644 = vrot.slane %v1458, %v1643
        %1646 = vbcast.lane.b32.xlu0 %v1644, 256
        %v1647 = vpop.permute.xlu0 %1646
        %v1648 = vlaneseq
        %v1649 = vshrl.u32 %v1648, 7
        %v1650 = vsub.s32 3, %v1649
        %v1651 = vrot.slane %v1458, %v1650
        %1653 = vbcast.lane.b32.xlu0 %v1651, 256
        %v1654 = vpop.permute.xlu0 %1653
        %v1655 = vlaneseq
        %v1656 = vshrl.u32 %v1655, 7
        %v1657 = vsub.s32 4, %v1656
        %v1658 = vrot.slane %v1458, %v1657
        %1660 = vbcast.lane.b32.xlu0 %v1658, 256
        %v1661 = vpop.permute.xlu0 %1660
        %v1662 = vlaneseq
        %v1663 = vshrl.u32 %v1662, 7
        %v1664 = vsub.s32 5, %v1663
        %v1665 = vrot.slane %v1458, %v1664
        %1667 = vbcast.lane.b32.xlu0 %v1665, 256
        %v1668 = vpop.permute.xlu0 %1667
        %v1669 = vlaneseq
        %v1670 = vshrl.u32 %v1669, 7
        %v1671 = vsub.s32 6, %v1670
        %v1672 = vrot.slane %v1458, %v1671
        %1674 = vbcast.lane.b32.xlu0 %v1672, 256
        %v1675 = vpop.permute.xlu0 %1674
        %v1676 = vlaneseq
        %v1677 = vshrl.u32 %v1676, 7
        %v1678 = vsub.s32 7, %v1677
        %v1679 = vrot.slane %v1458, %v1678
        %1681 = vbcast.lane.b32.xlu0 %v1679, 256
        %v1682 = vpop.permute.xlu0 %1681
        %v1683 = vld [vmem:[%s1 + $0x4] sm:$0x1]
        %v1684 = vlaneseq
        %v1685 = vshrl.u32 %v1684, 7
        %v1686 = vsub.s32 0, %v1685
        %v1687 = vrot.slane %v1683, %v1686
        %v1688 = vmul.f32 %v1465, %v1687
        %v1689 = vmul.f32 %v1472, %v1687
        %v1690 = vmul.f32 %v1479, %v1687
        %v1691 = vmul.f32 %v1486, %v1687
        %v1692 = vmul.f32 %v1493, %v1687
        %v1693 = vmul.f32 %v1500, %v1687
        %v1694 = vmul.f32 %v1507, %v1687
        %v1695 = vmul.f32 %v1514, %v1687
        %v1696 = vmul.f32 %v1521, %v1687
        %v1697 = vmul.f32 %v1528, %v1687
        %v1698 = vmul.f32 %v1535, %v1687
        %v1699 = vmul.f32 %v1542, %v1687
        %v1700 = vmul.f32 %v1549, %v1687
        %v1701 = vmul.f32 %v1556, %v1687
        %v1702 = vmul.f32 %v1563, %v1687
        %v1703 = vmul.f32 %v1570, %v1687
        %v1704 = vmul.f32 %v1577, %v1687
        %v1705 = vmul.f32 %v1584, %v1687
        %v1706 = vmul.f32 %v1591, %v1687
        %v1707 = vmul.f32 %v1598, %v1687
        %v1708 = vmul.f32 %v1605, %v1687
        %v1709 = vmul.f32 %v1612, %v1687
        %v1710 = vmul.f32 %v1619, %v1687
        %v1711 = vmul.f32 %v1626, %v1687
        %v1712 = vmul.f32 %v1633, %v1687
        %v1713 = vmul.f32 %v1640, %v1687
        %v1714 = vmul.f32 %v1647, %v1687
        %v1715 = vmul.f32 %v1654, %v1687
        %v1716 = vmul.f32 %v1661, %v1687
        %v1717 = vmul.f32 %v1668, %v1687
        %v1718 = vmul.f32 %v1675, %v1687
        %v1719 = vmul.f32 %v1682, %v1687
        %v1720 = vadd.f32 %v1422, %v1688
        %v1721 = vadd.f32 %v1423, %v1689
        %v1722 = vadd.f32 %v1424, %v1690
        %v1723 = vadd.f32 %v1425, %v1691
        %v1724 = vadd.f32 %v1426, %v1692
        %v1725 = vadd.f32 %v1427, %v1693
        %v1726 = vadd.f32 %v1428, %v1694
        %v1727 = vadd.f32 %v1429, %v1695
        %v1728 = vadd.f32 %v1430, %v1696
        %v1729 = vadd.f32 %v1431, %v1697
        %v1730 = vadd.f32 %v1432, %v1698
        %v1731 = vadd.f32 %v1433, %v1699
        %v1732 = vadd.f32 %v1434, %v1700
        %v1733 = vadd.f32 %v1435, %v1701
        %v1734 = vadd.f32 %v1436, %v1702
        %v1735 = vadd.f32 %v1437, %v1703
        %v1736 = vadd.f32 %v1438, %v1704
        %v1737 = vadd.f32 %v1439, %v1705
        %v1738 = vadd.f32 %v1440, %v1706
        %v1739 = vadd.f32 %v1441, %v1707
        %v1740 = vadd.f32 %v1442, %v1708
        %v1741 = vadd.f32 %v1443, %v1709
        %v1742 = vadd.f32 %v1444, %v1710
        %v1743 = vadd.f32 %v1445, %v1711
        %v1744 = vadd.f32 %v1446, %v1712
        %v1745 = vadd.f32 %v1447, %v1713
        %v1746 = vadd.f32 %v1448, %v1714
        %v1747 = vadd.f32 %v1449, %v1715
        %v1748 = vadd.f32 %v1450, %v1716
        %v1749 = vadd.f32 %v1451, %v1717
        %v1750 = vadd.f32 %v1452, %v1718
        %v1751 = vadd.f32 %v1453, %v1719
        %s1753 = sor.u32 256, 1
        %1754 = vbcast.lane.b32.xlu0 %v1164, %s1753
        %v1755 = vpop.permute.xlu0 %1754
        %s1757 = sor.u32 256, 1
        %1758 = vbcast.lane.b32.xlu0 %v1171, %s1757
        %v1759 = vpop.permute.xlu0 %1758
        %s1761 = sor.u32 256, 1
        %1762 = vbcast.lane.b32.xlu0 %v1178, %s1761
        %v1763 = vpop.permute.xlu0 %1762
        %s1765 = sor.u32 256, 1
        %1766 = vbcast.lane.b32.xlu0 %v1185, %s1765
        %v1767 = vpop.permute.xlu0 %1766
        %s1769 = sor.u32 256, 1
        %1770 = vbcast.lane.b32.xlu0 %v1192, %s1769
        %v1771 = vpop.permute.xlu0 %1770
        %s1773 = sor.u32 256, 1
        %1774 = vbcast.lane.b32.xlu0 %v1199, %s1773
        %v1775 = vpop.permute.xlu0 %1774
        %s1777 = sor.u32 256, 1
        %1778 = vbcast.lane.b32.xlu0 %v1206, %s1777
        %v1779 = vpop.permute.xlu0 %1778
        %s1781 = sor.u32 256, 1
        %1782 = vbcast.lane.b32.xlu0 %v1213, %s1781
        %v1783 = vpop.permute.xlu0 %1782
        %s1785 = sor.u32 256, 1
        %1786 = vbcast.lane.b32.xlu0 %v1220, %s1785
        %v1787 = vpop.permute.xlu0 %1786
        %s1789 = sor.u32 256, 1
        %1790 = vbcast.lane.b32.xlu0 %v1227, %s1789
        %v1791 = vpop.permute.xlu0 %1790
        %s1793 = sor.u32 256, 1
        %1794 = vbcast.lane.b32.xlu0 %v1234, %s1793
        %v1795 = vpop.permute.xlu0 %1794
        %s1797 = sor.u32 256, 1
        %1798 = vbcast.lane.b32.xlu0 %v1241, %s1797
        %v1799 = vpop.permute.xlu0 %1798
        %s1801 = sor.u32 256, 1
        %1802 = vbcast.lane.b32.xlu0 %v1248, %s1801
        %v1803 = vpop.permute.xlu0 %1802
        %s1805 = sor.u32 256, 1
        %1806 = vbcast.lane.b32.xlu0 %v1255, %s1805
        %v1807 = vpop.permute.xlu0 %1806
        %s1809 = sor.u32 256, 1
        %1810 = vbcast.lane.b32.xlu0 %v1262, %s1809
        %v1811 = vpop.permute.xlu0 %1810
        %s1813 = sor.u32 256, 1
        %1814 = vbcast.lane.b32.xlu0 %v1269, %s1813
        %v1815 = vpop.permute.xlu0 %1814
        %s1817 = sor.u32 256, 1
        %1818 = vbcast.lane.b32.xlu0 %v1276, %s1817
        %v1819 = vpop.permute.xlu0 %1818
        %s1821 = sor.u32 256, 1
        %1822 = vbcast.lane.b32.xlu0 %v1283, %s1821
        %v1823 = vpop.permute.xlu0 %1822
        %s1825 = sor.u32 256, 1
        %1826 = vbcast.lane.b32.xlu0 %v1290, %s1825
        %v1827 = vpop.permute.xlu0 %1826
        %s1829 = sor.u32 256, 1
        %1830 = vbcast.lane.b32.xlu0 %v1297, %s1829
        %v1831 = vpop.permute.xlu0 %1830
        %s1833 = sor.u32 256, 1
        %1834 = vbcast.lane.b32.xlu0 %v1304, %s1833
        %v1835 = vpop.permute.xlu0 %1834
        %s1837 = sor.u32 256, 1
        %1838 = vbcast.lane.b32.xlu0 %v1311, %s1837
        %v1839 = vpop.permute.xlu0 %1838
        %s1841 = sor.u32 256, 1
        %1842 = vbcast.lane.b32.xlu0 %v1318, %s1841
        %v1843 = vpop.permute.xlu0 %1842
        %s1845 = sor.u32 256, 1
        %1846 = vbcast.lane.b32.xlu0 %v1325, %s1845
        %v1847 = vpop.permute.xlu0 %1846
        %s1849 = sor.u32 256, 1
        %1850 = vbcast.lane.b32.xlu0 %v1332, %s1849
        %v1851 = vpop.permute.xlu0 %1850
        %s1853 = sor.u32 256, 1
        %1854 = vbcast.lane.b32.xlu0 %v1339, %s1853
        %v1855 = vpop.permute.xlu0 %1854
        %s1857 = sor.u32 256, 1
        %1858 = vbcast.lane.b32.xlu0 %v1346, %s1857
        %v1859 = vpop.permute.xlu0 %1858
        %s1861 = sor.u32 256, 1
        %1862 = vbcast.lane.b32.xlu0 %v1353, %s1861
        %v1863 = vpop.permute.xlu0 %1862
        %s1865 = sor.u32 256, 1
        %1866 = vbcast.lane.b32.xlu0 %v1360, %s1865
        %v1867 = vpop.permute.xlu0 %1866
        %s1869 = sor.u32 256, 1
        %1870 = vbcast.lane.b32.xlu0 %v1367, %s1869
        %v1871 = vpop.permute.xlu0 %1870
        %s1873 = sor.u32 256, 1
        %1874 = vbcast.lane.b32.xlu0 %v1374, %s1873
        %v1875 = vpop.permute.xlu0 %1874
        %s1877 = sor.u32 256, 1
        %1878 = vbcast.lane.b32.xlu0 %v1381, %s1877
        %v1879 = vpop.permute.xlu0 %1878
        %v1880 = vld [vmem:[%s1 + $0x5] sm:$0x1]
        %v1881 = vlaneseq
        %v1882 = vshrl.u32 %v1881, 7
        %v1883 = vsub.s32 0, %v1882
        %v1884 = vrot.slane %v1880, %v1883
        %v1885 = vmul.f32 %v1755, %v1884
        %v1886 = vmul.f32 %v1759, %v1884
        %v1887 = vmul.f32 %v1763, %v1884
        %v1888 = vmul.f32 %v1767, %v1884
        %v1889 = vmul.f32 %v1771, %v1884
        %v1890 = vmul.f32 %v1775, %v1884
        %v1891 = vmul.f32 %v1779, %v1884
        %v1892 = vmul.f32 %v1783, %v1884
        %v1893 = vmul.f32 %v1787, %v1884
        %v1894 = vmul.f32 %v1791, %v1884
        %v1895 = vmul.f32 %v1795, %v1884
        %v1896 = vmul.f32 %v1799, %v1884
        %v1897 = vmul.f32 %v1803, %v1884
        %v1898 = vmul.f32 %v1807, %v1884
        %v1899 = vmul.f32 %v1811, %v1884
        %v1900 = vmul.f32 %v1815, %v1884
        %v1901 = vmul.f32 %v1819, %v1884
        %v1902 = vmul.f32 %v1823, %v1884
        %v1903 = vmul.f32 %v1827, %v1884
        %v1904 = vmul.f32 %v1831, %v1884
        %v1905 = vmul.f32 %v1835, %v1884
        %v1906 = vmul.f32 %v1839, %v1884
        %v1907 = vmul.f32 %v1843, %v1884
        %v1908 = vmul.f32 %v1847, %v1884
        %v1909 = vmul.f32 %v1851, %v1884
        %v1910 = vmul.f32 %v1855, %v1884
        %v1911 = vmul.f32 %v1859, %v1884
        %v1912 = vmul.f32 %v1863, %v1884
        %v1913 = vmul.f32 %v1867, %v1884
        %v1914 = vmul.f32 %v1871, %v1884
        %v1915 = vmul.f32 %v1875, %v1884
        %v1916 = vmul.f32 %v1879, %v1884
        %v1917 = vadd.f32 %v1720, %v1885
        %v1918 = vadd.f32 %v1721, %v1886
        %v1919 = vadd.f32 %v1722, %v1887
        %v1920 = vadd.f32 %v1723, %v1888
        %v1921 = vadd.f32 %v1724, %v1889
        %v1922 = vadd.f32 %v1725, %v1890
        %v1923 = vadd.f32 %v1726, %v1891
        %v1924 = vadd.f32 %v1727, %v1892
        %v1925 = vadd.f32 %v1728, %v1893
        %v1926 = vadd.f32 %v1729, %v1894
        %v1927 = vadd.f32 %v1730, %v1895
        %v1928 = vadd.f32 %v1731, %v1896
        %v1929 = vadd.f32 %v1732, %v1897
        %v1930 = vadd.f32 %v1733, %v1898
        %v1931 = vadd.f32 %v1734, %v1899
        %v1932 = vadd.f32 %v1735, %v1900
        %v1933 = vadd.f32 %v1736, %v1901
        %v1934 = vadd.f32 %v1737, %v1902
        %v1935 = vadd.f32 %v1738, %v1903
        %v1936 = vadd.f32 %v1739, %v1904
        %v1937 = vadd.f32 %v1740, %v1905
        %v1938 = vadd.f32 %v1741, %v1906
        %v1939 = vadd.f32 %v1742, %v1907
        %v1940 = vadd.f32 %v1743, %v1908
        %v1941 = vadd.f32 %v1744, %v1909
        %v1942 = vadd.f32 %v1745, %v1910
        %v1943 = vadd.f32 %v1746, %v1911
        %v1944 = vadd.f32 %v1747, %v1912
        %v1945 = vadd.f32 %v1748, %v1913
        %v1946 = vadd.f32 %v1749, %v1914
        %v1947 = vadd.f32 %v1750, %v1915
        %v1948 = vadd.f32 %v1751, %v1916
        %v1949 = vld [vmem:[%s361 + $0x1] sm:$0xff]
        %v1950 = vld [vmem:[%s361 + $0x41] sm:$0xff]
        %v1951 = vld [vmem:[%s361 + $0x81] sm:$0xff]
        %v1952 = vld [vmem:[%s361 + $0xc1] sm:$0xff]
        %v1953 = vlaneseq
        %v1954 = vshrl.u32 %v1953, 7
        %v1955 = vsub.s32 0, %v1954
        %v1956 = vrot.slane %v1949, %v1955
        %1958 = vbcast.lane.b32.xlu0 %v1956, 256
        %v1959 = vpop.permute.xlu0 %1958
        %v1960 = vlaneseq
        %v1961 = vshrl.u32 %v1960, 7
        %v1962 = vsub.s32 1, %v1961
        %v1963 = vrot.slane %v1949, %v1962
        %1965 = vbcast.lane.b32.xlu0 %v1963, 256
        %v1966 = vpop.permute.xlu0 %1965
        %v1967 = vlaneseq
        %v1968 = vshrl.u32 %v1967, 7
        %v1969 = vsub.s32 2, %v1968
        %v1970 = vrot.slane %v1949, %v1969
        %1972 = vbcast.lane.b32.xlu0 %v1970, 256
        %v1973 = vpop.permute.xlu0 %1972
        %v1974 = vlaneseq
        %v1975 = vshrl.u32 %v1974, 7
        %v1976 = vsub.s32 3, %v1975
        %v1977 = vrot.slane %v1949, %v1976
        %1979 = vbcast.lane.b32.xlu0 %v1977, 256
        %v1980 = vpop.permute.xlu0 %1979
        %v1981 = vlaneseq
        %v1982 = vshrl.u32 %v1981, 7
        %v1983 = vsub.s32 4, %v1982
        %v1984 = vrot.slane %v1949, %v1983
        %1986 = vbcast.lane.b32.xlu0 %v1984, 256
        %v1987 = vpop.permute.xlu0 %1986
        %v1988 = vlaneseq
        %v1989 = vshrl.u32 %v1988, 7
        %v1990 = vsub.s32 5, %v1989
        %v1991 = vrot.slane %v1949, %v1990
        %1993 = vbcast.lane.b32.xlu0 %v1991, 256
        %v1994 = vpop.permute.xlu0 %1993
        %v1995 = vlaneseq
        %v1996 = vshrl.u32 %v1995, 7
        %v1997 = vsub.s32 6, %v1996
        %v1998 = vrot.slane %v1949, %v1997
        %2000 = vbcast.lane.b32.xlu0 %v1998, 256
        %v2001 = vpop.permute.xlu0 %2000
        %v2002 = vlaneseq
        %v2003 = vshrl.u32 %v2002, 7
        %v2004 = vsub.s32 7, %v2003
        %v2005 = vrot.slane %v1949, %v2004
        %2007 = vbcast.lane.b32.xlu0 %v2005, 256
        %v2008 = vpop.permute.xlu0 %2007
        %v2009 = vlaneseq
        %v2010 = vshrl.u32 %v2009, 7
        %v2011 = vsub.s32 0, %v2010
        %v2012 = vrot.slane %v1950, %v2011
        %2014 = vbcast.lane.b32.xlu0 %v2012, 256
        %v2015 = vpop.permute.xlu0 %2014
        %v2016 = vlaneseq
        %v2017 = vshrl.u32 %v2016, 7
        %v2018 = vsub.s32 1, %v2017
        %v2019 = vrot.slane %v1950, %v2018
        %2021 = vbcast.lane.b32.xlu0 %v2019, 256
        %v2022 = vpop.permute.xlu0 %2021
        %v2023 = vlaneseq
        %v2024 = vshrl.u32 %v2023, 7
        %v2025 = vsub.s32 2, %v2024
        %v2026 = vrot.slane %v1950, %v2025
        %2028 = vbcast.lane.b32.xlu0 %v2026, 256
        %v2029 = vpop.permute.xlu0 %2028
        %v2030 = vlaneseq
        %v2031 = vshrl.u32 %v2030, 7
        %v2032 = vsub.s32 3, %v2031
        %v2033 = vrot.slane %v1950, %v2032
        %2035 = vbcast.lane.b32.xlu0 %v2033, 256
        %v2036 = vpop.permute.xlu0 %2035
        %v2037 = vlaneseq
        %v2038 = vshrl.u32 %v2037, 7
        %v2039 = vsub.s32 4, %v2038
        %v2040 = vrot.slane %v1950, %v2039
        %2042 = vbcast.lane.b32.xlu0 %v2040, 256
        %v2043 = vpop.permute.xlu0 %2042
        %v2044 = vlaneseq
        %v2045 = vshrl.u32 %v2044, 7
        %v2046 = vsub.s32 5, %v2045
        %v2047 = vrot.slane %v1950, %v2046
        %2049 = vbcast.lane.b32.xlu0 %v2047, 256
        %v2050 = vpop.permute.xlu0 %2049
        %v2051 = vlaneseq
        %v2052 = vshrl.u32 %v2051, 7
        %v2053 = vsub.s32 6, %v2052
        %v2054 = vrot.slane %v1950, %v2053
        %2056 = vbcast.lane.b32.xlu0 %v2054, 256
        %v2057 = vpop.permute.xlu0 %2056
        %v2058 = vlaneseq
        %v2059 = vshrl.u32 %v2058, 7
        %v2060 = vsub.s32 7, %v2059
        %v2061 = vrot.slane %v1950, %v2060
        %2063 = vbcast.lane.b32.xlu0 %v2061, 256
        %v2064 = vpop.permute.xlu0 %2063
        %v2065 = vlaneseq
        %v2066 = vshrl.u32 %v2065, 7
        %v2067 = vsub.s32 0, %v2066
        %v2068 = vrot.slane %v1951, %v2067
        %2070 = vbcast.lane.b32.xlu0 %v2068, 256
        %v2071 = vpop.permute.xlu0 %2070
        %v2072 = vlaneseq
        %v2073 = vshrl.u32 %v2072, 7
        %v2074 = vsub.s32 1, %v2073
        %v2075 = vrot.slane %v1951, %v2074
        %2077 = vbcast.lane.b32.xlu0 %v2075, 256
        %v2078 = vpop.permute.xlu0 %2077
        %v2079 = vlaneseq
        %v2080 = vshrl.u32 %v2079, 7
        %v2081 = vsub.s32 2, %v2080
        %v2082 = vrot.slane %v1951, %v2081
        %2084 = vbcast.lane.b32.xlu0 %v2082, 256
        %v2085 = vpop.permute.xlu0 %2084
        %v2086 = vlaneseq
        %v2087 = vshrl.u32 %v2086, 7
        %v2088 = vsub.s32 3, %v2087
        %v2089 = vrot.slane %v1951, %v2088
        %2091 = vbcast.lane.b32.xlu0 %v2089, 256
        %v2092 = vpop.permute.xlu0 %2091
        %v2093 = vlaneseq
        %v2094 = vshrl.u32 %v2093, 7
        %v2095 = vsub.s32 4, %v2094
        %v2096 = vrot.slane %v1951, %v2095
        %2098 = vbcast.lane.b32.xlu0 %v2096, 256
        %v2099 = vpop.permute.xlu0 %2098
        %v2100 = vlaneseq
        %v2101 = vshrl.u32 %v2100, 7
        %v2102 = vsub.s32 5, %v2101
        %v2103 = vrot.slane %v1951, %v2102
        %2105 = vbcast.lane.b32.xlu0 %v2103, 256
        %v2106 = vpop.permute.xlu0 %2105
        %v2107 = vlaneseq
        %v2108 = vshrl.u32 %v2107, 7
        %v2109 = vsub.s32 6, %v2108
        %v2110 = vrot.slane %v1951, %v2109
        %2112 = vbcast.lane.b32.xlu0 %v2110, 256
        %v2113 = vpop.permute.xlu0 %2112
        %v2114 = vlaneseq
        %v2115 = vshrl.u32 %v2114, 7
        %v2116 = vsub.s32 7, %v2115
        %v2117 = vrot.slane %v1951, %v2116
        %2119 = vbcast.lane.b32.xlu0 %v2117, 256
        %v2120 = vpop.permute.xlu0 %2119
        %v2121 = vlaneseq
        %v2122 = vshrl.u32 %v2121, 7
        %v2123 = vsub.s32 0, %v2122
        %v2124 = vrot.slane %v1952, %v2123
        %2126 = vbcast.lane.b32.xlu0 %v2124, 256
        %v2127 = vpop.permute.xlu0 %2126
        %v2128 = vlaneseq
        %v2129 = vshrl.u32 %v2128, 7
        %v2130 = vsub.s32 1, %v2129
        %v2131 = vrot.slane %v1952, %v2130
        %2133 = vbcast.lane.b32.xlu0 %v2131, 256
        %v2134 = vpop.permute.xlu0 %2133
        %v2135 = vlaneseq
        %v2136 = vshrl.u32 %v2135, 7
        %v2137 = vsub.s32 2, %v2136
        %v2138 = vrot.slane %v1952, %v2137
        %2140 = vbcast.lane.b32.xlu0 %v2138, 256
        %v2141 = vpop.permute.xlu0 %2140
        %v2142 = vlaneseq
        %v2143 = vshrl.u32 %v2142, 7
        %v2144 = vsub.s32 3, %v2143
        %v2145 = vrot.slane %v1952, %v2144
        %2147 = vbcast.lane.b32.xlu0 %v2145, 256
        %v2148 = vpop.permute.xlu0 %2147
        %v2149 = vlaneseq
        %v2150 = vshrl.u32 %v2149, 7
        %v2151 = vsub.s32 4, %v2150
        %v2152 = vrot.slane %v1952, %v2151
        %2154 = vbcast.lane.b32.xlu0 %v2152, 256
        %v2155 = vpop.permute.xlu0 %2154
        %v2156 = vlaneseq
        %v2157 = vshrl.u32 %v2156, 7
        %v2158 = vsub.s32 5, %v2157
        %v2159 = vrot.slane %v1952, %v2158
        %2161 = vbcast.lane.b32.xlu0 %v2159, 256
        %v2162 = vpop.permute.xlu0 %2161
        %v2163 = vlaneseq
        %v2164 = vshrl.u32 %v2163, 7
        %v2165 = vsub.s32 6, %v2164
        %v2166 = vrot.slane %v1952, %v2165
        %2168 = vbcast.lane.b32.xlu0 %v2166, 256
        %v2169 = vpop.permute.xlu0 %2168
        %v2170 = vlaneseq
        %v2171 = vshrl.u32 %v2170, 7
        %v2172 = vsub.s32 7, %v2171
        %v2173 = vrot.slane %v1952, %v2172
        %2175 = vbcast.lane.b32.xlu0 %v2173, 256
        %v2176 = vpop.permute.xlu0 %2175
        %v2177 = vld [vmem:[%s1 + $0x6] sm:$0x1]
        %v2178 = vlaneseq
        %v2179 = vshrl.u32 %v2178, 7
        %v2180 = vsub.s32 0, %v2179
        %v2181 = vrot.slane %v2177, %v2180
        %v2182 = vmul.f32 %v1959, %v2181
        %v2183 = vmul.f32 %v1966, %v2181
        %v2184 = vmul.f32 %v1973, %v2181
        %v2185 = vmul.f32 %v1980, %v2181
        %v2186 = vmul.f32 %v1987, %v2181
        %v2187 = vmul.f32 %v1994, %v2181
        %v2188 = vmul.f32 %v2001, %v2181
        %v2189 = vmul.f32 %v2008, %v2181
        %v2190 = vmul.f32 %v2015, %v2181
        %v2191 = vmul.f32 %v2022, %v2181
        %v2192 = vmul.f32 %v2029, %v2181
        %v2193 = vmul.f32 %v2036, %v2181
        %v2194 = vmul.f32 %v2043, %v2181
        %v2195 = vmul.f32 %v2050, %v2181
        %v2196 = vmul.f32 %v2057, %v2181
        %v2197 = vmul.f32 %v2064, %v2181
        %v2198 = vmul.f32 %v2071, %v2181
        %v2199 = vmul.f32 %v2078, %v2181
        %v2200 = vmul.f32 %v2085, %v2181
        %v2201 = vmul.f32 %v2092, %v2181
        %v2202 = vmul.f32 %v2099, %v2181
        %v2203 = vmul.f32 %v2106, %v2181
        %v2204 = vmul.f32 %v2113, %v2181
        %v2205 = vmul.f32 %v2120, %v2181
        %v2206 = vmul.f32 %v2127, %v2181
        %v2207 = vmul.f32 %v2134, %v2181
        %v2208 = vmul.f32 %v2141, %v2181
        %v2209 = vmul.f32 %v2148, %v2181
        %v2210 = vmul.f32 %v2155, %v2181
        %v2211 = vmul.f32 %v2162, %v2181
        %v2212 = vmul.f32 %v2169, %v2181
        %v2213 = vmul.f32 %v2176, %v2181
        %v2214 = vadd.f32 %v1917, %v2182
        %v2215 = vadd.f32 %v1918, %v2183
        %v2216 = vadd.f32 %v1919, %v2184
        %v2217 = vadd.f32 %v1920, %v2185
        %v2218 = vadd.f32 %v1921, %v2186
        %v2219 = vadd.f32 %v1922, %v2187
        %v2220 = vadd.f32 %v1923, %v2188
        %v2221 = vadd.f32 %v1924, %v2189
        %v2222 = vadd.f32 %v1925, %v2190
        %v2223 = vadd.f32 %v1926, %v2191
        %v2224 = vadd.f32 %v1927, %v2192
        %v2225 = vadd.f32 %v1928, %v2193
        %v2226 = vadd.f32 %v1929, %v2194
        %v2227 = vadd.f32 %v1930, %v2195
        %v2228 = vadd.f32 %v1931, %v2196
        %v2229 = vadd.f32 %v1932, %v2197
        %v2230 = vadd.f32 %v1933, %v2198
        %v2231 = vadd.f32 %v1934, %v2199
        %v2232 = vadd.f32 %v1935, %v2200
        %v2233 = vadd.f32 %v1936, %v2201
        %v2234 = vadd.f32 %v1937, %v2202
        %v2235 = vadd.f32 %v1938, %v2203
        %v2236 = vadd.f32 %v1939, %v2204
        %v2237 = vadd.f32 %v1940, %v2205
        %v2238 = vadd.f32 %v1941, %v2206
        %v2239 = vadd.f32 %v1942, %v2207
        %v2240 = vadd.f32 %v1943, %v2208
        %v2241 = vadd.f32 %v1944, %v2209
        %v2242 = vadd.f32 %v1945, %v2210
        %v2243 = vadd.f32 %v1946, %v2211
        %v2244 = vadd.f32 %v1947, %v2212
        %v2245 = vadd.f32 %v1948, %v2213
        %v2246 = vld [vmem:[%s661 + $0x1] sm:$0xff]
        %v2247 = vld [vmem:[%s661 + $0x41] sm:$0xff]
        %v2248 = vld [vmem:[%s661 + $0x81] sm:$0xff]
        %v2249 = vld [vmem:[%s661 + $0xc1] sm:$0xff]
        %v2250 = vlaneseq
        %v2251 = vshrl.u32 %v2250, 7
        %v2252 = vsub.s32 0, %v2251
        %v2253 = vrot.slane %v2246, %v2252
        %2255 = vbcast.lane.b32.xlu0 %v2253, 256
        %v2256 = vpop.permute.xlu0 %2255
        %v2257 = vlaneseq
        %v2258 = vshrl.u32 %v2257, 7
        %v2259 = vsub.s32 1, %v2258
        %v2260 = vrot.slane %v2246, %v2259
        %2262 = vbcast.lane.b32.xlu0 %v2260, 256
        %v2263 = vpop.permute.xlu0 %2262
        %v2264 = vlaneseq
        %v2265 = vshrl.u32 %v2264, 7
        %v2266 = vsub.s32 2, %v2265
        %v2267 = vrot.slane %v2246, %v2266
        %2269 = vbcast.lane.b32.xlu0 %v2267, 256
        %v2270 = vpop.permute.xlu0 %2269
        %v2271 = vlaneseq
        %v2272 = vshrl.u32 %v2271, 7
        %v2273 = vsub.s32 3, %v2272
        %v2274 = vrot.slane %v2246, %v2273
        %2276 = vbcast.lane.b32.xlu0 %v2274, 256
        %v2277 = vpop.permute.xlu0 %2276
        %v2278 = vlaneseq
        %v2279 = vshrl.u32 %v2278, 7
        %v2280 = vsub.s32 4, %v2279
        %v2281 = vrot.slane %v2246, %v2280
        %2283 = vbcast.lane.b32.xlu0 %v2281, 256
        %v2284 = vpop.permute.xlu0 %2283
        %v2285 = vlaneseq
        %v2286 = vshrl.u32 %v2285, 7
        %v2287 = vsub.s32 5, %v2286
        %v2288 = vrot.slane %v2246, %v2287
        %2290 = vbcast.lane.b32.xlu0 %v2288, 256
        %v2291 = vpop.permute.xlu0 %2290
        %v2292 = vlaneseq
        %v2293 = vshrl.u32 %v2292, 7
        %v2294 = vsub.s32 6, %v2293
        %v2295 = vrot.slane %v2246, %v2294
        %2297 = vbcast.lane.b32.xlu0 %v2295, 256
        %v2298 = vpop.permute.xlu0 %2297
        %v2299 = vlaneseq
        %v2300 = vshrl.u32 %v2299, 7
        %v2301 = vsub.s32 7, %v2300
        %v2302 = vrot.slane %v2246, %v2301
        %2304 = vbcast.lane.b32.xlu0 %v2302, 256
        %v2305 = vpop.permute.xlu0 %2304
        %v2306 = vlaneseq
        %v2307 = vshrl.u32 %v2306, 7
        %v2308 = vsub.s32 0, %v2307
        %v2309 = vrot.slane %v2247, %v2308
        %2311 = vbcast.lane.b32.xlu0 %v2309, 256
        %v2312 = vpop.permute.xlu0 %2311
        %v2313 = vlaneseq
        %v2314 = vshrl.u32 %v2313, 7
        %v2315 = vsub.s32 1, %v2314
        %v2316 = vrot.slane %v2247, %v2315
        %2318 = vbcast.lane.b32.xlu0 %v2316, 256
        %v2319 = vpop.permute.xlu0 %2318
        %v2320 = vlaneseq
        %v2321 = vshrl.u32 %v2320, 7
        %v2322 = vsub.s32 2, %v2321
        %v2323 = vrot.slane %v2247, %v2322
        %2325 = vbcast.lane.b32.xlu0 %v2323, 256
        %v2326 = vpop.permute.xlu0 %2325
        %v2327 = vlaneseq
        %v2328 = vshrl.u32 %v2327, 7
        %v2329 = vsub.s32 3, %v2328
        %v2330 = vrot.slane %v2247, %v2329
        %2332 = vbcast.lane.b32.xlu0 %v2330, 256
        %v2333 = vpop.permute.xlu0 %2332
        %v2334 = vlaneseq
        %v2335 = vshrl.u32 %v2334, 7
        %v2336 = vsub.s32 4, %v2335
        %v2337 = vrot.slane %v2247, %v2336
        %2339 = vbcast.lane.b32.xlu0 %v2337, 256
        %v2340 = vpop.permute.xlu0 %2339
        %v2341 = vlaneseq
        %v2342 = vshrl.u32 %v2341, 7
        %v2343 = vsub.s32 5, %v2342
        %v2344 = vrot.slane %v2247, %v2343
        %2346 = vbcast.lane.b32.xlu0 %v2344, 256
        %v2347 = vpop.permute.xlu0 %2346
        %v2348 = vlaneseq
        %v2349 = vshrl.u32 %v2348, 7
        %v2350 = vsub.s32 6, %v2349
        %v2351 = vrot.slane %v2247, %v2350
        %2353 = vbcast.lane.b32.xlu0 %v2351, 256
        %v2354 = vpop.permute.xlu0 %2353
        %v2355 = vlaneseq
        %v2356 = vshrl.u32 %v2355, 7
        %v2357 = vsub.s32 7, %v2356
        %v2358 = vrot.slane %v2247, %v2357
        %2360 = vbcast.lane.b32.xlu0 %v2358, 256
        %v2361 = vpop.permute.xlu0 %2360
        %v2362 = vlaneseq
        %v2363 = vshrl.u32 %v2362, 7
        %v2364 = vsub.s32 0, %v2363
        %v2365 = vrot.slane %v2248, %v2364
        %2367 = vbcast.lane.b32.xlu0 %v2365, 256
        %v2368 = vpop.permute.xlu0 %2367
        %v2369 = vlaneseq
        %v2370 = vshrl.u32 %v2369, 7
        %v2371 = vsub.s32 1, %v2370
        %v2372 = vrot.slane %v2248, %v2371
        %2374 = vbcast.lane.b32.xlu0 %v2372, 256
        %v2375 = vpop.permute.xlu0 %2374
        %v2376 = vlaneseq
        %v2377 = vshrl.u32 %v2376, 7
        %v2378 = vsub.s32 2, %v2377
        %v2379 = vrot.slane %v2248, %v2378
        %2381 = vbcast.lane.b32.xlu0 %v2379, 256
        %v2382 = vpop.permute.xlu0 %2381
        %v2383 = vlaneseq
        %v2384 = vshrl.u32 %v2383, 7
        %v2385 = vsub.s32 3, %v2384
        %v2386 = vrot.slane %v2248, %v2385
        %2388 = vbcast.lane.b32.xlu0 %v2386, 256
        %v2389 = vpop.permute.xlu0 %2388
        %v2390 = vlaneseq
        %v2391 = vshrl.u32 %v2390, 7
        %v2392 = vsub.s32 4, %v2391
        %v2393 = vrot.slane %v2248, %v2392
        %2395 = vbcast.lane.b32.xlu0 %v2393, 256
        %v2396 = vpop.permute.xlu0 %2395
        %v2397 = vlaneseq
        %v2398 = vshrl.u32 %v2397, 7
        %v2399 = vsub.s32 5, %v2398
        %v2400 = vrot.slane %v2248, %v2399
        %2402 = vbcast.lane.b32.xlu0 %v2400, 256
        %v2403 = vpop.permute.xlu0 %2402
        %v2404 = vlaneseq
        %v2405 = vshrl.u32 %v2404, 7
        %v2406 = vsub.s32 6, %v2405
        %v2407 = vrot.slane %v2248, %v2406
        %2409 = vbcast.lane.b32.xlu0 %v2407, 256
        %v2410 = vpop.permute.xlu0 %2409
        %v2411 = vlaneseq
        %v2412 = vshrl.u32 %v2411, 7
        %v2413 = vsub.s32 7, %v2412
        %v2414 = vrot.slane %v2248, %v2413
        %2416 = vbcast.lane.b32.xlu0 %v2414, 256
        %v2417 = vpop.permute.xlu0 %2416
        %v2418 = vlaneseq
        %v2419 = vshrl.u32 %v2418, 7
        %v2420 = vsub.s32 0, %v2419
        %v2421 = vrot.slane %v2249, %v2420
        %2423 = vbcast.lane.b32.xlu0 %v2421, 256
        %v2424 = vpop.permute.xlu0 %2423
        %v2425 = vlaneseq
        %v2426 = vshrl.u32 %v2425, 7
        %v2427 = vsub.s32 1, %v2426
        %v2428 = vrot.slane %v2249, %v2427
        %2430 = vbcast.lane.b32.xlu0 %v2428, 256
        %v2431 = vpop.permute.xlu0 %2430
        %v2432 = vlaneseq
        %v2433 = vshrl.u32 %v2432, 7
        %v2434 = vsub.s32 2, %v2433
        %v2435 = vrot.slane %v2249, %v2434
        %2437 = vbcast.lane.b32.xlu0 %v2435, 256
        %v2438 = vpop.permute.xlu0 %2437
        %v2439 = vlaneseq
        %v2440 = vshrl.u32 %v2439, 7
        %v2441 = vsub.s32 3, %v2440
        %v2442 = vrot.slane %v2249, %v2441
        %2444 = vbcast.lane.b32.xlu0 %v2442, 256
        %v2445 = vpop.permute.xlu0 %2444
        %v2446 = vlaneseq
        %v2447 = vshrl.u32 %v2446, 7
        %v2448 = vsub.s32 4, %v2447
        %v2449 = vrot.slane %v2249, %v2448
        %2451 = vbcast.lane.b32.xlu0 %v2449, 256
        %v2452 = vpop.permute.xlu0 %2451
        %v2453 = vlaneseq
        %v2454 = vshrl.u32 %v2453, 7
        %v2455 = vsub.s32 5, %v2454
        %v2456 = vrot.slane %v2249, %v2455
        %2458 = vbcast.lane.b32.xlu0 %v2456, 256
        %v2459 = vpop.permute.xlu0 %2458
        %v2460 = vlaneseq
        %v2461 = vshrl.u32 %v2460, 7
        %v2462 = vsub.s32 6, %v2461
        %v2463 = vrot.slane %v2249, %v2462
        %2465 = vbcast.lane.b32.xlu0 %v2463, 256
        %v2466 = vpop.permute.xlu0 %2465
        %v2467 = vlaneseq
        %v2468 = vshrl.u32 %v2467, 7
        %v2469 = vsub.s32 7, %v2468
        %v2470 = vrot.slane %v2249, %v2469
        %2472 = vbcast.lane.b32.xlu0 %v2470, 256
        %v2473 = vpop.permute.xlu0 %2472
        %v2474 = vld [vmem:[%s1 + $0x7] sm:$0x1]
        %v2475 = vlaneseq
        %v2476 = vshrl.u32 %v2475, 7
        %v2477 = vsub.s32 0, %v2476
        %v2478 = vrot.slane %v2474, %v2477
        %v2479 = vmul.f32 %v2256, %v2478
        %v2480 = vmul.f32 %v2263, %v2478
        %v2481 = vmul.f32 %v2270, %v2478
        %v2482 = vmul.f32 %v2277, %v2478
        %v2483 = vmul.f32 %v2284, %v2478
        %v2484 = vmul.f32 %v2291, %v2478
        %v2485 = vmul.f32 %v2298, %v2478
        %v2486 = vmul.f32 %v2305, %v2478
        %v2487 = vmul.f32 %v2312, %v2478
        %v2488 = vmul.f32 %v2319, %v2478
        %v2489 = vmul.f32 %v2326, %v2478
        %v2490 = vmul.f32 %v2333, %v2478
        %v2491 = vmul.f32 %v2340, %v2478
        %v2492 = vmul.f32 %v2347, %v2478
        %v2493 = vmul.f32 %v2354, %v2478
        %v2494 = vmul.f32 %v2361, %v2478
        %v2495 = vmul.f32 %v2368, %v2478
        %v2496 = vmul.f32 %v2375, %v2478
        %v2497 = vmul.f32 %v2382, %v2478
        %v2498 = vmul.f32 %v2389, %v2478
        %v2499 = vmul.f32 %v2396, %v2478
        %v2500 = vmul.f32 %v2403, %v2478
        %v2501 = vmul.f32 %v2410, %v2478
        %v2502 = vmul.f32 %v2417, %v2478
        %v2503 = vmul.f32 %v2424, %v2478
        %v2504 = vmul.f32 %v2431, %v2478
        %v2505 = vmul.f32 %v2438, %v2478
        %v2506 = vmul.f32 %v2445, %v2478
        %v2507 = vmul.f32 %v2452, %v2478
        %v2508 = vmul.f32 %v2459, %v2478
        %v2509 = vmul.f32 %v2466, %v2478
        %v2510 = vmul.f32 %v2473, %v2478
        %v2511 = vadd.f32 %v2214, %v2479
        %v2512 = vadd.f32 %v2215, %v2480
        %v2513 = vadd.f32 %v2216, %v2481
        %v2514 = vadd.f32 %v2217, %v2482
        %v2515 = vadd.f32 %v2218, %v2483
        %v2516 = vadd.f32 %v2219, %v2484
        %v2517 = vadd.f32 %v2220, %v2485
        %v2518 = vadd.f32 %v2221, %v2486
        %v2519 = vadd.f32 %v2222, %v2487
        %v2520 = vadd.f32 %v2223, %v2488
        %v2521 = vadd.f32 %v2224, %v2489
        %v2522 = vadd.f32 %v2225, %v2490
        %v2523 = vadd.f32 %v2226, %v2491
        %v2524 = vadd.f32 %v2227, %v2492
        %v2525 = vadd.f32 %v2228, %v2493
        %v2526 = vadd.f32 %v2229, %v2494
        %v2527 = vadd.f32 %v2230, %v2495
        %v2528 = vadd.f32 %v2231, %v2496
        %v2529 = vadd.f32 %v2232, %v2497
        %v2530 = vadd.f32 %v2233, %v2498
        %v2531 = vadd.f32 %v2234, %v2499
        %v2532 = vadd.f32 %v2235, %v2500
        %v2533 = vadd.f32 %v2236, %v2501
        %v2534 = vadd.f32 %v2237, %v2502
        %v2535 = vadd.f32 %v2238, %v2503
        %v2536 = vadd.f32 %v2239, %v2504
        %v2537 = vadd.f32 %v2240, %v2505
        %v2538 = vadd.f32 %v2241, %v2506
        %v2539 = vadd.f32 %v2242, %v2507
        %v2540 = vadd.f32 %v2243, %v2508
        %v2541 = vadd.f32 %v2244, %v2509
        %v2542 = vadd.f32 %v2245, %v2510
        %s2544 = sor.u32 256, 1
        %2545 = vbcast.lane.b32.xlu0 %v1956, %s2544
        %v2546 = vpop.permute.xlu0 %2545
        %s2548 = sor.u32 256, 1
        %2549 = vbcast.lane.b32.xlu0 %v1963, %s2548
        %v2550 = vpop.permute.xlu0 %2549
        %s2552 = sor.u32 256, 1
        %2553 = vbcast.lane.b32.xlu0 %v1970, %s2552
        %v2554 = vpop.permute.xlu0 %2553
        %s2556 = sor.u32 256, 1
        %2557 = vbcast.lane.b32.xlu0 %v1977, %s2556
        %v2558 = vpop.permute.xlu0 %2557
        %s2560 = sor.u32 256, 1
        %2561 = vbcast.lane.b32.xlu0 %v1984, %s2560
        %v2562 = vpop.permute.xlu0 %2561
        %s2564 = sor.u32 256, 1
        %2565 = vbcast.lane.b32.xlu0 %v1991, %s2564
        %v2566 = vpop.permute.xlu0 %2565
        %s2568 = sor.u32 256, 1
        %2569 = vbcast.lane.b32.xlu0 %v1998, %s2568
        %v2570 = vpop.permute.xlu0 %2569
        %s2572 = sor.u32 256, 1
        %2573 = vbcast.lane.b32.xlu0 %v2005, %s2572
        %v2574 = vpop.permute.xlu0 %2573
        %s2576 = sor.u32 256, 1
        %2577 = vbcast.lane.b32.xlu0 %v2012, %s2576
        %v2578 = vpop.permute.xlu0 %2577
        %s2580 = sor.u32 256, 1
        %2581 = vbcast.lane.b32.xlu0 %v2019, %s2580
        %v2582 = vpop.permute.xlu0 %2581
        %s2584 = sor.u32 256, 1
        %2585 = vbcast.lane.b32.xlu0 %v2026, %s2584
        %v2586 = vpop.permute.xlu0 %2585
        %s2588 = sor.u32 256, 1
        %2589 = vbcast.lane.b32.xlu0 %v2033, %s2588
        %v2590 = vpop.permute.xlu0 %2589
        %s2592 = sor.u32 256, 1
        %2593 = vbcast.lane.b32.xlu0 %v2040, %s2592
        %v2594 = vpop.permute.xlu0 %2593
        %s2596 = sor.u32 256, 1
        %2597 = vbcast.lane.b32.xlu0 %v2047, %s2596
        %v2598 = vpop.permute.xlu0 %2597
        %s2600 = sor.u32 256, 1
        %2601 = vbcast.lane.b32.xlu0 %v2054, %s2600
        %v2602 = vpop.permute.xlu0 %2601
        %s2604 = sor.u32 256, 1
        %2605 = vbcast.lane.b32.xlu0 %v2061, %s2604
        %v2606 = vpop.permute.xlu0 %2605
        %s2608 = sor.u32 256, 1
        %2609 = vbcast.lane.b32.xlu0 %v2068, %s2608
        %v2610 = vpop.permute.xlu0 %2609
        %s2612 = sor.u32 256, 1
        %2613 = vbcast.lane.b32.xlu0 %v2075, %s2612
        %v2614 = vpop.permute.xlu0 %2613
        %s2616 = sor.u32 256, 1
        %2617 = vbcast.lane.b32.xlu0 %v2082, %s2616
        %v2618 = vpop.permute.xlu0 %2617
        %s2620 = sor.u32 256, 1
        %2621 = vbcast.lane.b32.xlu0 %v2089, %s2620
        %v2622 = vpop.permute.xlu0 %2621
        %s2624 = sor.u32 256, 1
        %2625 = vbcast.lane.b32.xlu0 %v2096, %s2624
        %v2626 = vpop.permute.xlu0 %2625
        %s2628 = sor.u32 256, 1
        %2629 = vbcast.lane.b32.xlu0 %v2103, %s2628
        %v2630 = vpop.permute.xlu0 %2629
        %s2632 = sor.u32 256, 1
        %2633 = vbcast.lane.b32.xlu0 %v2110, %s2632
        %v2634 = vpop.permute.xlu0 %2633
        %s2636 = sor.u32 256, 1
        %2637 = vbcast.lane.b32.xlu0 %v2117, %s2636
        %v2638 = vpop.permute.xlu0 %2637
        %s2640 = sor.u32 256, 1
        %2641 = vbcast.lane.b32.xlu0 %v2124, %s2640
        %v2642 = vpop.permute.xlu0 %2641
        %s2644 = sor.u32 256, 1
        %2645 = vbcast.lane.b32.xlu0 %v2131, %s2644
        %v2646 = vpop.permute.xlu0 %2645
        %s2648 = sor.u32 256, 1
        %2649 = vbcast.lane.b32.xlu0 %v2138, %s2648
        %v2650 = vpop.permute.xlu0 %2649
        %s2652 = sor.u32 256, 1
        %2653 = vbcast.lane.b32.xlu0 %v2145, %s2652
        %v2654 = vpop.permute.xlu0 %2653
        %s2656 = sor.u32 256, 1
        %2657 = vbcast.lane.b32.xlu0 %v2152, %s2656
        %v2658 = vpop.permute.xlu0 %2657
        %s2660 = sor.u32 256, 1
        %2661 = vbcast.lane.b32.xlu0 %v2159, %s2660
        %v2662 = vpop.permute.xlu0 %2661
        %s2664 = sor.u32 256, 1
        %2665 = vbcast.lane.b32.xlu0 %v2166, %s2664
        %v2666 = vpop.permute.xlu0 %2665
        %s2668 = sor.u32 256, 1
        %2669 = vbcast.lane.b32.xlu0 %v2173, %s2668
        %v2670 = vpop.permute.xlu0 %2669
        %v2671 = vld [vmem:[%s1 + $0x8] sm:$0x1]
        %v2672 = vlaneseq
        %v2673 = vshrl.u32 %v2672, 7
        %v2674 = vsub.s32 0, %v2673
        %v2675 = vrot.slane %v2671, %v2674
        %v2676 = vmul.f32 %v2546, %v2675
        %v2677 = vmul.f32 %v2550, %v2675
        %v2678 = vmul.f32 %v2554, %v2675
        %v2679 = vmul.f32 %v2558, %v2675
        %v2680 = vmul.f32 %v2562, %v2675
        %v2681 = vmul.f32 %v2566, %v2675
        %v2682 = vmul.f32 %v2570, %v2675
        %v2683 = vmul.f32 %v2574, %v2675
        %v2684 = vmul.f32 %v2578, %v2675
        %v2685 = vmul.f32 %v2582, %v2675
        %v2686 = vmul.f32 %v2586, %v2675
        %v2687 = vmul.f32 %v2590, %v2675
        %v2688 = vmul.f32 %v2594, %v2675
        %v2689 = vmul.f32 %v2598, %v2675
        %v2690 = vmul.f32 %v2602, %v2675
        %v2691 = vmul.f32 %v2606, %v2675
        %v2692 = vmul.f32 %v2610, %v2675
        %v2693 = vmul.f32 %v2614, %v2675
        %v2694 = vmul.f32 %v2618, %v2675
        %v2695 = vmul.f32 %v2622, %v2675
        %v2696 = vmul.f32 %v2626, %v2675
        %v2697 = vmul.f32 %v2630, %v2675
        %v2698 = vmul.f32 %v2634, %v2675
        %v2699 = vmul.f32 %v2638, %v2675
        %v2700 = vmul.f32 %v2642, %v2675
        %v2701 = vmul.f32 %v2646, %v2675
        %v2702 = vmul.f32 %v2650, %v2675
        %v2703 = vmul.f32 %v2654, %v2675
        %v2704 = vmul.f32 %v2658, %v2675
        %v2705 = vmul.f32 %v2662, %v2675
        %v2706 = vmul.f32 %v2666, %v2675
        %v2707 = vmul.f32 %v2670, %v2675
        %v2708 = vadd.f32 %v2511, %v2676
        %v2709 = vadd.f32 %v2512, %v2677
        %v2710 = vadd.f32 %v2513, %v2678
        %v2711 = vadd.f32 %v2514, %v2679
        %v2712 = vadd.f32 %v2515, %v2680
        %v2713 = vadd.f32 %v2516, %v2681
        %v2714 = vadd.f32 %v2517, %v2682
        %v2715 = vadd.f32 %v2518, %v2683
        %v2716 = vadd.f32 %v2519, %v2684
        %v2717 = vadd.f32 %v2520, %v2685
        %v2718 = vadd.f32 %v2521, %v2686
        %v2719 = vadd.f32 %v2522, %v2687
        %v2720 = vadd.f32 %v2523, %v2688
        %v2721 = vadd.f32 %v2524, %v2689
        %v2722 = vadd.f32 %v2525, %v2690
        %v2723 = vadd.f32 %v2526, %v2691
        %v2724 = vadd.f32 %v2527, %v2692
        %v2725 = vadd.f32 %v2528, %v2693
        %v2726 = vadd.f32 %v2529, %v2694
        %v2727 = vadd.f32 %v2530, %v2695
        %v2728 = vadd.f32 %v2531, %v2696
        %v2729 = vadd.f32 %v2532, %v2697
        %v2730 = vadd.f32 %v2533, %v2698
        %v2731 = vadd.f32 %v2534, %v2699
        %v2732 = vadd.f32 %v2535, %v2700
        %v2733 = vadd.f32 %v2536, %v2701
        %v2734 = vadd.f32 %v2537, %v2702
        %v2735 = vadd.f32 %v2538, %v2703
        %v2736 = vadd.f32 %v2539, %v2704
        %v2737 = vadd.f32 %v2540, %v2705
        %v2738 = vadd.f32 %v2541, %v2706
        %v2739 = vadd.f32 %v2542, %v2707
        %v2740 = vld [vmem:[%s2] sm:$0x1]
        %v2742 = vlaneseq
        %v2743 = vshrl.u32 %v2742, 7
        %v2744 = vsub.s32 0, %v2743
        %v2745 = vrot.slane %v2740, %v2744
        %v2747 = vadd.f32 %v2708, %v2745
        %v2748 = vadd.f32 %v2709, %v2745
        %v2749 = vadd.f32 %v2710, %v2745
        %v2750 = vadd.f32 %v2711, %v2745
        %v2751 = vadd.f32 %v2712, %v2745
        %v2752 = vadd.f32 %v2713, %v2745
        %v2753 = vadd.f32 %v2714, %v2745
        %v2754 = vadd.f32 %v2715, %v2745
        %v2755 = vadd.f32 %v2716, %v2745
        %v2756 = vadd.f32 %v2717, %v2745
        %v2757 = vadd.f32 %v2718, %v2745
        %v2758 = vadd.f32 %v2719, %v2745
        %v2759 = vadd.f32 %v2720, %v2745
        %v2760 = vadd.f32 %v2721, %v2745
        %v2761 = vadd.f32 %v2722, %v2745
        %v2762 = vadd.f32 %v2723, %v2745
        %v2763 = vadd.f32 %v2724, %v2745
        %v2764 = vadd.f32 %v2725, %v2745
        %v2765 = vadd.f32 %v2726, %v2745
        %v2766 = vadd.f32 %v2727, %v2745
        %v2767 = vadd.f32 %v2728, %v2745
        %v2768 = vadd.f32 %v2729, %v2745
        %v2769 = vadd.f32 %v2730, %v2745
        %v2770 = vadd.f32 %v2731, %v2745
        %v2771 = vadd.f32 %v2732, %v2745
        %v2772 = vadd.f32 %v2733, %v2745
        %v2773 = vadd.f32 %v2734, %v2745
        %v2774 = vadd.f32 %v2735, %v2745
        %v2775 = vadd.f32 %v2736, %v2745
        %v2776 = vadd.f32 %v2737, %v2745
        %v2777 = vadd.f32 %v2738, %v2745
        %v2778 = vadd.f32 %v2739, %v2745
        %v2779 = vmax.f32 %v2747, 0.0
        %v2780 = vmax.f32 %v2748, 0.0
        %v2781 = vmax.f32 %v2749, 0.0
        %v2782 = vmax.f32 %v2750, 0.0
        %v2783 = vmax.f32 %v2751, 0.0
        %v2784 = vmax.f32 %v2752, 0.0
        %v2785 = vmax.f32 %v2753, 0.0
        %v2786 = vmax.f32 %v2754, 0.0
        %v2787 = vmax.f32 %v2755, 0.0
        %v2788 = vmax.f32 %v2756, 0.0
        %v2789 = vmax.f32 %v2757, 0.0
        %v2790 = vmax.f32 %v2758, 0.0
        %v2791 = vmax.f32 %v2759, 0.0
        %v2792 = vmax.f32 %v2760, 0.0
        %v2793 = vmax.f32 %v2761, 0.0
        %v2794 = vmax.f32 %v2762, 0.0
        %v2795 = vmax.f32 %v2763, 0.0
        %v2796 = vmax.f32 %v2764, 0.0
        %v2797 = vmax.f32 %v2765, 0.0
        %v2798 = vmax.f32 %v2766, 0.0
        %v2799 = vmax.f32 %v2767, 0.0
        %v2800 = vmax.f32 %v2768, 0.0
        %v2801 = vmax.f32 %v2769, 0.0
        %v2802 = vmax.f32 %v2770, 0.0
        %v2803 = vmax.f32 %v2771, 0.0
        %v2804 = vmax.f32 %v2772, 0.0
        %v2805 = vmax.f32 %v2773, 0.0
        %v2806 = vmax.f32 %v2774, 0.0
        %v2807 = vmax.f32 %v2775, 0.0
        %v2808 = vmax.f32 %v2776, 0.0
        %v2809 = vmax.f32 %v2777, 0.0
        %v2810 = vmax.f32 %v2778, 0.0
        %vm2811 = vcmask 130048
        %2812 = vst.msk [vmem:[#allocation2] sm:$0xff] %vm2811, %v2779
        %2813 = vst.msk [vmem:[#allocation2 + $0x8] sm:$0xff] %vm2811, %v2780
        %2814 = vst.msk [vmem:[#allocation2 + $0x10] sm:$0xff] %vm2811, %v2781
        %2815 = vst.msk [vmem:[#allocation2 + $0x18] sm:$0xff] %vm2811, %v2782
        %2816 = vst.msk [vmem:[#allocation2 + $0x20] sm:$0xff] %vm2811, %v2783
        %2817 = vst.msk [vmem:[#allocation2 + $0x28] sm:$0xff] %vm2811, %v2784
        %2818 = vst.msk [vmem:[#allocation2 + $0x30] sm:$0xff] %vm2811, %v2785
        %2819 = vst.msk [vmem:[#allocation2 + $0x38] sm:$0xff] %vm2811, %v2786
        %2820 = vst.msk [vmem:[#allocation2 + $0x40] sm:$0xff] %vm2811, %v2787
        %2821 = vst.msk [vmem:[#allocation2 + $0x48] sm:$0xff] %vm2811, %v2788
        %2822 = vst.msk [vmem:[#allocation2 + $0x50] sm:$0xff] %vm2811, %v2789
        %2823 = vst.msk [vmem:[#allocation2 + $0x58] sm:$0xff] %vm2811, %v2790
        %2824 = vst.msk [vmem:[#allocation2 + $0x60] sm:$0xff] %vm2811, %v2791
        %2825 = vst.msk [vmem:[#allocation2 + $0x68] sm:$0xff] %vm2811, %v2792
        %2826 = vst.msk [vmem:[#allocation2 + $0x70] sm:$0xff] %vm2811, %v2793
        %2827 = vst.msk [vmem:[#allocation2 + $0x78] sm:$0xff] %vm2811, %v2794
        %2828 = vst.msk [vmem:[#allocation2 + $0x80] sm:$0xff] %vm2811, %v2795
        %2829 = vst.msk [vmem:[#allocation2 + $0x88] sm:$0xff] %vm2811, %v2796
        %2830 = vst.msk [vmem:[#allocation2 + $0x90] sm:$0xff] %vm2811, %v2797
        %2831 = vst.msk [vmem:[#allocation2 + $0x98] sm:$0xff] %vm2811, %v2798
        %2832 = vst.msk [vmem:[#allocation2 + $0xa0] sm:$0xff] %vm2811, %v2799
        %2833 = vst.msk [vmem:[#allocation2 + $0xa8] sm:$0xff] %vm2811, %v2800
        %2834 = vst.msk [vmem:[#allocation2 + $0xb0] sm:$0xff] %vm2811, %v2801
        %2835 = vst.msk [vmem:[#allocation2 + $0xb8] sm:$0xff] %vm2811, %v2802
        %2836 = vst.msk [vmem:[#allocation2 + $0xc0] sm:$0xff] %vm2811, %v2803
        %2837 = vst.msk [vmem:[#allocation2 + $0xc8] sm:$0xff] %vm2811, %v2804
        %2838 = vst.msk [vmem:[#allocation2 + $0xd0] sm:$0xff] %vm2811, %v2805
        %2839 = vst.msk [vmem:[#allocation2 + $0xd8] sm:$0xff] %vm2811, %v2806
        %2840 = vst.msk [vmem:[#allocation2 + $0xe0] sm:$0xff] %vm2811, %v2807
        %2841 = vst.msk [vmem:[#allocation2 + $0xe8] sm:$0xff] %vm2811, %v2808
        %2842 = vst.msk [vmem:[#allocation2 + $0xf0] sm:$0xff] %vm2811, %v2809
        %2843 = vst.msk [vmem:[#allocation2 + $0xf8] sm:$0xff] %vm2811, %v2810
        %v2844 = vld [vmem:[%s3] sm:$0xff]
        %v2845 = vld [vmem:[%s3 + $0x8] sm:$0xff]
        %v2846 = vld [vmem:[%s4] sm:$0x1]
        %v2848 = vlaneseq
        %v2849 = vshrl.u32 %v2848, 7
        %v2850 = vsub.s32 0, %v2849
        %v2851 = vrot.slane %v2846, %v2850
        %v2854 = vsel %vm2811, %v2779, 0
        %v2857 = vsel %vm2811, %v2780, 0
        %v2860 = vsel %vm2811, %v2781, 0
        %v2863 = vsel %vm2811, %v2782, 0
        %v2866 = vsel %vm2811, %v2783, 0
        %v2869 = vsel %vm2811, %v2784, 0
        %v2872 = vsel %vm2811, %v2785, 0
        %v2875 = vsel %vm2811, %v2786, 0
        %v2878 = vsel %vm2811, %v2787, 0
        %v2881 = vsel %vm2811, %v2788, 0
        %v2884 = vsel %vm2811, %v2789, 0
        %v2887 = vsel %vm2811, %v2790, 0
        %v2890 = vsel %vm2811, %v2791, 0
        %v2893 = vsel %vm2811, %v2792, 0
        %v2896 = vsel %vm2811, %v2793, 0
        %v2899 = vsel %vm2811, %v2794, 0
        %v2902 = vsel %vm2811, %v2795, 0
        %v2905 = vsel %vm2811, %v2796, 0
        %v2908 = vsel %vm2811, %v2797, 0
        %v2911 = vsel %vm2811, %v2798, 0
        %v2914 = vsel %vm2811, %v2799, 0
        %v2917 = vsel %vm2811, %v2800, 0
        %v2920 = vsel %vm2811, %v2801, 0
        %v2923 = vsel %vm2811, %v2802, 0
        %v2926 = vsel %vm2811, %v2803, 0
        %v2929 = vsel %vm2811, %v2804, 0
        %v2932 = vsel %vm2811, %v2805, 0
        %v2935 = vsel %vm2811, %v2806, 0
        %v2938 = vsel %vm2811, %v2807, 0
        %v2941 = vsel %vm2811, %v2808, 0
        %v2944 = vsel %vm2811, %v2809, 0
        %v2947 = vsel %vm2811, %v2810, 0
        %2949 = vmatprep.subr.mxu0 0.0
        %2950 = vmatpush1.msra.mxu0 0.0
        %2951 = vmatprep.subr.mxu0 0.0
        %2952 = vmatpush1.msra.mxu0 0.0
        %2953 = vmatprep.subr.mxu0 0.0
        %2954 = vmatpush1.msra.mxu0 0.0
        %2955 = vmatprep.subr.mxu0 0.0
        %2956 = vmatpush1.msra.mxu0 0.0
        %2957 = vmatprep.subr.mxu0 0.0
        %2958 = vmatpush1.msra.mxu0 0.0
        %2959 = vmatprep.subr.mxu0 0.0
        %2960 = vmatpush1.msra.mxu0 0.0
        %2961 = vmatprep.subr.mxu0 0.0
        %2962 = vmatpush1.msra.mxu0 0.0
        %2963 = vmatprep.subr.mxu0 0.0
        %2964 = vmatpush1.msra.mxu0 0.0
        %2965 = vmatprep.subr.mxu0 0.0
        %2966 = vmatpush1.msra.mxu0 0.0
        %2967 = vmatprep.subr.mxu0 0.0
        %2968 = vmatpush1.msra.mxu0 0.0
        %2969 = vmatprep.subr.mxu0 0.0
        %2970 = vmatpush1.msra.mxu0 0.0
        %2971 = vmatprep.subr.mxu0 0.0
        %2972 = vmatpush1.msra.mxu0 0.0
        %2973 = vmatprep.subr.mxu0 0.0
        %2974 = vmatpush1.msra.mxu0 0.0
        %2975 = vmatprep.subr.mxu0 0.0
        %2976 = vmatpush1.msra.mxu0 0.0
        %2977 = vmatprep.subr.mxu0 0.0
        %2978 = vmatpush1.msra.mxu0 %v2845
        %2979 = vmatprep.subr.mxu0 0.0
        %2980 = vmatpush1.msra.mxu0 %v2844
        %2981 = vmatprep.subr.mxu0 0.0
        %2982 = vmatpush2.msra.mxu0 0.0
        %2983 = vmatprep.subr.mxu0 0.0
        %2984 = vmatpush2.msra.mxu0 0.0
        %2985 = vmatprep.subr.mxu0 0.0
        %2986 = vmatpush2.msra.mxu0 0.0
        %2987 = vmatprep.subr.mxu0 0.0
        %2988 = vmatpush2.msra.mxu0 0.0
        %2989 = vmatprep.subr.mxu0 0.0
        %2990 = vmatpush2.msra.mxu0 0.0
        %2991 = vmatprep.subr.mxu0 0.0
        %2992 = vmatpush2.msra.mxu0 0.0
        %2993 = vmatprep.subr.mxu0 0.0
        %2994 = vmatpush2.msra.mxu0 0.0
        %2995 = vmatprep.subr.mxu0 0.0
        %2996 = vmatpush2.msra.mxu0 0.0
        %2997 = vmatprep.subr.mxu0 0.0
        %2998 = vmatpush2.msra.mxu0 0.0
        %2999 = vmatprep.subr.mxu0 0.0
        %3000 = vmatpush2.msra.mxu0 0.0
        %3001 = vmatprep.subr.mxu0 0.0
        %3002 = vmatpush2.msra.mxu0 0.0
        %3003 = vmatprep.subr.mxu0 0.0
        %3004 = vmatpush2.msra.mxu0 0.0
        %3005 = vmatprep.subr.mxu0 0.0
        %3006 = vmatpush2.msra.mxu0 0.0
        %3007 = vmatprep.subr.mxu0 0.0
        %3008 = vmatpush2.msra.mxu0 0.0
        %3009 = vmatprep.subr.mxu0 0.0
        %3010 = vmatpush2.msra.mxu0 0.0
        %3011 = vmatprep.subr.mxu0 0.0
        %3012 = vmatpush2.msra.mxu0 0.0
        %3013 = vmatprep.mubr.f32.mxu0 0.0
        %3014 = vmatmul.mubr.f32.gmra.mxu0 %v2854
        %v3015 = vpop.f32.mrf.mxu0
        %v3016 = vadd.f32 %v2851, %v3015
        %v3017 = vpop.f32.mrf.mxu0
        %3018 = vmatprep.mubr.f32.mxu0 0.0
        %3019 = vmatmul.mubr.f32.gmra.mxu0 %v2857
        %v3020 = vpop.f32.mrf.mxu0
        %v3021 = vadd.f32 %v2851, %v3020
        %v3022 = vpop.f32.mrf.mxu0
        %3023 = vmatprep.mubr.f32.mxu0 0.0
        %3024 = vmatmul.mubr.f32.gmra.mxu0 %v2860
        %v3025 = vpop.f32.mrf.mxu0
        %v3026 = vadd.f32 %v2851, %v3025
        %v3027 = vpop.f32.mrf.mxu0
        %3028 = vmatprep.mubr.f32.mxu0 0.0
        %3029 = vmatmul.mubr.f32.gmra.mxu0 %v2863
        %v3030 = vpop.f32.mrf.mxu0
        %v3031 = vadd.f32 %v2851, %v3030
        %v3032 = vpop.f32.mrf.mxu0
        %3033 = vmatprep.mubr.f32.mxu0 0.0
        %3034 = vmatmul.mubr.f32.gmra.mxu0 %v2866
        %v3035 = vpop.f32.mrf.mxu0
        %v3036 = vadd.f32 %v2851, %v3035
        %v3037 = vpop.f32.mrf.mxu0
        %3038 = vmatprep.mubr.f32.mxu0 0.0
        %3039 = vmatmul.mubr.f32.gmra.mxu0 %v2869
        %v3040 = vpop.f32.mrf.mxu0
        %v3041 = vadd.f32 %v2851, %v3040
        %v3042 = vpop.f32.mrf.mxu0
        %3043 = vmatprep.mubr.f32.mxu0 0.0
        %3044 = vmatmul.mubr.f32.gmra.mxu0 %v2872
        %v3045 = vpop.f32.mrf.mxu0
        %v3046 = vadd.f32 %v2851, %v3045
        %v3047 = vpop.f32.mrf.mxu0
        %3048 = vmatprep.mubr.f32.mxu0 0.0
        %3049 = vmatmul.mubr.f32.gmra.mxu0 %v2875
        %v3050 = vpop.f32.mrf.mxu0
        %v3051 = vadd.f32 %v2851, %v3050
        %v3052 = vpop.f32.mrf.mxu0
        %3053 = vmatprep.mubr.f32.mxu0 0.0
        %3054 = vmatmul.mubr.f32.gmra.mxu0 %v2878
        %v3055 = vpop.f32.mrf.mxu0
        %v3056 = vadd.f32 %v2851, %v3055
        %v3057 = vpop.f32.mrf.mxu0
        %3058 = vmatprep.mubr.f32.mxu0 0.0
        %3059 = vmatmul.mubr.f32.gmra.mxu0 %v2881
        %v3060 = vpop.f32.mrf.mxu0
        %v3061 = vadd.f32 %v2851, %v3060
        %v3062 = vpop.f32.mrf.mxu0
        %3063 = vmatprep.mubr.f32.mxu0 0.0
        %3064 = vmatmul.mubr.f32.gmra.mxu0 %v2884
        %v3065 = vpop.f32.mrf.mxu0
        %v3066 = vadd.f32 %v2851, %v3065
        %v3067 = vpop.f32.mrf.mxu0
        %3068 = vmatprep.mubr.f32.mxu0 0.0
        %3069 = vmatmul.mubr.f32.gmra.mxu0 %v2887
        %v3070 = vpop.f32.mrf.mxu0
        %v3071 = vadd.f32 %v2851, %v3070
        %v3072 = vpop.f32.mrf.mxu0
        %3073 = vmatprep.mubr.f32.mxu0 0.0
        %3074 = vmatmul.mubr.f32.gmra.mxu0 %v2890
        %v3075 = vpop.f32.mrf.mxu0
        %v3076 = vadd.f32 %v2851, %v3075
        %v3077 = vpop.f32.mrf.mxu0
        %3078 = vmatprep.mubr.f32.mxu0 0.0
        %3079 = vmatmul.mubr.f32.gmra.mxu0 %v2893
        %v3080 = vpop.f32.mrf.mxu0
        %v3081 = vadd.f32 %v2851, %v3080
        %v3082 = vpop.f32.mrf.mxu0
        %3083 = vmatprep.mubr.f32.mxu0 0.0
        %3084 = vmatmul.mubr.f32.gmra.mxu0 %v2896
        %v3085 = vpop.f32.mrf.mxu0
        %v3086 = vadd.f32 %v2851, %v3085
        %v3087 = vpop.f32.mrf.mxu0
        %3088 = vmatprep.mubr.f32.mxu0 0.0
        %3089 = vmatmul.mubr.f32.gmra.mxu0 %v2899
        %v3090 = vpop.f32.mrf.mxu0
        %v3091 = vadd.f32 %v2851, %v3090
        %v3092 = vpop.f32.mrf.mxu0
        %3093 = vmatprep.mubr.f32.mxu0 0.0
        %3094 = vmatmul.mubr.f32.gmra.mxu0 %v2902
        %v3095 = vpop.f32.mrf.mxu0
        %v3096 = vadd.f32 %v2851, %v3095
        %v3097 = vpop.f32.mrf.mxu0
        %3098 = vmatprep.mubr.f32.mxu0 0.0
        %3099 = vmatmul.mubr.f32.gmra.mxu0 %v2905
        %v3100 = vpop.f32.mrf.mxu0
        %v3101 = vadd.f32 %v2851, %v3100
        %v3102 = vpop.f32.mrf.mxu0
        %3103 = vmatprep.mubr.f32.mxu0 0.0
        %3104 = vmatmul.mubr.f32.gmra.mxu0 %v2908
        %v3105 = vpop.f32.mrf.mxu0
        %v3106 = vadd.f32 %v2851, %v3105
        %v3107 = vpop.f32.mrf.mxu0
        %3108 = vmatprep.mubr.f32.mxu0 0.0
        %3109 = vmatmul.mubr.f32.gmra.mxu0 %v2911
        %v3110 = vpop.f32.mrf.mxu0
        %v3111 = vadd.f32 %v2851, %v3110
        %v3112 = vpop.f32.mrf.mxu0
        %3113 = vmatprep.mubr.f32.mxu0 0.0
        %3114 = vmatmul.mubr.f32.gmra.mxu0 %v2914
        %v3115 = vpop.f32.mrf.mxu0
        %v3116 = vadd.f32 %v2851, %v3115
        %v3117 = vpop.f32.mrf.mxu0
        %3118 = vmatprep.mubr.f32.mxu0 0.0
        %3119 = vmatmul.mubr.f32.gmra.mxu0 %v2917
        %v3120 = vpop.f32.mrf.mxu0
        %v3121 = vadd.f32 %v2851, %v3120
        %v3122 = vpop.f32.mrf.mxu0
        %3123 = vmatprep.mubr.f32.mxu0 0.0
        %3124 = vmatmul.mubr.f32.gmra.mxu0 %v2920
        %v3125 = vpop.f32.mrf.mxu0
        %v3126 = vadd.f32 %v2851, %v3125
        %v3127 = vpop.f32.mrf.mxu0
        %3128 = vmatprep.mubr.f32.mxu0 0.0
        %3129 = vmatmul.mubr.f32.gmra.mxu0 %v2923
        %v3130 = vpop.f32.mrf.mxu0
        %v3131 = vadd.f32 %v2851, %v3130
        %v3132 = vpop.f32.mrf.mxu0
        %3133 = vmatprep.mubr.f32.mxu0 0.0
        %3134 = vmatmul.mubr.f32.gmra.mxu0 %v2926
        %v3135 = vpop.f32.mrf.mxu0
        %v3136 = vadd.f32 %v2851, %v3135
        %v3137 = vpop.f32.mrf.mxu0
        %3138 = vmatprep.mubr.f32.mxu0 0.0
        %3139 = vmatmul.mubr.f32.gmra.mxu0 %v2929
        %v3140 = vpop.f32.mrf.mxu0
        %v3141 = vadd.f32 %v2851, %v3140
        %v3142 = vpop.f32.mrf.mxu0
        %3143 = vmatprep.mubr.f32.mxu0 0.0
        %3144 = vmatmul.mubr.f32.gmra.mxu0 %v2932
        %v3145 = vpop.f32.mrf.mxu0
        %v3146 = vadd.f32 %v2851, %v3145
        %v3147 = vpop.f32.mrf.mxu0
        %3148 = vmatprep.mubr.f32.mxu0 0.0
        %3149 = vmatmul.mubr.f32.gmra.mxu0 %v2935
        %v3150 = vpop.f32.mrf.mxu0
        %v3151 = vadd.f32 %v2851, %v3150
        %v3152 = vpop.f32.mrf.mxu0
        %3153 = vmatprep.mubr.f32.mxu0 0.0
        %3154 = vmatmul.mubr.f32.gmra.mxu0 %v2938
        %v3155 = vpop.f32.mrf.mxu0
        %v3156 = vadd.f32 %v2851, %v3155
        %v3157 = vpop.f32.mrf.mxu0
        %3158 = vmatprep.mubr.f32.mxu0 0.0
        %3159 = vmatmul.mubr.f32.gmra.mxu0 %v2941
        %v3160 = vpop.f32.mrf.mxu0
        %v3161 = vadd.f32 %v2851, %v3160
        %v3162 = vpop.f32.mrf.mxu0
        %3163 = vmatprep.mubr.f32.mxu0 0.0
        %3164 = vmatmul.mubr.f32.gmra.mxu0 %v2944
        %v3165 = vpop.f32.mrf.mxu0
        %v3166 = vadd.f32 %v2851, %v3165
        %v3167 = vpop.f32.mrf.mxu0
        %3168 = vmatprep.mubr.f32.mxu0 0.0
        %3169 = vmatmul.mubr.f32.gmra.mxu0 %v2947
        %v3170 = vpop.f32.mrf.mxu0
        %v3171 = vadd.f32 %v2851, %v3170
        %v3172 = vpop.f32.mrf.mxu0
        %3173 = vdwg.mxu0
        %v3174 = vmax.f32 %v3016, 0.0
        %v3175 = vmax.f32 %v3021, 0.0
        %v3176 = vmax.f32 %v3026, 0.0
        %v3177 = vmax.f32 %v3031, 0.0
        %v3178 = vmax.f32 %v3036, 0.0
        %v3179 = vmax.f32 %v3041, 0.0
        %v3180 = vmax.f32 %v3046, 0.0
        %v3181 = vmax.f32 %v3051, 0.0
        %v3182 = vmax.f32 %v3056, 0.0
        %v3183 = vmax.f32 %v3061, 0.0
        %v3184 = vmax.f32 %v3066, 0.0
        %v3185 = vmax.f32 %v3071, 0.0
        %v3186 = vmax.f32 %v3076, 0.0
        %v3187 = vmax.f32 %v3081, 0.0
        %v3188 = vmax.f32 %v3086, 0.0
        %v3189 = vmax.f32 %v3091, 0.0
        %v3190 = vmax.f32 %v3096, 0.0
        %v3191 = vmax.f32 %v3101, 0.0
        %v3192 = vmax.f32 %v3106, 0.0
        %v3193 = vmax.f32 %v3111, 0.0
        %v3194 = vmax.f32 %v3116, 0.0
        %v3195 = vmax.f32 %v3121, 0.0
        %v3196 = vmax.f32 %v3126, 0.0
        %v3197 = vmax.f32 %v3131, 0.0
        %v3198 = vmax.f32 %v3136, 0.0
        %v3199 = vmax.f32 %v3141, 0.0
        %v3200 = vmax.f32 %v3146, 0.0
        %v3201 = vmax.f32 %v3151, 0.0
        %v3202 = vmax.f32 %v3156, 0.0
        %v3203 = vmax.f32 %v3161, 0.0
        %v3204 = vmax.f32 %v3166, 0.0
        %v3205 = vmax.f32 %v3171, 0.0
        %3206 = vst.msk [vmem:[#allocation3] sm:$0xff] %vm2811, 0.0
        %vm3207 = vcmask 123904
        %3208 = vst.msk [vmem:[#allocation3 + $0x8] sm:$0x3] %vm3207, 0.0
        %3209 = vst.msk [vmem:[#allocation3 + $0x10] sm:$0xff] %vm2811, 0.0
        %3210 = vst.msk [vmem:[#allocation3 + $0x18] sm:$0x3] %vm3207, 0.0
        %3211 = vst.msk [vmem:[#allocation3 + $0x20] sm:$0xff] %vm2811, 0.0
        %3212 = vst.msk [vmem:[#allocation3 + $0x28] sm:$0x3] %vm3207, 0.0
        %3213 = vst.msk [vmem:[#allocation3 + $0x30] sm:$0xff] %vm2811, 0.0
        %3214 = vst.msk [vmem:[#allocation3 + $0x38] sm:$0x3] %vm3207, 0.0
        %3215 = vst.msk [vmem:[#allocation3 + $0x40] sm:$0xff] %vm2811, 0.0
        %3216 = vst.msk [vmem:[#allocation3 + $0x48] sm:$0x3] %vm3207, 0.0
        %3217 = vst.msk [vmem:[#allocation3 + $0x50] sm:$0xff] %vm2811, 0.0
        %3218 = vst.msk [vmem:[#allocation3 + $0x58] sm:$0x3] %vm3207, 0.0
        %3219 = vst.msk [vmem:[#allocation3 + $0x60] sm:$0xff] %vm2811, 0.0
        %3220 = vst.msk [vmem:[#allocation3 + $0x68] sm:$0x3] %vm3207, 0.0
        %3221 = vst.msk [vmem:[#allocation3 + $0x70] sm:$0xff] %vm2811, 0.0
        %3222 = vst.msk [vmem:[#allocation3 + $0x78] sm:$0x3] %vm3207, 0.0
        %3223 = vst.msk [vmem:[#allocation3 + $0x80] sm:$0xff] %vm2811, 0.0
        %3224 = vst.msk [vmem:[#allocation3 + $0x88] sm:$0x3] %vm3207, 0.0
        %3225 = vst.msk [vmem:[#allocation3 + $0x90] sm:$0xff] %vm2811, 0.0
        %3226 = vst.msk [vmem:[#allocation3 + $0x98] sm:$0x3] %vm3207, 0.0
        %3227 = vst.msk [vmem:[#allocation3 + $0xa0] sm:$0xff] %vm2811, 0.0
        %3228 = vst.msk [vmem:[#allocation3 + $0xa8] sm:$0x3] %vm3207, 0.0
        %3229 = vst.msk [vmem:[#allocation3 + $0xb0] sm:$0xff] %vm2811, 0.0
        %3230 = vst.msk [vmem:[#allocation3 + $0xb8] sm:$0x3] %vm3207, 0.0
        %3231 = vst.msk [vmem:[#allocation3 + $0xc0] sm:$0xff] %vm2811, 0.0
        %3232 = vst.msk [vmem:[#allocation3 + $0xc8] sm:$0x3] %vm3207, 0.0
        %3233 = vst.msk [vmem:[#allocation3 + $0xd0] sm:$0xff] %vm2811, 0.0
        %3234 = vst.msk [vmem:[#allocation3 + $0xd8] sm:$0x3] %vm3207, 0.0
        %3235 = vst.msk [vmem:[#allocation3 + $0xe0] sm:$0xff] %vm2811, 0.0
        %3236 = vst.msk [vmem:[#allocation3 + $0xe8] sm:$0x3] %vm3207, 0.0
        %3237 = vst.msk [vmem:[#allocation3 + $0xf0] sm:$0xff] %vm2811, 0.0
        %3238 = vst.msk [vmem:[#allocation3 + $0xf8] sm:$0x3] %vm3207, 0.0
        %3239 = vst.msk [vmem:[#allocation3 + $0x100] sm:$0xff] %vm2811, 0.0
        %3240 = vst.msk [vmem:[#allocation3 + $0x108] sm:$0x3] %vm3207, 0.0
        %3241 = vst.msk [vmem:[#allocation3 + $0x110] sm:$0xff] %vm2811, 0.0
        %3242 = vst.msk [vmem:[#allocation3 + $0x118] sm:$0x3] %vm3207, 0.0
        %3243 = vst.msk [vmem:[#allocation3 + $0x120] sm:$0xff] %vm2811, 0.0
        %3244 = vst.msk [vmem:[#allocation3 + $0x128] sm:$0x3] %vm3207, 0.0
        %3245 = vst.msk [vmem:[#allocation3 + $0x130] sm:$0xff] %vm2811, 0.0
        %3246 = vst.msk [vmem:[#allocation3 + $0x138] sm:$0x3] %vm3207, 0.0
        %3247 = vst.msk [vmem:[#allocation3 + $0x140] sm:$0xff] %vm2811, 0.0
        %3248 = vst.msk [vmem:[#allocation3 + $0x148] sm:$0x3] %vm3207, 0.0
        %3249 = vst.msk [vmem:[#allocation3 + $0x150] sm:$0xff] %vm2811, 0.0
        %3250 = vst.msk [vmem:[#allocation3 + $0x158] sm:$0x3] %vm3207, 0.0
        %3251 = vst.msk [vmem:[#allocation3 + $0x160] sm:$0xff] %vm2811, 0.0
        %3252 = vst.msk [vmem:[#allocation3 + $0x168] sm:$0x3] %vm3207, 0.0
        %3253 = vst.msk [vmem:[#allocation3 + $0x170] sm:$0xff] %vm2811, 0.0
        %3254 = vst.msk [vmem:[#allocation3 + $0x178] sm:$0x3] %vm3207, 0.0
        %3255 = vst.msk [vmem:[#allocation3 + $0x180] sm:$0xff] %vm2811, 0.0
        %3256 = vst.msk [vmem:[#allocation3 + $0x188] sm:$0x3] %vm3207, 0.0
        %3257 = vst.msk [vmem:[#allocation3 + $0x190] sm:$0xff] %vm2811, 0.0
        %3258 = vst.msk [vmem:[#allocation3 + $0x198] sm:$0x3] %vm3207, 0.0
        %3259 = vst.msk [vmem:[#allocation3 + $0x1a0] sm:$0xff] %vm2811, 0.0
        %3260 = vst.msk [vmem:[#allocation3 + $0x1a8] sm:$0x3] %vm3207, 0.0
        %3261 = vst.msk [vmem:[#allocation3 + $0x1b0] sm:$0xff] %vm2811, 0.0
        %3262 = vst.msk [vmem:[#allocation3 + $0x1b8] sm:$0x3] %vm3207, 0.0
        %3263 = vst.msk [vmem:[#allocation3 + $0x1c0] sm:$0xff] %vm2811, 0.0
        %3264 = vst.msk [vmem:[#allocation3 + $0x1c8] sm:$0x3] %vm3207, 0.0
        %3265 = vst.msk [vmem:[#allocation3 + $0x1d0] sm:$0xff] %vm2811, 0.0
        %3266 = vst.msk [vmem:[#allocation3 + $0x1d8] sm:$0x3] %vm3207, 0.0
        %3267 = vst.msk [vmem:[#allocation3 + $0x1e0] sm:$0xff] %vm2811, 0.0
        %3268 = vst.msk [vmem:[#allocation3 + $0x1e8] sm:$0x3] %vm3207, 0.0
        %3269 = vst.msk [vmem:[#allocation3 + $0x1f0] sm:$0xff] %vm2811, 0.0
        %3270 = vst.msk [vmem:[#allocation3 + $0x1f8] sm:$0x3] %vm3207, 0.0
        %3271 = vst.msk [vmem:[#allocation3 + $0x200] sm:$0xff] %vm2811, 0.0
        %3272 = vst.msk [vmem:[#allocation3 + $0x208] sm:$0x3] %vm3207, 0.0
        %3273 = vst.msk [vmem:[#allocation3 + $0x210] sm:$0xff] %vm2811, 0.0
        %3274 = vst.msk [vmem:[#allocation3 + $0x218] sm:$0x3] %vm3207, 0.0
        %3275 = vst.msk [vmem:[#allocation3 + $0x220] sm:$0xff] %vm2811, 0.0
        %3276 = vst.msk [vmem:[#allocation3 + $0x228] sm:$0x3] %vm3207, 0.0
        %3277 = vst.msk [vmem:[#allocation3 + $0x230] sm:$0xff] %vm2811, 0.0
        %3278 = vst.msk [vmem:[#allocation3 + $0x238] sm:$0x3] %vm3207, 0.0
        %3279 = vst.msk [vmem:[#allocation3 + $0x240] sm:$0xff] %vm2811, 0.0
        %3280 = vst.msk [vmem:[#allocation3 + $0x248] sm:$0x3] %vm3207, 0.0
        %3281 = vst.msk [vmem:[#allocation3 + $0x250] sm:$0xff] %vm2811, 0.0
        %3282 = vst.msk [vmem:[#allocation3 + $0x258] sm:$0x3] %vm3207, 0.0
        %3283 = vst.msk [vmem:[#allocation3 + $0x260] sm:$0xff] %vm2811, 0.0
        %3284 = vst.msk [vmem:[#allocation3 + $0x268] sm:$0x3] %vm3207, 0.0
        %3285 = vst.msk [vmem:[#allocation3 + $0x270] sm:$0xff] %vm2811, 0.0
        %3286 = vst.msk [vmem:[#allocation3 + $0x278] sm:$0x3] %vm3207, 0.0
        %s3287 = scalar_lea.vmem [#allocation3], 16
        %3288 = vst.msk [vmem:[%s3287 + $0x1] sm:$0xff] %vm2811, %v3174
        %3289 = vst.msk [vmem:[%s3287 + $0x11] sm:$0xff] %vm2811, %v3175
        %3290 = vst.msk [vmem:[%s3287 + $0x21] sm:$0xff] %vm2811, %v3176
        %3291 = vst.msk [vmem:[%s3287 + $0x31] sm:$0xff] %vm2811, %v3177
        %3292 = vst.msk [vmem:[%s3287 + $0x41] sm:$0xff] %vm2811, %v3178
        %3293 = vst.msk [vmem:[%s3287 + $0x51] sm:$0xff] %vm2811, %v3179
        %3294 = vst.msk [vmem:[%s3287 + $0x61] sm:$0xff] %vm2811, %v3180
        %3295 = vst.msk [vmem:[%s3287 + $0x71] sm:$0xff] %vm2811, %v3181
        %3296 = vst.msk [vmem:[%s3287 + $0xa1] sm:$0xff] %vm2811, %v3182
        %3297 = vst.msk [vmem:[%s3287 + $0xb1] sm:$0xff] %vm2811, %v3183
        %3298 = vst.msk [vmem:[%s3287 + $0xc1] sm:$0xff] %vm2811, %v3184
        %3299 = vst.msk [vmem:[%s3287 + $0xd1] sm:$0xff] %vm2811, %v3185
        %3300 = vst.msk [vmem:[%s3287 + $0xe1] sm:$0xff] %vm2811, %v3186
        %3301 = vst.msk [vmem:[%s3287 + $0xf1] sm:$0xff] %vm2811, %v3187
        %3302 = vst.msk [vmem:[%s3287 + $0x101] sm:$0xff] %vm2811, %v3188
        %3303 = vst.msk [vmem:[%s3287 + $0x111] sm:$0xff] %vm2811, %v3189
        %3304 = vst.msk [vmem:[%s3287 + $0x141] sm:$0xff] %vm2811, %v3190
        %3305 = vst.msk [vmem:[%s3287 + $0x151] sm:$0xff] %vm2811, %v3191
        %3306 = vst.msk [vmem:[%s3287 + $0x161] sm:$0xff] %vm2811, %v3192
        %3307 = vst.msk [vmem:[%s3287 + $0x171] sm:$0xff] %vm2811, %v3193
        %3308 = vst.msk [vmem:[%s3287 + $0x181] sm:$0xff] %vm2811, %v3194
        %3309 = vst.msk [vmem:[%s3287 + $0x191] sm:$0xff] %vm2811, %v3195
        %3310 = vst.msk [vmem:[%s3287 + $0x1a1] sm:$0xff] %vm2811, %v3196
        %3311 = vst.msk [vmem:[%s3287 + $0x1b1] sm:$0xff] %vm2811, %v3197
        %3312 = vst.msk [vmem:[%s3287 + $0x1e1] sm:$0xff] %vm2811, %v3198
        %3313 = vst.msk [vmem:[%s3287 + $0x1f1] sm:$0xff] %vm2811, %v3199
        %3314 = vst.msk [vmem:[%s3287 + $0x201] sm:$0xff] %vm2811, %v3200
        %3315 = vst.msk [vmem:[%s3287 + $0x211] sm:$0xff] %vm2811, %v3201
        %3316 = vst.msk [vmem:[%s3287 + $0x221] sm:$0xff] %vm2811, %v3202
        %3317 = vst.msk [vmem:[%s3287 + $0x231] sm:$0xff] %vm2811, %v3203
        %3318 = vst.msk [vmem:[%s3287 + $0x241] sm:$0xff] %vm2811, %v3204
        %3319 = vst.msk [vmem:[%s3287 + $0x251] sm:$0xff] %vm2811, %v3205
        %v3320 = vld [vmem:[#allocation3] ss:$2 sm:$0xf]
        %s3321 = scalar_lea.vmem [#allocation3], 32
        %v3322 = vld [vmem:[%s3321] ss:$2 sm:$0xf]
        %s3323 = scalar_lea.vmem [#allocation3], 64
        %v3324 = vld [vmem:[%s3323] ss:$2 sm:$0xf]
        %s3325 = scalar_lea.vmem [#allocation3], 96
        %v3326 = vld [vmem:[%s3325] ss:$2 sm:$0xf]
        %s3327 = scalar_lea.vmem [#allocation3], 160
        %v3328 = vld [vmem:[%s3327] ss:$2 sm:$0xf]
        %s3329 = scalar_lea.vmem [#allocation3], 192
        %v3330 = vld [vmem:[%s3329] ss:$2 sm:$0xf]
        %s3331 = scalar_lea.vmem [#allocation3], 224
        %v3332 = vld [vmem:[%s3331] ss:$2 sm:$0xf]
        %s3333 = scalar_lea.vmem [#allocation3], 256
        %v3334 = vld [vmem:[%s3333] ss:$2 sm:$0xf]
        %s3335 = scalar_lea.vmem [#allocation3], 320
        %v3336 = vld [vmem:[%s3335] ss:$2 sm:$0xf]
        %s3337 = scalar_lea.vmem [#allocation3], 352
        %v3338 = vld [vmem:[%s3337] ss:$2 sm:$0xf]
        %s3339 = scalar_lea.vmem [#allocation3], 384
        %v3340 = vld [vmem:[%s3339] ss:$2 sm:$0xf]
        %s3341 = scalar_lea.vmem [#allocation3], 416
        %v3342 = vld [vmem:[%s3341] ss:$2 sm:$0xf]
        %s3343 = scalar_lea.vmem [#allocation3], 480
        %v3344 = vld [vmem:[%s3343] ss:$2 sm:$0xf]
        %s3345 = scalar_lea.vmem [#allocation3], 512
        %v3346 = vld [vmem:[%s3345] ss:$2 sm:$0xf]
        %s3347 = scalar_lea.vmem [#allocation3], 544
        %v3348 = vld [vmem:[%s3347] ss:$2 sm:$0xf]
        %s3349 = scalar_lea.vmem [#allocation3], 576
        %v3350 = vld [vmem:[%s3349] ss:$2 sm:$0xf]
        %v3351 = vld [vmem:[%s5] sm:$0xff]
        %v3352 = vld [vmem:[%s5 + $0x8] sm:$0xff]
        %s3353 = scalar_lea.vmem [#allocation3], 1
        %v3354 = vld [vmem:[%s3353] ss:$2 sm:$0xf]
        %s3355 = scalar_lea.vmem [#allocation3], 33
        %v3356 = vld [vmem:[%s3355] ss:$2 sm:$0xf]
        %s3357 = scalar_lea.vmem [#allocation3], 65
        %v3358 = vld [vmem:[%s3357] ss:$2 sm:$0xf]
        %s3359 = scalar_lea.vmem [#allocation3], 97
        %v3360 = vld [vmem:[%s3359] ss:$2 sm:$0xf]
        %s3361 = scalar_lea.vmem [#allocation3], 161
        %v3362 = vld [vmem:[%s3361] ss:$2 sm:$0xf]
        %s3363 = scalar_lea.vmem [#allocation3], 193
        %v3364 = vld [vmem:[%s3363] ss:$2 sm:$0xf]
        %s3365 = scalar_lea.vmem [#allocation3], 225
        %v3366 = vld [vmem:[%s3365] ss:$2 sm:$0xf]
        %s3367 = scalar_lea.vmem [#allocation3], 257
        %v3368 = vld [vmem:[%s3367] ss:$2 sm:$0xf]
        %s3369 = scalar_lea.vmem [#allocation3], 321
        %v3370 = vld [vmem:[%s3369] ss:$2 sm:$0xf]
        %s3371 = scalar_lea.vmem [#allocation3], 353
        %v3372 = vld [vmem:[%s3371] ss:$2 sm:$0xf]
        %s3373 = scalar_lea.vmem [#allocation3], 385
        %v3374 = vld [vmem:[%s3373] ss:$2 sm:$0xf]
        %s3375 = scalar_lea.vmem [#allocation3], 417
        %v3376 = vld [vmem:[%s3375] ss:$2 sm:$0xf]
        %s3377 = scalar_lea.vmem [#allocation3], 481
        %v3378 = vld [vmem:[%s3377] ss:$2 sm:$0xf]
        %s3379 = scalar_lea.vmem [#allocation3], 513
        %v3380 = vld [vmem:[%s3379] ss:$2 sm:$0xf]
        %s3381 = scalar_lea.vmem [#allocation3], 545
        %v3382 = vld [vmem:[%s3381] ss:$2 sm:$0xf]
        %s3383 = scalar_lea.vmem [#allocation3], 577
        %v3384 = vld [vmem:[%s3383] ss:$2 sm:$0xf]
        %s3385 = scalar_lea.vmem %s5, 16
        %v3386 = vld [vmem:[%s3385] sm:$0xff]
        %v3387 = vld [vmem:[%s3385 + $0x8] sm:$0xff]
        %v3404 = vcombine.low %v3354, %v3356
        %v3405 = vcombine.low %v3358, %v3360
        %v3406 = vcombine.low %v3362, %v3364
        %v3407 = vcombine.low %v3366, %v3368
        %v3408 = vcombine.low %v3370, %v3372
        %v3409 = vcombine.low %v3374, %v3376
        %v3410 = vcombine.low %v3378, %v3380
        %v3411 = vcombine.low %v3382, %v3384
        %v3412 = vsel %vm2811, %v3404, 0
        %v3414 = vsel %vm2811, %v3405, 0
        %v3416 = vsel %vm2811, %v3406, 0
        %v3418 = vsel %vm2811, %v3407, 0
        %v3420 = vsel %vm2811, %v3408, 0
        %v3422 = vsel %vm2811, %v3409, 0
        %v3424 = vsel %vm2811, %v3410, 0
        %v3426 = vsel %vm2811, %v3411, 0
        %3428 = vmatprep.subr.mxu0 0.0
        %3429 = vmatpush1.msra.mxu0 0.0
        %3430 = vmatprep.subr.mxu0 0.0
        %3431 = vmatpush1.msra.mxu0 0.0
        %3432 = vmatprep.subr.mxu0 0.0
        %3433 = vmatpush1.msra.mxu0 0.0
        %3434 = vmatprep.subr.mxu0 0.0
        %3435 = vmatpush1.msra.mxu0 0.0
        %3436 = vmatprep.subr.mxu0 0.0
        %3437 = vmatpush1.msra.mxu0 0.0
        %3438 = vmatprep.subr.mxu0 0.0
        %3439 = vmatpush1.msra.mxu0 0.0
        %3440 = vmatprep.subr.mxu0 0.0
        %3441 = vmatpush1.msra.mxu0 0.0
        %3442 = vmatprep.subr.mxu0 0.0
        %3443 = vmatpush1.msra.mxu0 0.0
        %3444 = vmatprep.subr.mxu0 0.0
        %3445 = vmatpush1.msra.mxu0 0.0
        %3446 = vmatprep.subr.mxu0 0.0
        %3447 = vmatpush1.msra.mxu0 0.0
        %3448 = vmatprep.subr.mxu0 0.0
        %3449 = vmatpush1.msra.mxu0 0.0
        %3450 = vmatprep.subr.mxu0 0.0
        %3451 = vmatpush1.msra.mxu0 0.0
        %3452 = vmatprep.subr.mxu0 0.0
        %3453 = vmatpush1.msra.mxu0 0.0
        %3454 = vmatprep.subr.mxu0 0.0
        %3455 = vmatpush1.msra.mxu0 0.0
        %3456 = vmatprep.subr.mxu0 0.0
        %3457 = vmatpush1.msra.mxu0 %v3387
        %3458 = vmatprep.subr.mxu0 0.0
        %3459 = vmatpush1.msra.mxu0 %v3386
        %3460 = vmatprep.subr.mxu0 0.0
        %3461 = vmatpush2.msra.mxu0 0.0
        %3462 = vmatprep.subr.mxu0 0.0
        %3463 = vmatpush2.msra.mxu0 0.0
        %3464 = vmatprep.subr.mxu0 0.0
        %3465 = vmatpush2.msra.mxu0 0.0
        %3466 = vmatprep.subr.mxu0 0.0
        %3467 = vmatpush2.msra.mxu0 0.0
        %3468 = vmatprep.subr.mxu0 0.0
        %3469 = vmatpush2.msra.mxu0 0.0
        %3470 = vmatprep.subr.mxu0 0.0
        %3471 = vmatpush2.msra.mxu0 0.0
        %3472 = vmatprep.subr.mxu0 0.0
        %3473 = vmatpush2.msra.mxu0 0.0
        %3474 = vmatprep.subr.mxu0 0.0
        %3475 = vmatpush2.msra.mxu0 0.0
        %3476 = vmatprep.subr.mxu0 0.0
        %3477 = vmatpush2.msra.mxu0 0.0
        %3478 = vmatprep.subr.mxu0 0.0
        %3479 = vmatpush2.msra.mxu0 0.0
        %3480 = vmatprep.subr.mxu0 0.0
        %3481 = vmatpush2.msra.mxu0 0.0
        %3482 = vmatprep.subr.mxu0 0.0
        %3483 = vmatpush2.msra.mxu0 0.0
        %3484 = vmatprep.subr.mxu0 0.0
        %3485 = vmatpush2.msra.mxu0 0.0
        %3486 = vmatprep.subr.mxu0 0.0
        %3487 = vmatpush2.msra.mxu0 0.0
        %3488 = vmatprep.subr.mxu0 0.0
        %3489 = vmatpush2.msra.mxu0 0.0
        %3490 = vmatprep.subr.mxu0 0.0
        %3491 = vmatpush2.msra.mxu0 0.0
        %3492 = vmatprep.mubr.f32.mxu0 0.0
        %3493 = vmatmul.mubr.f32.gmra.mxu0 %v3412
        %v3494 = vpop.f32.mrf.mxu0
        %v3495 = vadd.f32 0.0, %v3494
        %v3496 = vpop.f32.mrf.mxu0
        %3497 = vmatprep.mubr.f32.mxu0 0.0
        %3498 = vmatmul.mubr.f32.gmra.mxu0 %v3414
        %v3499 = vpop.f32.mrf.mxu0
        %v3500 = vadd.f32 0.0, %v3499
        %v3501 = vpop.f32.mrf.mxu0
        %3502 = vmatprep.mubr.f32.mxu0 0.0
        %3503 = vmatmul.mubr.f32.gmra.mxu0 %v3416
        %v3504 = vpop.f32.mrf.mxu0
        %v3505 = vadd.f32 0.0, %v3504
        %v3506 = vpop.f32.mrf.mxu0
        %3507 = vmatprep.mubr.f32.mxu0 0.0
        %3508 = vmatmul.mubr.f32.gmra.mxu0 %v3418
        %v3509 = vpop.f32.mrf.mxu0
        %v3510 = vadd.f32 0.0, %v3509
        %v3511 = vpop.f32.mrf.mxu0
        %3512 = vmatprep.mubr.f32.mxu0 0.0
        %3513 = vmatmul.mubr.f32.gmra.mxu0 %v3420
        %v3514 = vpop.f32.mrf.mxu0
        %v3515 = vadd.f32 0.0, %v3514
        %v3516 = vpop.f32.mrf.mxu0
        %3517 = vmatprep.mubr.f32.mxu0 0.0
        %3518 = vmatmul.mubr.f32.gmra.mxu0 %v3422
        %v3519 = vpop.f32.mrf.mxu0
        %v3520 = vadd.f32 0.0, %v3519
        %v3521 = vpop.f32.mrf.mxu0
        %3522 = vmatprep.mubr.f32.mxu0 0.0
        %3523 = vmatmul.mubr.f32.gmra.mxu0 %v3424
        %v3524 = vpop.f32.mrf.mxu0
        %v3525 = vadd.f32 0.0, %v3524
        %v3526 = vpop.f32.mrf.mxu0
        %3527 = vmatprep.mubr.f32.mxu0 0.0
        %3528 = vmatmul.mubr.f32.gmra.mxu0 %v3426
        %v3529 = vpop.f32.mrf.mxu0
        %v3530 = vadd.f32 0.0, %v3529
        %v3531 = vpop.f32.mrf.mxu0
        %3532 = vdwg.mxu0
        %v3549 = vcombine.low %v3320, %v3322
        %v3550 = vcombine.low %v3324, %v3326
        %v3551 = vcombine.low %v3328, %v3330
        %v3552 = vcombine.low %v3332, %v3334
        %v3553 = vcombine.low %v3336, %v3338
        %v3554 = vcombine.low %v3340, %v3342
        %v3555 = vcombine.low %v3344, %v3346
        %v3556 = vcombine.low %v3348, %v3350
        %v3557 = vsel %vm2811, %v3549, 0
        %v3559 = vsel %vm2811, %v3550, 0
        %v3561 = vsel %vm2811, %v3551, 0
        %v3563 = vsel %vm2811, %v3552, 0
        %v3565 = vsel %vm2811, %v3553, 0
        %v3567 = vsel %vm2811, %v3554, 0
        %v3569 = vsel %vm2811, %v3555, 0
        %v3571 = vsel %vm2811, %v3556, 0
        %3573 = vmatprep.subr.mxu0 0.0
        %3574 = vmatpush1.msra.mxu0 0.0
        %3575 = vmatprep.subr.mxu0 0.0
        %3576 = vmatpush1.msra.mxu0 0.0
        %3577 = vmatprep.subr.mxu0 0.0
        %3578 = vmatpush1.msra.mxu0 0.0
        %3579 = vmatprep.subr.mxu0 0.0
        %3580 = vmatpush1.msra.mxu0 0.0
        %3581 = vmatprep.subr.mxu0 0.0
        %3582 = vmatpush1.msra.mxu0 0.0
        %3583 = vmatprep.subr.mxu0 0.0
        %3584 = vmatpush1.msra.mxu0 0.0
        %3585 = vmatprep.subr.mxu0 0.0
        %3586 = vmatpush1.msra.mxu0 0.0
        %3587 = vmatprep.subr.mxu0 0.0
        %3588 = vmatpush1.msra.mxu0 0.0
        %3589 = vmatprep.subr.mxu0 0.0
        %3590 = vmatpush1.msra.mxu0 0.0
        %3591 = vmatprep.subr.mxu0 0.0
        %3592 = vmatpush1.msra.mxu0 0.0
        %3593 = vmatprep.subr.mxu0 0.0
        %3594 = vmatpush1.msra.mxu0 0.0
        %3595 = vmatprep.subr.mxu0 0.0
        %3596 = vmatpush1.msra.mxu0 0.0
        %3597 = vmatprep.subr.mxu0 0.0
        %3598 = vmatpush1.msra.mxu0 0.0
        %3599 = vmatprep.subr.mxu0 0.0
        %3600 = vmatpush1.msra.mxu0 0.0
        %3601 = vmatprep.subr.mxu0 0.0
        %3602 = vmatpush1.msra.mxu0 %v3352
        %3603 = vmatprep.subr.mxu0 0.0
        %3604 = vmatpush1.msra.mxu0 %v3351
        %3605 = vmatprep.subr.mxu0 0.0
        %3606 = vmatpush2.msra.mxu0 0.0
        %3607 = vmatprep.subr.mxu0 0.0
        %3608 = vmatpush2.msra.mxu0 0.0
        %3609 = vmatprep.subr.mxu0 0.0
        %3610 = vmatpush2.msra.mxu0 0.0
        %3611 = vmatprep.subr.mxu0 0.0
        %3612 = vmatpush2.msra.mxu0 0.0
        %3613 = vmatprep.subr.mxu0 0.0
        %3614 = vmatpush2.msra.mxu0 0.0
        %3615 = vmatprep.subr.mxu0 0.0
        %3616 = vmatpush2.msra.mxu0 0.0
        %3617 = vmatprep.subr.mxu0 0.0
        %3618 = vmatpush2.msra.mxu0 0.0
        %3619 = vmatprep.subr.mxu0 0.0
        %3620 = vmatpush2.msra.mxu0 0.0
        %3621 = vmatprep.subr.mxu0 0.0
        %3622 = vmatpush2.msra.mxu0 0.0
        %3623 = vmatprep.subr.mxu0 0.0
        %3624 = vmatpush2.msra.mxu0 0.0
        %3625 = vmatprep.subr.mxu0 0.0
        %3626 = vmatpush2.msra.mxu0 0.0
        %3627 = vmatprep.subr.mxu0 0.0
        %3628 = vmatpush2.msra.mxu0 0.0
        %3629 = vmatprep.subr.mxu0 0.0
        %3630 = vmatpush2.msra.mxu0 0.0
        %3631 = vmatprep.subr.mxu0 0.0
        %3632 = vmatpush2.msra.mxu0 0.0
        %3633 = vmatprep.subr.mxu0 0.0
        %3634 = vmatpush2.msra.mxu0 0.0
        %3635 = vmatprep.subr.mxu0 0.0
        %3636 = vmatpush2.msra.mxu0 0.0
        %3637 = vmatprep.mubr.f32.mxu0 0.0
        %3638 = vmatmul.mubr.f32.gmra.mxu0 %v3557
        %v3639 = vpop.f32.mrf.mxu0
        %v3640 = vadd.f32 %v3495, %v3639
        %v3641 = vpop.f32.mrf.mxu0
        %3642 = vmatprep.mubr.f32.mxu0 0.0
        %3643 = vmatmul.mubr.f32.gmra.mxu0 %v3559
        %v3644 = vpop.f32.mrf.mxu0
        %v3645 = vadd.f32 %v3500, %v3644
        %v3646 = vpop.f32.mrf.mxu0
        %3647 = vmatprep.mubr.f32.mxu0 0.0
        %3648 = vmatmul.mubr.f32.gmra.mxu0 %v3561
        %v3649 = vpop.f32.mrf.mxu0
        %v3650 = vadd.f32 %v3505, %v3649
        %v3651 = vpop.f32.mrf.mxu0
        %3652 = vmatprep.mubr.f32.mxu0 0.0
        %3653 = vmatmul.mubr.f32.gmra.mxu0 %v3563
        %v3654 = vpop.f32.mrf.mxu0
        %v3655 = vadd.f32 %v3510, %v3654
        %v3656 = vpop.f32.mrf.mxu0
        %3657 = vmatprep.mubr.f32.mxu0 0.0
        %3658 = vmatmul.mubr.f32.gmra.mxu0 %v3565
        %v3659 = vpop.f32.mrf.mxu0
        %v3660 = vadd.f32 %v3515, %v3659
        %v3661 = vpop.f32.mrf.mxu0
        %3662 = vmatprep.mubr.f32.mxu0 0.0
        %3663 = vmatmul.mubr.f32.gmra.mxu0 %v3567
        %v3664 = vpop.f32.mrf.mxu0
        %v3665 = vadd.f32 %v3520, %v3664
        %v3666 = vpop.f32.mrf.mxu0
        %3667 = vmatprep.mubr.f32.mxu0 0.0
        %3668 = vmatmul.mubr.f32.gmra.mxu0 %v3569
        %v3669 = vpop.f32.mrf.mxu0
        %v3670 = vadd.f32 %v3525, %v3669
        %v3671 = vpop.f32.mrf.mxu0
        %3672 = vmatprep.mubr.f32.mxu0 0.0
        %3673 = vmatmul.mubr.f32.gmra.mxu0 %v3571
        %v3674 = vpop.f32.mrf.mxu0
        %v3675 = vadd.f32 %v3530, %v3674
        %v3676 = vpop.f32.mrf.mxu0
        %3677 = vdwg.mxu0
        %s3678 = scalar_lea.vmem [#allocation3], 2
        %v3679 = vld [vmem:[%s3678] ss:$2 sm:$0xf]
        %s3680 = scalar_lea.vmem [#allocation3], 34
        %v3681 = vld [vmem:[%s3680] ss:$2 sm:$0xf]
        %s3682 = scalar_lea.vmem [#allocation3], 66
        %v3683 = vld [vmem:[%s3682] ss:$2 sm:$0xf]
        %s3684 = scalar_lea.vmem [#allocation3], 98
        %v3685 = vld [vmem:[%s3684] ss:$2 sm:$0xf]
        %s3686 = scalar_lea.vmem [#allocation3], 162
        %v3687 = vld [vmem:[%s3686] ss:$2 sm:$0xf]
        %s3688 = scalar_lea.vmem [#allocation3], 194
        %v3689 = vld [vmem:[%s3688] ss:$2 sm:$0xf]
        %s3690 = scalar_lea.vmem [#allocation3], 226
        %v3691 = vld [vmem:[%s3690] ss:$2 sm:$0xf]
        %s3692 = scalar_lea.vmem [#allocation3], 258
        %v3693 = vld [vmem:[%s3692] ss:$2 sm:$0xf]
        %s3694 = scalar_lea.vmem [#allocation3], 322
        %v3695 = vld [vmem:[%s3694] ss:$2 sm:$0xf]
        %s3696 = scalar_lea.vmem [#allocation3], 354
        %v3697 = vld [vmem:[%s3696] ss:$2 sm:$0xf]
        %s3698 = scalar_lea.vmem [#allocation3], 386
        %v3699 = vld [vmem:[%s3698] ss:$2 sm:$0xf]
        %s3700 = scalar_lea.vmem [#allocation3], 418
        %v3701 = vld [vmem:[%s3700] ss:$2 sm:$0xf]
        %s3702 = scalar_lea.vmem [#allocation3], 482
        %v3703 = vld [vmem:[%s3702] ss:$2 sm:$0xf]
        %s3704 = scalar_lea.vmem [#allocation3], 514
        %v3705 = vld [vmem:[%s3704] ss:$2 sm:$0xf]
        %s3706 = scalar_lea.vmem [#allocation3], 546
        %v3707 = vld [vmem:[%s3706] ss:$2 sm:$0xf]
        %s3708 = scalar_lea.vmem [#allocation3], 578
        %v3709 = vld [vmem:[%s3708] ss:$2 sm:$0xf]
        %s3710 = scalar_lea.vmem %s5, 32
        %v3711 = vld [vmem:[%s3710] sm:$0xff]
        %v3712 = vld [vmem:[%s3710 + $0x8] sm:$0xff]
        %v3729 = vcombine.low %v3679, %v3681
        %v3730 = vcombine.low %v3683, %v3685
        %v3731 = vcombine.low %v3687, %v3689
        %v3732 = vcombine.low %v3691, %v3693
        %v3733 = vcombine.low %v3695, %v3697
        %v3734 = vcombine.low %v3699, %v3701
        %v3735 = vcombine.low %v3703, %v3705
        %v3736 = vcombine.low %v3707, %v3709
        %v3737 = vsel %vm2811, %v3729, 0
        %v3739 = vsel %vm2811, %v3730, 0
        %v3741 = vsel %vm2811, %v3731, 0
        %v3743 = vsel %vm2811, %v3732, 0
        %v3745 = vsel %vm2811, %v3733, 0
        %v3747 = vsel %vm2811, %v3734, 0
        %v3749 = vsel %vm2811, %v3735, 0
        %v3751 = vsel %vm2811, %v3736, 0
        %3753 = vmatprep.subr.mxu0 0.0
        %3754 = vmatpush1.msra.mxu0 0.0
        %3755 = vmatprep.subr.mxu0 0.0
        %3756 = vmatpush1.msra.mxu0 0.0
        %3757 = vmatprep.subr.mxu0 0.0
        %3758 = vmatpush1.msra.mxu0 0.0
        %3759 = vmatprep.subr.mxu0 0.0
        %3760 = vmatpush1.msra.mxu0 0.0
        %3761 = vmatprep.subr.mxu0 0.0
        %3762 = vmatpush1.msra.mxu0 0.0
        %3763 = vmatprep.subr.mxu0 0.0
        %3764 = vmatpush1.msra.mxu0 0.0
        %3765 = vmatprep.subr.mxu0 0.0
        %3766 = vmatpush1.msra.mxu0 0.0
        %3767 = vmatprep.subr.mxu0 0.0
        %3768 = vmatpush1.msra.mxu0 0.0
        %3769 = vmatprep.subr.mxu0 0.0
        %3770 = vmatpush1.msra.mxu0 0.0
        %3771 = vmatprep.subr.mxu0 0.0
        %3772 = vmatpush1.msra.mxu0 0.0
        %3773 = vmatprep.subr.mxu0 0.0
        %3774 = vmatpush1.msra.mxu0 0.0
        %3775 = vmatprep.subr.mxu0 0.0
        %3776 = vmatpush1.msra.mxu0 0.0
        %3777 = vmatprep.subr.mxu0 0.0
        %3778 = vmatpush1.msra.mxu0 0.0
        %3779 = vmatprep.subr.mxu0 0.0
        %3780 = vmatpush1.msra.mxu0 0.0
        %3781 = vmatprep.subr.mxu0 0.0
        %3782 = vmatpush1.msra.mxu0 %v3712
        %3783 = vmatprep.subr.mxu0 0.0
        %3784 = vmatpush1.msra.mxu0 %v3711
        %3785 = vmatprep.subr.mxu0 0.0
        %3786 = vmatpush2.msra.mxu0 0.0
        %3787 = vmatprep.subr.mxu0 0.0
        %3788 = vmatpush2.msra.mxu0 0.0
        %3789 = vmatprep.subr.mxu0 0.0
        %3790 = vmatpush2.msra.mxu0 0.0
        %3791 = vmatprep.subr.mxu0 0.0
        %3792 = vmatpush2.msra.mxu0 0.0
        %3793 = vmatprep.subr.mxu0 0.0
        %3794 = vmatpush2.msra.mxu0 0.0
        %3795 = vmatprep.subr.mxu0 0.0
        %3796 = vmatpush2.msra.mxu0 0.0
        %3797 = vmatprep.subr.mxu0 0.0
        %3798 = vmatpush2.msra.mxu0 0.0
        %3799 = vmatprep.subr.mxu0 0.0
        %3800 = vmatpush2.msra.mxu0 0.0
        %3801 = vmatprep.subr.mxu0 0.0
        %3802 = vmatpush2.msra.mxu0 0.0
        %3803 = vmatprep.subr.mxu0 0.0
        %3804 = vmatpush2.msra.mxu0 0.0
        %3805 = vmatprep.subr.mxu0 0.0
        %3806 = vmatpush2.msra.mxu0 0.0
        %3807 = vmatprep.subr.mxu0 0.0
        %3808 = vmatpush2.msra.mxu0 0.0
        %3809 = vmatprep.subr.mxu0 0.0
        %3810 = vmatpush2.msra.mxu0 0.0
        %3811 = vmatprep.subr.mxu0 0.0
        %3812 = vmatpush2.msra.mxu0 0.0
        %3813 = vmatprep.subr.mxu0 0.0
        %3814 = vmatpush2.msra.mxu0 0.0
        %3815 = vmatprep.subr.mxu0 0.0
        %3816 = vmatpush2.msra.mxu0 0.0
        %3817 = vmatprep.mubr.f32.mxu0 0.0
        %3818 = vmatmul.mubr.f32.gmra.mxu0 %v3737
        %v3819 = vpop.f32.mrf.mxu0
        %v3820 = vadd.f32 0.0, %v3819
        %v3821 = vpop.f32.mrf.mxu0
        %3822 = vmatprep.mubr.f32.mxu0 0.0
        %3823 = vmatmul.mubr.f32.gmra.mxu0 %v3739
        %v3824 = vpop.f32.mrf.mxu0
        %v3825 = vadd.f32 0.0, %v3824
        %v3826 = vpop.f32.mrf.mxu0
        %3827 = vmatprep.mubr.f32.mxu0 0.0
        %3828 = vmatmul.mubr.f32.gmra.mxu0 %v3741
        %v3829 = vpop.f32.mrf.mxu0
        %v3830 = vadd.f32 0.0, %v3829
        %v3831 = vpop.f32.mrf.mxu0
        %3832 = vmatprep.mubr.f32.mxu0 0.0
        %3833 = vmatmul.mubr.f32.gmra.mxu0 %v3743
        %v3834 = vpop.f32.mrf.mxu0
        %v3835 = vadd.f32 0.0, %v3834
        %v3836 = vpop.f32.mrf.mxu0
        %3837 = vmatprep.mubr.f32.mxu0 0.0
        %3838 = vmatmul.mubr.f32.gmra.mxu0 %v3745
        %v3839 = vpop.f32.mrf.mxu0
        %v3840 = vadd.f32 0.0, %v3839
        %v3841 = vpop.f32.mrf.mxu0
        %3842 = vmatprep.mubr.f32.mxu0 0.0
        %3843 = vmatmul.mubr.f32.gmra.mxu0 %v3747
        %v3844 = vpop.f32.mrf.mxu0
        %v3845 = vadd.f32 0.0, %v3844
        %v3846 = vpop.f32.mrf.mxu0
        %3847 = vmatprep.mubr.f32.mxu0 0.0
        %3848 = vmatmul.mubr.f32.gmra.mxu0 %v3749
        %v3849 = vpop.f32.mrf.mxu0
        %v3850 = vadd.f32 0.0, %v3849
        %v3851 = vpop.f32.mrf.mxu0
        %3852 = vmatprep.mubr.f32.mxu0 0.0
        %3853 = vmatmul.mubr.f32.gmra.mxu0 %v3751
        %v3854 = vpop.f32.mrf.mxu0
        %v3855 = vadd.f32 0.0, %v3854
        %v3856 = vpop.f32.mrf.mxu0
        %3857 = vdwg.mxu0
        %v3858 = vadd.f32 %v3640, %v3820
        %v3859 = vadd.f32 %v3645, %v3825
        %v3860 = vadd.f32 %v3650, %v3830
        %v3861 = vadd.f32 %v3655, %v3835
        %v3862 = vadd.f32 %v3660, %v3840
        %v3863 = vadd.f32 %v3665, %v3845
        %v3864 = vadd.f32 %v3670, %v3850
        %v3865 = vadd.f32 %v3675, %v3855
        %v3866 = vld [vmem:[%s3287] ss:$2 sm:$0xf]
        %s3867 = scalar_lea.vmem %s3287, 32 [#allocation3]
        %v3868 = vld [vmem:[%s3867] ss:$2 sm:$0xf]
        %s3869 = scalar_lea.vmem %s3287, 64 [#allocation3]
        %v3870 = vld [vmem:[%s3869] ss:$2 sm:$0xf]
        %s3871 = scalar_lea.vmem %s3287, 96 [#allocation3]
        %v3872 = vld [vmem:[%s3871] ss:$2 sm:$0xf]
        %s3873 = scalar_lea.vmem %s3287, 160 [#allocation3]
        %v3874 = vld [vmem:[%s3873] ss:$2 sm:$0xf]
        %s3875 = scalar_lea.vmem %s3287, 192 [#allocation3]
        %v3876 = vld [vmem:[%s3875] ss:$2 sm:$0xf]
        %s3877 = scalar_lea.vmem %s3287, 224 [#allocation3]
        %v3878 = vld [vmem:[%s3877] ss:$2 sm:$0xf]
        %s3879 = scalar_lea.vmem %s3287, 256 [#allocation3]
        %v3880 = vld [vmem:[%s3879] ss:$2 sm:$0xf]
        %s3881 = scalar_lea.vmem %s3287, 320 [#allocation3]
        %v3882 = vld [vmem:[%s3881] ss:$2 sm:$0xf]
        %s3883 = scalar_lea.vmem %s3287, 352 [#allocation3]
        %v3884 = vld [vmem:[%s3883] ss:$2 sm:$0xf]
        %s3885 = scalar_lea.vmem %s3287, 384 [#allocation3]
        %v3886 = vld [vmem:[%s3885] ss:$2 sm:$0xf]
        %s3887 = scalar_lea.vmem %s3287, 416 [#allocation3]
        %v3888 = vld [vmem:[%s3887] ss:$2 sm:$0xf]
        %s3889 = scalar_lea.vmem %s3287, 480 [#allocation3]
        %v3890 = vld [vmem:[%s3889] ss:$2 sm:$0xf]
        %s3891 = scalar_lea.vmem %s3287, 512 [#allocation3]
        %v3892 = vld [vmem:[%s3891] ss:$2 sm:$0xf]
        %s3893 = scalar_lea.vmem %s3287, 544 [#allocation3]
        %v3894 = vld [vmem:[%s3893] ss:$2 sm:$0xf]
        %s3895 = scalar_lea.vmem %s3287, 576 [#allocation3]
        %v3896 = vld [vmem:[%s3895] ss:$2 sm:$0xf]
        %s3897 = scalar_lea.vmem %s5, 48
        %v3898 = vld [vmem:[%s3897] sm:$0xff]
        %v3899 = vld [vmem:[%s3897 + $0x8] sm:$0xff]
        %v3916 = vcombine.low %v3866, %v3868
        %v3917 = vcombine.low %v3870, %v3872
        %v3918 = vcombine.low %v3874, %v3876
        %v3919 = vcombine.low %v3878, %v3880
        %v3920 = vcombine.low %v3882, %v3884
        %v3921 = vcombine.low %v3886, %v3888
        %v3922 = vcombine.low %v3890, %v3892
        %v3923 = vcombine.low %v3894, %v3896
        %v3924 = vsel %vm2811, %v3916, 0
        %v3926 = vsel %vm2811, %v3917, 0
        %v3928 = vsel %vm2811, %v3918, 0
        %v3930 = vsel %vm2811, %v3919, 0
        %v3932 = vsel %vm2811, %v3920, 0
        %v3934 = vsel %vm2811, %v3921, 0
        %v3936 = vsel %vm2811, %v3922, 0
        %v3938 = vsel %vm2811, %v3923, 0
        %3940 = vmatprep.subr.mxu0 0.0
        %3941 = vmatpush1.msra.mxu0 0.0
        %3942 = vmatprep.subr.mxu0 0.0
        %3943 = vmatpush1.msra.mxu0 0.0
        %3944 = vmatprep.subr.mxu0 0.0
        %3945 = vmatpush1.msra.mxu0 0.0
        %3946 = vmatprep.subr.mxu0 0.0
        %3947 = vmatpush1.msra.mxu0 0.0
        %3948 = vmatprep.subr.mxu0 0.0
        %3949 = vmatpush1.msra.mxu0 0.0
        %3950 = vmatprep.subr.mxu0 0.0
        %3951 = vmatpush1.msra.mxu0 0.0
        %3952 = vmatprep.subr.mxu0 0.0
        %3953 = vmatpush1.msra.mxu0 0.0
        %3954 = vmatprep.subr.mxu0 0.0
        %3955 = vmatpush1.msra.mxu0 0.0
        %3956 = vmatprep.subr.mxu0 0.0
        %3957 = vmatpush1.msra.mxu0 0.0
        %3958 = vmatprep.subr.mxu0 0.0
        %3959 = vmatpush1.msra.mxu0 0.0
        %3960 = vmatprep.subr.mxu0 0.0
        %3961 = vmatpush1.msra.mxu0 0.0
        %3962 = vmatprep.subr.mxu0 0.0
        %3963 = vmatpush1.msra.mxu0 0.0
        %3964 = vmatprep.subr.mxu0 0.0
        %3965 = vmatpush1.msra.mxu0 0.0
        %3966 = vmatprep.subr.mxu0 0.0
        %3967 = vmatpush1.msra.mxu0 0.0
        %3968 = vmatprep.subr.mxu0 0.0
        %3969 = vmatpush1.msra.mxu0 %v3899
        %3970 = vmatprep.subr.mxu0 0.0
        %3971 = vmatpush1.msra.mxu0 %v3898
        %3972 = vmatprep.subr.mxu0 0.0
        %3973 = vmatpush2.msra.mxu0 0.0
        %3974 = vmatprep.subr.mxu0 0.0
        %3975 = vmatpush2.msra.mxu0 0.0
        %3976 = vmatprep.subr.mxu0 0.0
        %3977 = vmatpush2.msra.mxu0 0.0
        %3978 = vmatprep.subr.mxu0 0.0
        %3979 = vmatpush2.msra.mxu0 0.0
        %3980 = vmatprep.subr.mxu0 0.0
        %3981 = vmatpush2.msra.mxu0 0.0
        %3982 = vmatprep.subr.mxu0 0.0
        %3983 = vmatpush2.msra.mxu0 0.0
        %3984 = vmatprep.subr.mxu0 0.0
        %3985 = vmatpush2.msra.mxu0 0.0
        %3986 = vmatprep.subr.mxu0 0.0
        %3987 = vmatpush2.msra.mxu0 0.0
        %3988 = vmatprep.subr.mxu0 0.0
        %3989 = vmatpush2.msra.mxu0 0.0
        %3990 = vmatprep.subr.mxu0 0.0
        %3991 = vmatpush2.msra.mxu0 0.0
        %3992 = vmatprep.subr.mxu0 0.0
        %3993 = vmatpush2.msra.mxu0 0.0
        %3994 = vmatprep.subr.mxu0 0.0
        %3995 = vmatpush2.msra.mxu0 0.0
        %3996 = vmatprep.subr.mxu0 0.0
        %3997 = vmatpush2.msra.mxu0 0.0
        %3998 = vmatprep.subr.mxu0 0.0
        %3999 = vmatpush2.msra.mxu0 0.0
        %4000 = vmatprep.subr.mxu0 0.0
        %4001 = vmatpush2.msra.mxu0 0.0
        %4002 = vmatprep.subr.mxu0 0.0
        %4003 = vmatpush2.msra.mxu0 0.0
        %4004 = vmatprep.mubr.f32.mxu0 0.0
        %4005 = vmatmul.mubr.f32.gmra.mxu0 %v3924
        %v4006 = vpop.f32.mrf.mxu0
        %v4007 = vadd.f32 0.0, %v4006
        %v4008 = vpop.f32.mrf.mxu0
        %4009 = vmatprep.mubr.f32.mxu0 0.0
        %4010 = vmatmul.mubr.f32.gmra.mxu0 %v3926
        %v4011 = vpop.f32.mrf.mxu0
        %v4012 = vadd.f32 0.0, %v4011
        %v4013 = vpop.f32.mrf.mxu0
        %4014 = vmatprep.mubr.f32.mxu0 0.0
        %4015 = vmatmul.mubr.f32.gmra.mxu0 %v3928
        %v4016 = vpop.f32.mrf.mxu0
        %v4017 = vadd.f32 0.0, %v4016
        %v4018 = vpop.f32.mrf.mxu0
        %4019 = vmatprep.mubr.f32.mxu0 0.0
        %4020 = vmatmul.mubr.f32.gmra.mxu0 %v3930
        %v4021 = vpop.f32.mrf.mxu0
        %v4022 = vadd.f32 0.0, %v4021
        %v4023 = vpop.f32.mrf.mxu0
        %4024 = vmatprep.mubr.f32.mxu0 0.0
        %4025 = vmatmul.mubr.f32.gmra.mxu0 %v3932
        %v4026 = vpop.f32.mrf.mxu0
        %v4027 = vadd.f32 0.0, %v4026
        %v4028 = vpop.f32.mrf.mxu0
        %4029 = vmatprep.mubr.f32.mxu0 0.0
        %4030 = vmatmul.mubr.f32.gmra.mxu0 %v3934
        %v4031 = vpop.f32.mrf.mxu0
        %v4032 = vadd.f32 0.0, %v4031
        %v4033 = vpop.f32.mrf.mxu0
        %4034 = vmatprep.mubr.f32.mxu0 0.0
        %4035 = vmatmul.mubr.f32.gmra.mxu0 %v3936
        %v4036 = vpop.f32.mrf.mxu0
        %v4037 = vadd.f32 0.0, %v4036
        %v4038 = vpop.f32.mrf.mxu0
        %4039 = vmatprep.mubr.f32.mxu0 0.0
        %4040 = vmatmul.mubr.f32.gmra.mxu0 %v3938
        %v4041 = vpop.f32.mrf.mxu0
        %v4042 = vadd.f32 0.0, %v4041
        %v4043 = vpop.f32.mrf.mxu0
        %4044 = vdwg.mxu0
        %v4045 = vadd.f32 %v3858, %v4007
        %v4046 = vadd.f32 %v3859, %v4012
        %v4047 = vadd.f32 %v3860, %v4017
        %v4048 = vadd.f32 %v3861, %v4022
        %v4049 = vadd.f32 %v3862, %v4027
        %v4050 = vadd.f32 %v3863, %v4032
        %v4051 = vadd.f32 %v3864, %v4037
        %v4052 = vadd.f32 %v3865, %v4042
        %s4053 = scalar_lea.vmem %s3287, 1 [#allocation3]
        %v4054 = vld [vmem:[%s4053] ss:$2 sm:$0xf]
        %s4055 = scalar_lea.vmem %s3287, 33 [#allocation3]
        %v4056 = vld [vmem:[%s4055] ss:$2 sm:$0xf]
        %s4057 = scalar_lea.vmem %s3287, 65 [#allocation3]
        %v4058 = vld [vmem:[%s4057] ss:$2 sm:$0xf]
        %s4059 = scalar_lea.vmem %s3287, 97 [#allocation3]
        %v4060 = vld [vmem:[%s4059] ss:$2 sm:$0xf]
        %s4061 = scalar_lea.vmem %s3287, 161 [#allocation3]
        %v4062 = vld [vmem:[%s4061] ss:$2 sm:$0xf]
        %s4063 = scalar_lea.vmem %s3287, 193 [#allocation3]
        %v4064 = vld [vmem:[%s4063] ss:$2 sm:$0xf]
        %s4065 = scalar_lea.vmem %s3287, 225 [#allocation3]
        %v4066 = vld [vmem:[%s4065] ss:$2 sm:$0xf]
        %s4067 = scalar_lea.vmem %s3287, 257 [#allocation3]
        %v4068 = vld [vmem:[%s4067] ss:$2 sm:$0xf]
        %s4069 = scalar_lea.vmem %s3287, 321 [#allocation3]
        %v4070 = vld [vmem:[%s4069] ss:$2 sm:$0xf]
        %s4071 = scalar_lea.vmem %s3287, 353 [#allocation3]
        %v4072 = vld [vmem:[%s4071] ss:$2 sm:$0xf]
        %s4073 = scalar_lea.vmem %s3287, 385 [#allocation3]
        %v4074 = vld [vmem:[%s4073] ss:$2 sm:$0xf]
        %s4075 = scalar_lea.vmem %s3287, 417 [#allocation3]
        %v4076 = vld [vmem:[%s4075] ss:$2 sm:$0xf]
        %s4077 = scalar_lea.vmem %s3287, 481 [#allocation3]
        %v4078 = vld [vmem:[%s4077] ss:$2 sm:$0xf]
        %s4079 = scalar_lea.vmem %s3287, 513 [#allocation3]
        %v4080 = vld [vmem:[%s4079] ss:$2 sm:$0xf]
        %s4081 = scalar_lea.vmem %s3287, 545 [#allocation3]
        %v4082 = vld [vmem:[%s4081] ss:$2 sm:$0xf]
        %s4083 = scalar_lea.vmem %s3287, 577 [#allocation3]
        %v4084 = vld [vmem:[%s4083] ss:$2 sm:$0xf]
        %s4085 = scalar_lea.vmem %s5, 64
        %v4086 = vld [vmem:[%s4085] sm:$0xff]
        %v4087 = vld [vmem:[%s4085 + $0x8] sm:$0xff]
        %v4104 = vcombine.low %v4054, %v4056
        %v4105 = vcombine.low %v4058, %v4060
        %v4106 = vcombine.low %v4062, %v4064
        %v4107 = vcombine.low %v4066, %v4068
        %v4108 = vcombine.low %v4070, %v4072
        %v4109 = vcombine.low %v4074, %v4076
        %v4110 = vcombine.low %v4078, %v4080
        %v4111 = vcombine.low %v4082, %v4084
        %v4112 = vsel %vm2811, %v4104, 0
        %v4114 = vsel %vm2811, %v4105, 0
        %v4116 = vsel %vm2811, %v4106, 0
        %v4118 = vsel %vm2811, %v4107, 0
        %v4120 = vsel %vm2811, %v4108, 0
        %v4122 = vsel %vm2811, %v4109, 0
        %v4124 = vsel %vm2811, %v4110, 0
        %v4126 = vsel %vm2811, %v4111, 0
        %4128 = vmatprep.subr.mxu0 0.0
        %4129 = vmatpush1.msra.mxu0 0.0
        %4130 = vmatprep.subr.mxu0 0.0
        %4131 = vmatpush1.msra.mxu0 0.0
        %4132 = vmatprep.subr.mxu0 0.0
        %4133 = vmatpush1.msra.mxu0 0.0
        %4134 = vmatprep.subr.mxu0 0.0
        %4135 = vmatpush1.msra.mxu0 0.0
        %4136 = vmatprep.subr.mxu0 0.0
        %4137 = vmatpush1.msra.mxu0 0.0
        %4138 = vmatprep.subr.mxu0 0.0
        %4139 = vmatpush1.msra.mxu0 0.0
        %4140 = vmatprep.subr.mxu0 0.0
        %4141 = vmatpush1.msra.mxu0 0.0
        %4142 = vmatprep.subr.mxu0 0.0
        %4143 = vmatpush1.msra.mxu0 0.0
        %4144 = vmatprep.subr.mxu0 0.0
        %4145 = vmatpush1.msra.mxu0 0.0
        %4146 = vmatprep.subr.mxu0 0.0
        %4147 = vmatpush1.msra.mxu0 0.0
        %4148 = vmatprep.subr.mxu0 0.0
        %4149 = vmatpush1.msra.mxu0 0.0
        %4150 = vmatprep.subr.mxu0 0.0
        %4151 = vmatpush1.msra.mxu0 0.0
        %4152 = vmatprep.subr.mxu0 0.0
        %4153 = vmatpush1.msra.mxu0 0.0
        %4154 = vmatprep.subr.mxu0 0.0
        %4155 = vmatpush1.msra.mxu0 0.0
        %4156 = vmatprep.subr.mxu0 0.0
        %4157 = vmatpush1.msra.mxu0 %v4087
        %4158 = vmatprep.subr.mxu0 0.0
        %4159 = vmatpush1.msra.mxu0 %v4086
        %4160 = vmatprep.subr.mxu0 0.0
        %4161 = vmatpush2.msra.mxu0 0.0
        %4162 = vmatprep.subr.mxu0 0.0
        %4163 = vmatpush2.msra.mxu0 0.0
        %4164 = vmatprep.subr.mxu0 0.0
        %4165 = vmatpush2.msra.mxu0 0.0
        %4166 = vmatprep.subr.mxu0 0.0
        %4167 = vmatpush2.msra.mxu0 0.0
        %4168 = vmatprep.subr.mxu0 0.0
        %4169 = vmatpush2.msra.mxu0 0.0
        %4170 = vmatprep.subr.mxu0 0.0
        %4171 = vmatpush2.msra.mxu0 0.0
        %4172 = vmatprep.subr.mxu0 0.0
        %4173 = vmatpush2.msra.mxu0 0.0
        %4174 = vmatprep.subr.mxu0 0.0
        %4175 = vmatpush2.msra.mxu0 0.0
        %4176 = vmatprep.subr.mxu0 0.0
        %4177 = vmatpush2.msra.mxu0 0.0
        %4178 = vmatprep.subr.mxu0 0.0
        %4179 = vmatpush2.msra.mxu0 0.0
        %4180 = vmatprep.subr.mxu0 0.0
        %4181 = vmatpush2.msra.mxu0 0.0
        %4182 = vmatprep.subr.mxu0 0.0
        %4183 = vmatpush2.msra.mxu0 0.0
        %4184 = vmatprep.subr.mxu0 0.0
        %4185 = vmatpush2.msra.mxu0 0.0
        %4186 = vmatprep.subr.mxu0 0.0
        %4187 = vmatpush2.msra.mxu0 0.0
        %4188 = vmatprep.subr.mxu0 0.0
        %4189 = vmatpush2.msra.mxu0 0.0
        %4190 = vmatprep.subr.mxu0 0.0
        %4191 = vmatpush2.msra.mxu0 0.0
        %4192 = vmatprep.mubr.f32.mxu0 0.0
        %4193 = vmatmul.mubr.f32.gmra.mxu0 %v4112
        %v4194 = vpop.f32.mrf.mxu0
        %v4195 = vadd.f32 0.0, %v4194
        %v4196 = vpop.f32.mrf.mxu0
        %4197 = vmatprep.mubr.f32.mxu0 0.0
        %4198 = vmatmul.mubr.f32.gmra.mxu0 %v4114
        %v4199 = vpop.f32.mrf.mxu0
        %v4200 = vadd.f32 0.0, %v4199
        %v4201 = vpop.f32.mrf.mxu0
        %4202 = vmatprep.mubr.f32.mxu0 0.0
        %4203 = vmatmul.mubr.f32.gmra.mxu0 %v4116
        %v4204 = vpop.f32.mrf.mxu0
        %v4205 = vadd.f32 0.0, %v4204
        %v4206 = vpop.f32.mrf.mxu0
        %4207 = vmatprep.mubr.f32.mxu0 0.0
        %4208 = vmatmul.mubr.f32.gmra.mxu0 %v4118
        %v4209 = vpop.f32.mrf.mxu0
        %v4210 = vadd.f32 0.0, %v4209
        %v4211 = vpop.f32.mrf.mxu0
        %4212 = vmatprep.mubr.f32.mxu0 0.0
        %4213 = vmatmul.mubr.f32.gmra.mxu0 %v4120
        %v4214 = vpop.f32.mrf.mxu0
        %v4215 = vadd.f32 0.0, %v4214
        %v4216 = vpop.f32.mrf.mxu0
        %4217 = vmatprep.mubr.f32.mxu0 0.0
        %4218 = vmatmul.mubr.f32.gmra.mxu0 %v4122
        %v4219 = vpop.f32.mrf.mxu0
        %v4220 = vadd.f32 0.0, %v4219
        %v4221 = vpop.f32.mrf.mxu0
        %4222 = vmatprep.mubr.f32.mxu0 0.0
        %4223 = vmatmul.mubr.f32.gmra.mxu0 %v4124
        %v4224 = vpop.f32.mrf.mxu0
        %v4225 = vadd.f32 0.0, %v4224
        %v4226 = vpop.f32.mrf.mxu0
        %4227 = vmatprep.mubr.f32.mxu0 0.0
        %4228 = vmatmul.mubr.f32.gmra.mxu0 %v4126
        %v4229 = vpop.f32.mrf.mxu0
        %v4230 = vadd.f32 0.0, %v4229
        %v4231 = vpop.f32.mrf.mxu0
        %4232 = vdwg.mxu0
        %v4233 = vadd.f32 %v4045, %v4195
        %v4234 = vadd.f32 %v4046, %v4200
        %v4235 = vadd.f32 %v4047, %v4205
        %v4236 = vadd.f32 %v4048, %v4210
        %v4237 = vadd.f32 %v4049, %v4215
        %v4238 = vadd.f32 %v4050, %v4220
        %v4239 = vadd.f32 %v4051, %v4225
        %v4240 = vadd.f32 %v4052, %v4230
        %s4241 = scalar_lea.vmem %s3287, 2 [#allocation3]
        %v4242 = vld [vmem:[%s4241] ss:$2 sm:$0xf]
        %s4243 = scalar_lea.vmem %s3287, 34 [#allocation3]
        %v4244 = vld [vmem:[%s4243] ss:$2 sm:$0xf]
        %s4245 = scalar_lea.vmem %s3287, 66 [#allocation3]
        %v4246 = vld [vmem:[%s4245] ss:$2 sm:$0xf]
        %s4247 = scalar_lea.vmem %s3287, 98 [#allocation3]
        %v4248 = vld [vmem:[%s4247] ss:$2 sm:$0xf]
        %s4249 = scalar_lea.vmem %s3287, 162 [#allocation3]
        %v4250 = vld [vmem:[%s4249] ss:$2 sm:$0xf]
        %s4251 = scalar_lea.vmem %s3287, 194 [#allocation3]
        %v4252 = vld [vmem:[%s4251] ss:$2 sm:$0xf]
        %s4253 = scalar_lea.vmem %s3287, 226 [#allocation3]
        %v4254 = vld [vmem:[%s4253] ss:$2 sm:$0xf]
        %s4255 = scalar_lea.vmem %s3287, 258 [#allocation3]
        %v4256 = vld [vmem:[%s4255] ss:$2 sm:$0xf]
        %s4257 = scalar_lea.vmem %s3287, 322 [#allocation3]
        %v4258 = vld [vmem:[%s4257] ss:$2 sm:$0xf]
        %s4259 = scalar_lea.vmem %s3287, 354 [#allocation3]
        %v4260 = vld [vmem:[%s4259] ss:$2 sm:$0xf]
        %s4261 = scalar_lea.vmem %s3287, 386 [#allocation3]
        %v4262 = vld [vmem:[%s4261] ss:$2 sm:$0xf]
        %s4263 = scalar_lea.vmem %s3287, 418 [#allocation3]
        %v4264 = vld [vmem:[%s4263] ss:$2 sm:$0xf]
        %s4265 = scalar_lea.vmem %s3287, 482 [#allocation3]
        %v4266 = vld [vmem:[%s4265] ss:$2 sm:$0xf]
        %s4267 = scalar_lea.vmem %s3287, 514 [#allocation3]
        %v4268 = vld [vmem:[%s4267] ss:$2 sm:$0xf]
        %s4269 = scalar_lea.vmem %s3287, 546 [#allocation3]
        %v4270 = vld [vmem:[%s4269] ss:$2 sm:$0xf]
        %s4271 = scalar_lea.vmem %s3287, 578 [#allocation3]
        %v4272 = vld [vmem:[%s4271] ss:$2 sm:$0xf]
        %s4273 = scalar_lea.vmem %s5, 80
        %v4274 = vld [vmem:[%s4273] sm:$0xff]
        %v4275 = vld [vmem:[%s4273 + $0x8] sm:$0xff]
        %v4292 = vcombine.low %v4242, %v4244
        %v4293 = vcombine.low %v4246, %v4248
        %v4294 = vcombine.low %v4250, %v4252
        %v4295 = vcombine.low %v4254, %v4256
        %v4296 = vcombine.low %v4258, %v4260
        %v4297 = vcombine.low %v4262, %v4264
        %v4298 = vcombine.low %v4266, %v4268
        %v4299 = vcombine.low %v4270, %v4272
        %v4300 = vsel %vm2811, %v4292, 0
        %v4302 = vsel %vm2811, %v4293, 0
        %v4304 = vsel %vm2811, %v4294, 0
        %v4306 = vsel %vm2811, %v4295, 0
        %v4308 = vsel %vm2811, %v4296, 0
        %v4310 = vsel %vm2811, %v4297, 0
        %v4312 = vsel %vm2811, %v4298, 0
        %v4314 = vsel %vm2811, %v4299, 0
        %4316 = vmatprep.subr.mxu0 0.0
        %4317 = vmatpush1.msra.mxu0 0.0
        %4318 = vmatprep.subr.mxu0 0.0
        %4319 = vmatpush1.msra.mxu0 0.0
        %4320 = vmatprep.subr.mxu0 0.0
        %4321 = vmatpush1.msra.mxu0 0.0
        %4322 = vmatprep.subr.mxu0 0.0
        %4323 = vmatpush1.msra.mxu0 0.0
        %4324 = vmatprep.subr.mxu0 0.0
        %4325 = vmatpush1.msra.mxu0 0.0
        %4326 = vmatprep.subr.mxu0 0.0
        %4327 = vmatpush1.msra.mxu0 0.0
        %4328 = vmatprep.subr.mxu0 0.0
        %4329 = vmatpush1.msra.mxu0 0.0
        %4330 = vmatprep.subr.mxu0 0.0
        %4331 = vmatpush1.msra.mxu0 0.0
        %4332 = vmatprep.subr.mxu0 0.0
        %4333 = vmatpush1.msra.mxu0 0.0
        %4334 = vmatprep.subr.mxu0 0.0
        %4335 = vmatpush1.msra.mxu0 0.0
        %4336 = vmatprep.subr.mxu0 0.0
        %4337 = vmatpush1.msra.mxu0 0.0
        %4338 = vmatprep.subr.mxu0 0.0
        %4339 = vmatpush1.msra.mxu0 0.0
        %4340 = vmatprep.subr.mxu0 0.0
        %4341 = vmatpush1.msra.mxu0 0.0
        %4342 = vmatprep.subr.mxu0 0.0
        %4343 = vmatpush1.msra.mxu0 0.0
        %4344 = vmatprep.subr.mxu0 0.0
        %4345 = vmatpush1.msra.mxu0 %v4275
        %4346 = vmatprep.subr.mxu0 0.0
        %4347 = vmatpush1.msra.mxu0 %v4274
        %4348 = vmatprep.subr.mxu0 0.0
        %4349 = vmatpush2.msra.mxu0 0.0
        %4350 = vmatprep.subr.mxu0 0.0
        %4351 = vmatpush2.msra.mxu0 0.0
        %4352 = vmatprep.subr.mxu0 0.0
        %4353 = vmatpush2.msra.mxu0 0.0
        %4354 = vmatprep.subr.mxu0 0.0
        %4355 = vmatpush2.msra.mxu0 0.0
        %4356 = vmatprep.subr.mxu0 0.0
        %4357 = vmatpush2.msra.mxu0 0.0
        %4358 = vmatprep.subr.mxu0 0.0
        %4359 = vmatpush2.msra.mxu0 0.0
        %4360 = vmatprep.subr.mxu0 0.0
        %4361 = vmatpush2.msra.mxu0 0.0
        %4362 = vmatprep.subr.mxu0 0.0
        %4363 = vmatpush2.msra.mxu0 0.0
        %4364 = vmatprep.subr.mxu0 0.0
        %4365 = vmatpush2.msra.mxu0 0.0
        %4366 = vmatprep.subr.mxu0 0.0
        %4367 = vmatpush2.msra.mxu0 0.0
        %4368 = vmatprep.subr.mxu0 0.0
        %4369 = vmatpush2.msra.mxu0 0.0
        %4370 = vmatprep.subr.mxu0 0.0
        %4371 = vmatpush2.msra.mxu0 0.0
        %4372 = vmatprep.subr.mxu0 0.0
        %4373 = vmatpush2.msra.mxu0 0.0
        %4374 = vmatprep.subr.mxu0 0.0
        %4375 = vmatpush2.msra.mxu0 0.0
        %4376 = vmatprep.subr.mxu0 0.0
        %4377 = vmatpush2.msra.mxu0 0.0
        %4378 = vmatprep.subr.mxu0 0.0
        %4379 = vmatpush2.msra.mxu0 0.0
        %4380 = vmatprep.mubr.f32.mxu0 0.0
        %4381 = vmatmul.mubr.f32.gmra.mxu0 %v4300
        %v4382 = vpop.f32.mrf.mxu0
        %v4383 = vadd.f32 0.0, %v4382
        %v4384 = vpop.f32.mrf.mxu0
        %4385 = vmatprep.mubr.f32.mxu0 0.0
        %4386 = vmatmul.mubr.f32.gmra.mxu0 %v4302
        %v4387 = vpop.f32.mrf.mxu0
        %v4388 = vadd.f32 0.0, %v4387
        %v4389 = vpop.f32.mrf.mxu0
        %4390 = vmatprep.mubr.f32.mxu0 0.0
        %4391 = vmatmul.mubr.f32.gmra.mxu0 %v4304
        %v4392 = vpop.f32.mrf.mxu0
        %v4393 = vadd.f32 0.0, %v4392
        %v4394 = vpop.f32.mrf.mxu0
        %4395 = vmatprep.mubr.f32.mxu0 0.0
        %4396 = vmatmul.mubr.f32.gmra.mxu0 %v4306
        %v4397 = vpop.f32.mrf.mxu0
        %v4398 = vadd.f32 0.0, %v4397
        %v4399 = vpop.f32.mrf.mxu0
        %4400 = vmatprep.mubr.f32.mxu0 0.0
        %4401 = vmatmul.mubr.f32.gmra.mxu0 %v4308
        %v4402 = vpop.f32.mrf.mxu0
        %v4403 = vadd.f32 0.0, %v4402
        %v4404 = vpop.f32.mrf.mxu0
        %4405 = vmatprep.mubr.f32.mxu0 0.0
        %4406 = vmatmul.mubr.f32.gmra.mxu0 %v4310
        %v4407 = vpop.f32.mrf.mxu0
        %v4408 = vadd.f32 0.0, %v4407
        %v4409 = vpop.f32.mrf.mxu0
        %4410 = vmatprep.mubr.f32.mxu0 0.0
        %4411 = vmatmul.mubr.f32.gmra.mxu0 %v4312
        %v4412 = vpop.f32.mrf.mxu0
        %v4413 = vadd.f32 0.0, %v4412
        %v4414 = vpop.f32.mrf.mxu0
        %4415 = vmatprep.mubr.f32.mxu0 0.0
        %4416 = vmatmul.mubr.f32.gmra.mxu0 %v4314
        %v4417 = vpop.f32.mrf.mxu0
        %v4418 = vadd.f32 0.0, %v4417
        %v4419 = vpop.f32.mrf.mxu0
        %4420 = vdwg.mxu0
        %v4421 = vadd.f32 %v4233, %v4383
        %v4422 = vadd.f32 %v4234, %v4388
        %v4423 = vadd.f32 %v4235, %v4393
        %v4424 = vadd.f32 %v4236, %v4398
        %v4425 = vadd.f32 %v4237, %v4403
        %v4426 = vadd.f32 %v4238, %v4408
        %v4427 = vadd.f32 %v4239, %v4413
        %v4428 = vadd.f32 %v4240, %v4418
        %s4429 = scalar_lea.vmem [#allocation3], 32
        %v4430 = vld [vmem:[%s4429] ss:$2 sm:$0xf]
        %s4431 = scalar_lea.vmem %s4429, 32 [#allocation3]
        %v4432 = vld [vmem:[%s4431] ss:$2 sm:$0xf]
        %s4433 = scalar_lea.vmem %s4429, 64 [#allocation3]
        %v4434 = vld [vmem:[%s4433] ss:$2 sm:$0xf]
        %s4435 = scalar_lea.vmem %s4429, 96 [#allocation3]
        %v4436 = vld [vmem:[%s4435] ss:$2 sm:$0xf]
        %s4437 = scalar_lea.vmem %s4429, 160 [#allocation3]
        %v4438 = vld [vmem:[%s4437] ss:$2 sm:$0xf]
        %s4439 = scalar_lea.vmem %s4429, 192 [#allocation3]
        %v4440 = vld [vmem:[%s4439] ss:$2 sm:$0xf]
        %s4441 = scalar_lea.vmem %s4429, 224 [#allocation3]
        %v4442 = vld [vmem:[%s4441] ss:$2 sm:$0xf]
        %s4443 = scalar_lea.vmem %s4429, 256 [#allocation3]
        %v4444 = vld [vmem:[%s4443] ss:$2 sm:$0xf]
        %s4445 = scalar_lea.vmem %s4429, 320 [#allocation3]
        %v4446 = vld [vmem:[%s4445] ss:$2 sm:$0xf]
        %s4447 = scalar_lea.vmem %s4429, 352 [#allocation3]
        %v4448 = vld [vmem:[%s4447] ss:$2 sm:$0xf]
        %s4449 = scalar_lea.vmem %s4429, 384 [#allocation3]
        %v4450 = vld [vmem:[%s4449] ss:$2 sm:$0xf]
        %s4451 = scalar_lea.vmem %s4429, 416 [#allocation3]
        %v4452 = vld [vmem:[%s4451] ss:$2 sm:$0xf]
        %s4453 = scalar_lea.vmem %s4429, 480 [#allocation3]
        %v4454 = vld [vmem:[%s4453] ss:$2 sm:$0xf]
        %s4455 = scalar_lea.vmem %s4429, 512 [#allocation3]
        %v4456 = vld [vmem:[%s4455] ss:$2 sm:$0xf]
        %s4457 = scalar_lea.vmem %s4429, 544 [#allocation3]
        %v4458 = vld [vmem:[%s4457] ss:$2 sm:$0xf]
        %s4459 = scalar_lea.vmem %s4429, 576 [#allocation3]
        %v4460 = vld [vmem:[%s4459] ss:$2 sm:$0xf]
        %s4461 = scalar_lea.vmem %s5, 96
        %v4462 = vld [vmem:[%s4461] sm:$0xff]
        %v4463 = vld [vmem:[%s4461 + $0x8] sm:$0xff]
        %v4480 = vcombine.low %v4430, %v4432
        %v4481 = vcombine.low %v4434, %v4436
        %v4482 = vcombine.low %v4438, %v4440
        %v4483 = vcombine.low %v4442, %v4444
        %v4484 = vcombine.low %v4446, %v4448
        %v4485 = vcombine.low %v4450, %v4452
        %v4486 = vcombine.low %v4454, %v4456
        %v4487 = vcombine.low %v4458, %v4460
        %v4488 = vsel %vm2811, %v4480, 0
        %v4490 = vsel %vm2811, %v4481, 0
        %v4492 = vsel %vm2811, %v4482, 0
        %v4494 = vsel %vm2811, %v4483, 0
        %v4496 = vsel %vm2811, %v4484, 0
        %v4498 = vsel %vm2811, %v4485, 0
        %v4500 = vsel %vm2811, %v4486, 0
        %v4502 = vsel %vm2811, %v4487, 0
        %4504 = vmatprep.subr.mxu0 0.0
        %4505 = vmatpush1.msra.mxu0 0.0
        %4506 = vmatprep.subr.mxu0 0.0
        %4507 = vmatpush1.msra.mxu0 0.0
        %4508 = vmatprep.subr.mxu0 0.0
        %4509 = vmatpush1.msra.mxu0 0.0
        %4510 = vmatprep.subr.mxu0 0.0
        %4511 = vmatpush1.msra.mxu0 0.0
        %4512 = vmatprep.subr.mxu0 0.0
        %4513 = vmatpush1.msra.mxu0 0.0
        %4514 = vmatprep.subr.mxu0 0.0
        %4515 = vmatpush1.msra.mxu0 0.0
        %4516 = vmatprep.subr.mxu0 0.0
        %4517 = vmatpush1.msra.mxu0 0.0
        %4518 = vmatprep.subr.mxu0 0.0
        %4519 = vmatpush1.msra.mxu0 0.0
        %4520 = vmatprep.subr.mxu0 0.0
        %4521 = vmatpush1.msra.mxu0 0.0
        %4522 = vmatprep.subr.mxu0 0.0
        %4523 = vmatpush1.msra.mxu0 0.0
        %4524 = vmatprep.subr.mxu0 0.0
        %4525 = vmatpush1.msra.mxu0 0.0
        %4526 = vmatprep.subr.mxu0 0.0
        %4527 = vmatpush1.msra.mxu0 0.0
        %4528 = vmatprep.subr.mxu0 0.0
        %4529 = vmatpush1.msra.mxu0 0.0
        %4530 = vmatprep.subr.mxu0 0.0
        %4531 = vmatpush1.msra.mxu0 0.0
        %4532 = vmatprep.subr.mxu0 0.0
        %4533 = vmatpush1.msra.mxu0 %v4463
        %4534 = vmatprep.subr.mxu0 0.0
        %4535 = vmatpush1.msra.mxu0 %v4462
        %4536 = vmatprep.subr.mxu0 0.0
        %4537 = vmatpush2.msra.mxu0 0.0
        %4538 = vmatprep.subr.mxu0 0.0
        %4539 = vmatpush2.msra.mxu0 0.0
        %4540 = vmatprep.subr.mxu0 0.0
        %4541 = vmatpush2.msra.mxu0 0.0
        %4542 = vmatprep.subr.mxu0 0.0
        %4543 = vmatpush2.msra.mxu0 0.0
        %4544 = vmatprep.subr.mxu0 0.0
        %4545 = vmatpush2.msra.mxu0 0.0
        %4546 = vmatprep.subr.mxu0 0.0
        %4547 = vmatpush2.msra.mxu0 0.0
        %4548 = vmatprep.subr.mxu0 0.0
        %4549 = vmatpush2.msra.mxu0 0.0
        %4550 = vmatprep.subr.mxu0 0.0
        %4551 = vmatpush2.msra.mxu0 0.0
        %4552 = vmatprep.subr.mxu0 0.0
        %4553 = vmatpush2.msra.mxu0 0.0
        %4554 = vmatprep.subr.mxu0 0.0
        %4555 = vmatpush2.msra.mxu0 0.0
        %4556 = vmatprep.subr.mxu0 0.0
        %4557 = vmatpush2.msra.mxu0 0.0
        %4558 = vmatprep.subr.mxu0 0.0
        %4559 = vmatpush2.msra.mxu0 0.0
        %4560 = vmatprep.subr.mxu0 0.0
        %4561 = vmatpush2.msra.mxu0 0.0
        %4562 = vmatprep.subr.mxu0 0.0
        %4563 = vmatpush2.msra.mxu0 0.0
        %4564 = vmatprep.subr.mxu0 0.0
        %4565 = vmatpush2.msra.mxu0 0.0
        %4566 = vmatprep.subr.mxu0 0.0
        %4567 = vmatpush2.msra.mxu0 0.0
        %4568 = vmatprep.mubr.f32.mxu0 0.0
        %4569 = vmatmul.mubr.f32.gmra.mxu0 %v4488
        %v4570 = vpop.f32.mrf.mxu0
        %v4571 = vadd.f32 0.0, %v4570
        %v4572 = vpop.f32.mrf.mxu0
        %4573 = vmatprep.mubr.f32.mxu0 0.0
        %4574 = vmatmul.mubr.f32.gmra.mxu0 %v4490
        %v4575 = vpop.f32.mrf.mxu0
        %v4576 = vadd.f32 0.0, %v4575
        %v4577 = vpop.f32.mrf.mxu0
        %4578 = vmatprep.mubr.f32.mxu0 0.0
        %4579 = vmatmul.mubr.f32.gmra.mxu0 %v4492
        %v4580 = vpop.f32.mrf.mxu0
        %v4581 = vadd.f32 0.0, %v4580
        %v4582 = vpop.f32.mrf.mxu0
        %4583 = vmatprep.mubr.f32.mxu0 0.0
        %4584 = vmatmul.mubr.f32.gmra.mxu0 %v4494
        %v4585 = vpop.f32.mrf.mxu0
        %v4586 = vadd.f32 0.0, %v4585
        %v4587 = vpop.f32.mrf.mxu0
        %4588 = vmatprep.mubr.f32.mxu0 0.0
        %4589 = vmatmul.mubr.f32.gmra.mxu0 %v4496
        %v4590 = vpop.f32.mrf.mxu0
        %v4591 = vadd.f32 0.0, %v4590
        %v4592 = vpop.f32.mrf.mxu0
        %4593 = vmatprep.mubr.f32.mxu0 0.0
        %4594 = vmatmul.mubr.f32.gmra.mxu0 %v4498
        %v4595 = vpop.f32.mrf.mxu0
        %v4596 = vadd.f32 0.0, %v4595
        %v4597 = vpop.f32.mrf.mxu0
        %4598 = vmatprep.mubr.f32.mxu0 0.0
        %4599 = vmatmul.mubr.f32.gmra.mxu0 %v4500
        %v4600 = vpop.f32.mrf.mxu0
        %v4601 = vadd.f32 0.0, %v4600
        %v4602 = vpop.f32.mrf.mxu0
        %4603 = vmatprep.mubr.f32.mxu0 0.0
        %4604 = vmatmul.mubr.f32.gmra.mxu0 %v4502
        %v4605 = vpop.f32.mrf.mxu0
        %v4606 = vadd.f32 0.0, %v4605
        %v4607 = vpop.f32.mrf.mxu0
        %4608 = vdwg.mxu0
        %v4609 = vadd.f32 %v4421, %v4571
        %v4610 = vadd.f32 %v4422, %v4576
        %v4611 = vadd.f32 %v4423, %v4581
        %v4612 = vadd.f32 %v4424, %v4586
        %v4613 = vadd.f32 %v4425, %v4591
        %v4614 = vadd.f32 %v4426, %v4596
        %v4615 = vadd.f32 %v4427, %v4601
        %v4616 = vadd.f32 %v4428, %v4606
        %s4617 = scalar_lea.vmem %s4429, 1 [#allocation3]
        %v4618 = vld [vmem:[%s4617] ss:$2 sm:$0xf]
        %s4619 = scalar_lea.vmem %s4429, 33 [#allocation3]
        %v4620 = vld [vmem:[%s4619] ss:$2 sm:$0xf]
        %s4621 = scalar_lea.vmem %s4429, 65 [#allocation3]
        %v4622 = vld [vmem:[%s4621] ss:$2 sm:$0xf]
        %s4623 = scalar_lea.vmem %s4429, 97 [#allocation3]
        %v4624 = vld [vmem:[%s4623] ss:$2 sm:$0xf]
        %s4625 = scalar_lea.vmem %s4429, 161 [#allocation3]
        %v4626 = vld [vmem:[%s4625] ss:$2 sm:$0xf]
        %s4627 = scalar_lea.vmem %s4429, 193 [#allocation3]
        %v4628 = vld [vmem:[%s4627] ss:$2 sm:$0xf]
        %s4629 = scalar_lea.vmem %s4429, 225 [#allocation3]
        %v4630 = vld [vmem:[%s4629] ss:$2 sm:$0xf]
        %s4631 = scalar_lea.vmem %s4429, 257 [#allocation3]
        %v4632 = vld [vmem:[%s4631] ss:$2 sm:$0xf]
        %s4633 = scalar_lea.vmem %s4429, 321 [#allocation3]
        %v4634 = vld [vmem:[%s4633] ss:$2 sm:$0xf]
        %s4635 = scalar_lea.vmem %s4429, 353 [#allocation3]
        %v4636 = vld [vmem:[%s4635] ss:$2 sm:$0xf]
        %s4637 = scalar_lea.vmem %s4429, 385 [#allocation3]
        %v4638 = vld [vmem:[%s4637] ss:$2 sm:$0xf]
        %s4639 = scalar_lea.vmem %s4429, 417 [#allocation3]
        %v4640 = vld [vmem:[%s4639] ss:$2 sm:$0xf]
        %s4641 = scalar_lea.vmem %s4429, 481 [#allocation3]
        %v4642 = vld [vmem:[%s4641] ss:$2 sm:$0xf]
        %s4643 = scalar_lea.vmem %s4429, 513 [#allocation3]
        %v4644 = vld [vmem:[%s4643] ss:$2 sm:$0xf]
        %s4645 = scalar_lea.vmem %s4429, 545 [#allocation3]
        %v4646 = vld [vmem:[%s4645] ss:$2 sm:$0xf]
        %s4647 = scalar_lea.vmem %s4429, 577 [#allocation3]
        %v4648 = vld [vmem:[%s4647] ss:$2 sm:$0xf]
        %s4649 = scalar_lea.vmem %s5, 112
        %v4650 = vld [vmem:[%s4649] sm:$0xff]
        %v4651 = vld [vmem:[%s4649 + $0x8] sm:$0xff]
        %v4668 = vcombine.low %v4618, %v4620
        %v4669 = vcombine.low %v4622, %v4624
        %v4670 = vcombine.low %v4626, %v4628
        %v4671 = vcombine.low %v4630, %v4632
        %v4672 = vcombine.low %v4634, %v4636
        %v4673 = vcombine.low %v4638, %v4640
        %v4674 = vcombine.low %v4642, %v4644
        %v4675 = vcombine.low %v4646, %v4648
        %v4676 = vsel %vm2811, %v4668, 0
        %v4678 = vsel %vm2811, %v4669, 0
        %v4680 = vsel %vm2811, %v4670, 0
        %v4682 = vsel %vm2811, %v4671, 0
        %v4684 = vsel %vm2811, %v4672, 0
        %v4686 = vsel %vm2811, %v4673, 0
        %v4688 = vsel %vm2811, %v4674, 0
        %v4690 = vsel %vm2811, %v4675, 0
        %4692 = vmatprep.subr.mxu0 0.0
        %4693 = vmatpush1.msra.mxu0 0.0
        %4694 = vmatprep.subr.mxu0 0.0
        %4695 = vmatpush1.msra.mxu0 0.0
        %4696 = vmatprep.subr.mxu0 0.0
        %4697 = vmatpush1.msra.mxu0 0.0
        %4698 = vmatprep.subr.mxu0 0.0
        %4699 = vmatpush1.msra.mxu0 0.0
        %4700 = vmatprep.subr.mxu0 0.0
        %4701 = vmatpush1.msra.mxu0 0.0
        %4702 = vmatprep.subr.mxu0 0.0
        %4703 = vmatpush1.msra.mxu0 0.0
        %4704 = vmatprep.subr.mxu0 0.0
        %4705 = vmatpush1.msra.mxu0 0.0
        %4706 = vmatprep.subr.mxu0 0.0
        %4707 = vmatpush1.msra.mxu0 0.0
        %4708 = vmatprep.subr.mxu0 0.0
        %4709 = vmatpush1.msra.mxu0 0.0
        %4710 = vmatprep.subr.mxu0 0.0
        %4711 = vmatpush1.msra.mxu0 0.0
        %4712 = vmatprep.subr.mxu0 0.0
        %4713 = vmatpush1.msra.mxu0 0.0
        %4714 = vmatprep.subr.mxu0 0.0
        %4715 = vmatpush1.msra.mxu0 0.0
        %4716 = vmatprep.subr.mxu0 0.0
        %4717 = vmatpush1.msra.mxu0 0.0
        %4718 = vmatprep.subr.mxu0 0.0
        %4719 = vmatpush1.msra.mxu0 0.0
        %4720 = vmatprep.subr.mxu0 0.0
        %4721 = vmatpush1.msra.mxu0 %v4651
        %4722 = vmatprep.subr.mxu0 0.0
        %4723 = vmatpush1.msra.mxu0 %v4650
        %4724 = vmatprep.subr.mxu0 0.0
        %4725 = vmatpush2.msra.mxu0 0.0
        %4726 = vmatprep.subr.mxu0 0.0
        %4727 = vmatpush2.msra.mxu0 0.0
        %4728 = vmatprep.subr.mxu0 0.0
        %4729 = vmatpush2.msra.mxu0 0.0
        %4730 = vmatprep.subr.mxu0 0.0
        %4731 = vmatpush2.msra.mxu0 0.0
        %4732 = vmatprep.subr.mxu0 0.0
        %4733 = vmatpush2.msra.mxu0 0.0
        %4734 = vmatprep.subr.mxu0 0.0
        %4735 = vmatpush2.msra.mxu0 0.0
        %4736 = vmatprep.subr.mxu0 0.0
        %4737 = vmatpush2.msra.mxu0 0.0
        %4738 = vmatprep.subr.mxu0 0.0
        %4739 = vmatpush2.msra.mxu0 0.0
        %4740 = vmatprep.subr.mxu0 0.0
        %4741 = vmatpush2.msra.mxu0 0.0
        %4742 = vmatprep.subr.mxu0 0.0
        %4743 = vmatpush2.msra.mxu0 0.0
        %4744 = vmatprep.subr.mxu0 0.0
        %4745 = vmatpush2.msra.mxu0 0.0
        %4746 = vmatprep.subr.mxu0 0.0
        %4747 = vmatpush2.msra.mxu0 0.0
        %4748 = vmatprep.subr.mxu0 0.0
        %4749 = vmatpush2.msra.mxu0 0.0
        %4750 = vmatprep.subr.mxu0 0.0
        %4751 = vmatpush2.msra.mxu0 0.0
        %4752 = vmatprep.subr.mxu0 0.0
        %4753 = vmatpush2.msra.mxu0 0.0
        %4754 = vmatprep.subr.mxu0 0.0
        %4755 = vmatpush2.msra.mxu0 0.0
        %4756 = vmatprep.mubr.f32.mxu0 0.0
        %4757 = vmatmul.mubr.f32.gmra.mxu0 %v4676
        %v4758 = vpop.f32.mrf.mxu0
        %v4759 = vadd.f32 0.0, %v4758
        %v4760 = vpop.f32.mrf.mxu0
        %4761 = vmatprep.mubr.f32.mxu0 0.0
        %4762 = vmatmul.mubr.f32.gmra.mxu0 %v4678
        %v4763 = vpop.f32.mrf.mxu0
        %v4764 = vadd.f32 0.0, %v4763
        %v4765 = vpop.f32.mrf.mxu0
        %4766 = vmatprep.mubr.f32.mxu0 0.0
        %4767 = vmatmul.mubr.f32.gmra.mxu0 %v4680
        %v4768 = vpop.f32.mrf.mxu0
        %v4769 = vadd.f32 0.0, %v4768
        %v4770 = vpop.f32.mrf.mxu0
        %4771 = vmatprep.mubr.f32.mxu0 0.0
        %4772 = vmatmul.mubr.f32.gmra.mxu0 %v4682
        %v4773 = vpop.f32.mrf.mxu0
        %v4774 = vadd.f32 0.0, %v4773
        %v4775 = vpop.f32.mrf.mxu0
        %4776 = vmatprep.mubr.f32.mxu0 0.0
        %4777 = vmatmul.mubr.f32.gmra.mxu0 %v4684
        %v4778 = vpop.f32.mrf.mxu0
        %v4779 = vadd.f32 0.0, %v4778
        %v4780 = vpop.f32.mrf.mxu0
        %4781 = vmatprep.mubr.f32.mxu0 0.0
        %4782 = vmatmul.mubr.f32.gmra.mxu0 %v4686
        %v4783 = vpop.f32.mrf.mxu0
        %v4784 = vadd.f32 0.0, %v4783
        %v4785 = vpop.f32.mrf.mxu0
        %4786 = vmatprep.mubr.f32.mxu0 0.0
        %4787 = vmatmul.mubr.f32.gmra.mxu0 %v4688
        %v4788 = vpop.f32.mrf.mxu0
        %v4789 = vadd.f32 0.0, %v4788
        %v4790 = vpop.f32.mrf.mxu0
        %4791 = vmatprep.mubr.f32.mxu0 0.0
        %4792 = vmatmul.mubr.f32.gmra.mxu0 %v4690
        %v4793 = vpop.f32.mrf.mxu0
        %v4794 = vadd.f32 0.0, %v4793
        %v4795 = vpop.f32.mrf.mxu0
        %4796 = vdwg.mxu0
        %v4797 = vadd.f32 %v4609, %v4759
        %v4798 = vadd.f32 %v4610, %v4764
        %v4799 = vadd.f32 %v4611, %v4769
        %v4800 = vadd.f32 %v4612, %v4774
        %v4801 = vadd.f32 %v4613, %v4779
        %v4802 = vadd.f32 %v4614, %v4784
        %v4803 = vadd.f32 %v4615, %v4789
        %v4804 = vadd.f32 %v4616, %v4794
        %s4805 = scalar_lea.vmem %s4429, 2 [#allocation3]
        %v4806 = vld [vmem:[%s4805] ss:$2 sm:$0xf]
        %s4807 = scalar_lea.vmem %s4429, 34 [#allocation3]
        %v4808 = vld [vmem:[%s4807] ss:$2 sm:$0xf]
        %s4809 = scalar_lea.vmem %s4429, 66 [#allocation3]
        %v4810 = vld [vmem:[%s4809] ss:$2 sm:$0xf]
        %s4811 = scalar_lea.vmem %s4429, 98 [#allocation3]
        %v4812 = vld [vmem:[%s4811] ss:$2 sm:$0xf]
        %s4813 = scalar_lea.vmem %s4429, 162 [#allocation3]
        %v4814 = vld [vmem:[%s4813] ss:$2 sm:$0xf]
        %s4815 = scalar_lea.vmem %s4429, 194 [#allocation3]
        %v4816 = vld [vmem:[%s4815] ss:$2 sm:$0xf]
        %s4817 = scalar_lea.vmem %s4429, 226 [#allocation3]
        %v4818 = vld [vmem:[%s4817] ss:$2 sm:$0xf]
        %s4819 = scalar_lea.vmem %s4429, 258 [#allocation3]
        %v4820 = vld [vmem:[%s4819] ss:$2 sm:$0xf]
        %s4821 = scalar_lea.vmem %s4429, 322 [#allocation3]
        %v4822 = vld [vmem:[%s4821] ss:$2 sm:$0xf]
        %s4823 = scalar_lea.vmem %s4429, 354 [#allocation3]
        %v4824 = vld [vmem:[%s4823] ss:$2 sm:$0xf]
        %s4825 = scalar_lea.vmem %s4429, 386 [#allocation3]
        %v4826 = vld [vmem:[%s4825] ss:$2 sm:$0xf]
        %s4827 = scalar_lea.vmem %s4429, 418 [#allocation3]
        %v4828 = vld [vmem:[%s4827] ss:$2 sm:$0xf]
        %s4829 = scalar_lea.vmem %s4429, 482 [#allocation3]
        %v4830 = vld [vmem:[%s4829] ss:$2 sm:$0xf]
        %s4831 = scalar_lea.vmem %s4429, 514 [#allocation3]
        %v4832 = vld [vmem:[%s4831] ss:$2 sm:$0xf]
        %s4833 = scalar_lea.vmem %s4429, 546 [#allocation3]
        %v4834 = vld [vmem:[%s4833] ss:$2 sm:$0xf]
        %s4835 = scalar_lea.vmem %s4429, 578 [#allocation3]
        %v4836 = vld [vmem:[%s4835] ss:$2 sm:$0xf]
        %s4837 = scalar_lea.vmem %s5, 128
        %v4838 = vld [vmem:[%s4837] sm:$0xff]
        %v4839 = vld [vmem:[%s4837 + $0x8] sm:$0xff]
        %v4856 = vcombine.low %v4806, %v4808
        %v4857 = vcombine.low %v4810, %v4812
        %v4858 = vcombine.low %v4814, %v4816
        %v4859 = vcombine.low %v4818, %v4820
        %v4860 = vcombine.low %v4822, %v4824
        %v4861 = vcombine.low %v4826, %v4828
        %v4862 = vcombine.low %v4830, %v4832
        %v4863 = vcombine.low %v4834, %v4836
        %v4864 = vsel %vm2811, %v4856, 0
        %v4866 = vsel %vm2811, %v4857, 0
        %v4868 = vsel %vm2811, %v4858, 0
        %v4870 = vsel %vm2811, %v4859, 0
        %v4872 = vsel %vm2811, %v4860, 0
        %v4874 = vsel %vm2811, %v4861, 0
        %v4876 = vsel %vm2811, %v4862, 0
        %v4878 = vsel %vm2811, %v4863, 0
        %4880 = vmatprep.subr.mxu0 0.0
        %4881 = vmatpush1.msra.mxu0 0.0
        %4882 = vmatprep.subr.mxu0 0.0
        %4883 = vmatpush1.msra.mxu0 0.0
        %4884 = vmatprep.subr.mxu0 0.0
        %4885 = vmatpush1.msra.mxu0 0.0
        %4886 = vmatprep.subr.mxu0 0.0
        %4887 = vmatpush1.msra.mxu0 0.0
        %4888 = vmatprep.subr.mxu0 0.0
        %4889 = vmatpush1.msra.mxu0 0.0
        %4890 = vmatprep.subr.mxu0 0.0
        %4891 = vmatpush1.msra.mxu0 0.0
        %4892 = vmatprep.subr.mxu0 0.0
        %4893 = vmatpush1.msra.mxu0 0.0
        %4894 = vmatprep.subr.mxu0 0.0
        %4895 = vmatpush1.msra.mxu0 0.0
        %4896 = vmatprep.subr.mxu0 0.0
        %4897 = vmatpush1.msra.mxu0 0.0
        %4898 = vmatprep.subr.mxu0 0.0
        %4899 = vmatpush1.msra.mxu0 0.0
        %4900 = vmatprep.subr.mxu0 0.0
        %4901 = vmatpush1.msra.mxu0 0.0
        %4902 = vmatprep.subr.mxu0 0.0
        %4903 = vmatpush1.msra.mxu0 0.0
        %4904 = vmatprep.subr.mxu0 0.0
        %4905 = vmatpush1.msra.mxu0 0.0
        %4906 = vmatprep.subr.mxu0 0.0
        %4907 = vmatpush1.msra.mxu0 0.0
        %4908 = vmatprep.subr.mxu0 0.0
        %4909 = vmatpush1.msra.mxu0 %v4839
        %4910 = vmatprep.subr.mxu0 0.0
        %4911 = vmatpush1.msra.mxu0 %v4838
        %4912 = vmatprep.subr.mxu0 0.0
        %4913 = vmatpush2.msra.mxu0 0.0
        %4914 = vmatprep.subr.mxu0 0.0
        %4915 = vmatpush2.msra.mxu0 0.0
        %4916 = vmatprep.subr.mxu0 0.0
        %4917 = vmatpush2.msra.mxu0 0.0
        %4918 = vmatprep.subr.mxu0 0.0
        %4919 = vmatpush2.msra.mxu0 0.0
        %4920 = vmatprep.subr.mxu0 0.0
        %4921 = vmatpush2.msra.mxu0 0.0
        %4922 = vmatprep.subr.mxu0 0.0
        %4923 = vmatpush2.msra.mxu0 0.0
        %4924 = vmatprep.subr.mxu0 0.0
        %4925 = vmatpush2.msra.mxu0 0.0
        %4926 = vmatprep.subr.mxu0 0.0
        %4927 = vmatpush2.msra.mxu0 0.0
        %4928 = vmatprep.subr.mxu0 0.0
        %4929 = vmatpush2.msra.mxu0 0.0
        %4930 = vmatprep.subr.mxu0 0.0
        %4931 = vmatpush2.msra.mxu0 0.0
        %4932 = vmatprep.subr.mxu0 0.0
        %4933 = vmatpush2.msra.mxu0 0.0
        %4934 = vmatprep.subr.mxu0 0.0
        %4935 = vmatpush2.msra.mxu0 0.0
        %4936 = vmatprep.subr.mxu0 0.0
        %4937 = vmatpush2.msra.mxu0 0.0
        %4938 = vmatprep.subr.mxu0 0.0
        %4939 = vmatpush2.msra.mxu0 0.0
        %4940 = vmatprep.subr.mxu0 0.0
        %4941 = vmatpush2.msra.mxu0 0.0
        %4942 = vmatprep.subr.mxu0 0.0
        %4943 = vmatpush2.msra.mxu0 0.0
        %4944 = vmatprep.mubr.f32.mxu0 0.0
        %4945 = vmatmul.mubr.f32.gmra.mxu0 %v4864
        %v4946 = vpop.f32.mrf.mxu0
        %v4947 = vadd.f32 0.0, %v4946
        %v4948 = vpop.f32.mrf.mxu0
        %4949 = vmatprep.mubr.f32.mxu0 0.0
        %4950 = vmatmul.mubr.f32.gmra.mxu0 %v4866
        %v4951 = vpop.f32.mrf.mxu0
        %v4952 = vadd.f32 0.0, %v4951
        %v4953 = vpop.f32.mrf.mxu0
        %4954 = vmatprep.mubr.f32.mxu0 0.0
        %4955 = vmatmul.mubr.f32.gmra.mxu0 %v4868
        %v4956 = vpop.f32.mrf.mxu0
        %v4957 = vadd.f32 0.0, %v4956
        %v4958 = vpop.f32.mrf.mxu0
        %4959 = vmatprep.mubr.f32.mxu0 0.0
        %4960 = vmatmul.mubr.f32.gmra.mxu0 %v4870
        %v4961 = vpop.f32.mrf.mxu0
        %v4962 = vadd.f32 0.0, %v4961
        %v4963 = vpop.f32.mrf.mxu0
        %4964 = vmatprep.mubr.f32.mxu0 0.0
        %4965 = vmatmul.mubr.f32.gmra.mxu0 %v4872
        %v4966 = vpop.f32.mrf.mxu0
        %v4967 = vadd.f32 0.0, %v4966
        %v4968 = vpop.f32.mrf.mxu0
        %4969 = vmatprep.mubr.f32.mxu0 0.0
        %4970 = vmatmul.mubr.f32.gmra.mxu0 %v4874
        %v4971 = vpop.f32.mrf.mxu0
        %v4972 = vadd.f32 0.0, %v4971
        %v4973 = vpop.f32.mrf.mxu0
        %4974 = vmatprep.mubr.f32.mxu0 0.0
        %4975 = vmatmul.mubr.f32.gmra.mxu0 %v4876
        %v4976 = vpop.f32.mrf.mxu0
        %v4977 = vadd.f32 0.0, %v4976
        %v4978 = vpop.f32.mrf.mxu0
        %4979 = vmatprep.mubr.f32.mxu0 0.0
        %4980 = vmatmul.mubr.f32.gmra.mxu0 %v4878
        %v4981 = vpop.f32.mrf.mxu0
        %v4982 = vadd.f32 0.0, %v4981
        %v4983 = vpop.f32.mrf.mxu0
        %4984 = vdwg.mxu0
        %v4985 = vadd.f32 %v4797, %v4947
        %v4986 = vadd.f32 %v4798, %v4952
        %v4987 = vadd.f32 %v4799, %v4957
        %v4988 = vadd.f32 %v4800, %v4962
        %v4989 = vadd.f32 %v4801, %v4967
        %v4990 = vadd.f32 %v4802, %v4972
        %v4991 = vadd.f32 %v4803, %v4977
        %v4992 = vadd.f32 %v4804, %v4982
        %v4993 = vld [vmem:[%s6] sm:$0x1]
        %v4995 = vlaneseq
        %v4996 = vshrl.u32 %v4995, 7
        %v4997 = vsub.s32 0, %v4996
        %v4998 = vrot.slane %v4993, %v4997
        %v5000 = vadd.f32 %v4985, %v4998
        %v5001 = vadd.f32 %v4986, %v4998
        %v5002 = vadd.f32 %v4987, %v4998
        %v5003 = vadd.f32 %v4988, %v4998
        %v5004 = vadd.f32 %v4989, %v4998
        %v5005 = vadd.f32 %v4990, %v4998
        %v5006 = vadd.f32 %v4991, %v4998
        %v5007 = vadd.f32 %v4992, %v4998
        %v5008 = vmax.f32 %v5000, 0.0
        %v5009 = vmax.f32 %v5001, 0.0
        %v5010 = vmax.f32 %v5002, 0.0
        %v5011 = vmax.f32 %v5003, 0.0
        %v5012 = vmax.f32 %v5004, 0.0
        %v5013 = vmax.f32 %v5005, 0.0
        %v5014 = vmax.f32 %v5006, 0.0
        %v5015 = vmax.f32 %v5007, 0.0
        %v5016 = vld [vmem:[#allocation2] ss:$2 sm:$0xf]
        %s5017 = scalar_lea.vmem [#allocation2], 16
        %v5018 = vld [vmem:[%s5017] ss:$2 sm:$0xf]
        %s5019 = scalar_lea.vmem [#allocation2], 32
        %v5020 = vld [vmem:[%s5019] ss:$2 sm:$0xf]
        %s5021 = scalar_lea.vmem [#allocation2], 48
        %v5022 = vld [vmem:[%s5021] ss:$2 sm:$0xf]
        %s5023 = scalar_lea.vmem [#allocation2], 64
        %v5024 = vld [vmem:[%s5023] ss:$2 sm:$0xf]
        %s5025 = scalar_lea.vmem [#allocation2], 80
        %v5026 = vld [vmem:[%s5025] ss:$2 sm:$0xf]
        %s5027 = scalar_lea.vmem [#allocation2], 96
        %v5028 = vld [vmem:[%s5027] ss:$2 sm:$0xf]
        %s5029 = scalar_lea.vmem [#allocation2], 112
        %v5030 = vld [vmem:[%s5029] ss:$2 sm:$0xf]
        %s5031 = scalar_lea.vmem [#allocation2], 128
        %v5032 = vld [vmem:[%s5031] ss:$2 sm:$0xf]
        %s5033 = scalar_lea.vmem [#allocation2], 144
        %v5034 = vld [vmem:[%s5033] ss:$2 sm:$0xf]
        %s5035 = scalar_lea.vmem [#allocation2], 160
        %v5036 = vld [vmem:[%s5035] ss:$2 sm:$0xf]
        %s5037 = scalar_lea.vmem [#allocation2], 176
        %v5038 = vld [vmem:[%s5037] ss:$2 sm:$0xf]
        %s5039 = scalar_lea.vmem [#allocation2], 192
        %v5040 = vld [vmem:[%s5039] ss:$2 sm:$0xf]
        %s5041 = scalar_lea.vmem [#allocation2], 208
        %v5042 = vld [vmem:[%s5041] ss:$2 sm:$0xf]
        %s5043 = scalar_lea.vmem [#allocation2], 224
        %v5044 = vld [vmem:[%s5043] ss:$2 sm:$0xf]
        %s5045 = scalar_lea.vmem [#allocation2], 240
        %v5046 = vld [vmem:[%s5045] ss:$2 sm:$0xf]
        %s5047 = scalar_lea.vmem [#allocation2], 1
        %v5048 = vld [vmem:[%s5047] ss:$2 sm:$0xf]
        %s5049 = scalar_lea.vmem [#allocation2], 17
        %v5050 = vld [vmem:[%s5049] ss:$2 sm:$0xf]
        %s5051 = scalar_lea.vmem [#allocation2], 33
        %v5052 = vld [vmem:[%s5051] ss:$2 sm:$0xf]
        %s5053 = scalar_lea.vmem [#allocation2], 49
        %v5054 = vld [vmem:[%s5053] ss:$2 sm:$0xf]
        %s5055 = scalar_lea.vmem [#allocation2], 65
        %v5056 = vld [vmem:[%s5055] ss:$2 sm:$0xf]
        %s5057 = scalar_lea.vmem [#allocation2], 81
        %v5058 = vld [vmem:[%s5057] ss:$2 sm:$0xf]
        %s5059 = scalar_lea.vmem [#allocation2], 97
        %v5060 = vld [vmem:[%s5059] ss:$2 sm:$0xf]
        %s5061 = scalar_lea.vmem [#allocation2], 113
        %v5062 = vld [vmem:[%s5061] ss:$2 sm:$0xf]
        %s5063 = scalar_lea.vmem [#allocation2], 129
        %v5064 = vld [vmem:[%s5063] ss:$2 sm:$0xf]
        %s5065 = scalar_lea.vmem [#allocation2], 145
        %v5066 = vld [vmem:[%s5065] ss:$2 sm:$0xf]
        %s5067 = scalar_lea.vmem [#allocation2], 161
        %v5068 = vld [vmem:[%s5067] ss:$2 sm:$0xf]
        %s5069 = scalar_lea.vmem [#allocation2], 177
        %v5070 = vld [vmem:[%s5069] ss:$2 sm:$0xf]
        %s5071 = scalar_lea.vmem [#allocation2], 193
        %v5072 = vld [vmem:[%s5071] ss:$2 sm:$0xf]
        %s5073 = scalar_lea.vmem [#allocation2], 209
        %v5074 = vld [vmem:[%s5073] ss:$2 sm:$0xf]
        %s5075 = scalar_lea.vmem [#allocation2], 225
        %v5076 = vld [vmem:[%s5075] ss:$2 sm:$0xf]
        %s5077 = scalar_lea.vmem [#allocation2], 241
        %v5078 = vld [vmem:[%s5077] ss:$2 sm:$0xf]
        %v5079 = vmax.f32 %v5016, %v5048
        %v5080 = vmax.f32 %v5018, %v5050
        %v5081 = vmax.f32 %v5020, %v5052
        %v5082 = vmax.f32 %v5022, %v5054
        %v5083 = vmax.f32 %v5024, %v5056
        %v5084 = vmax.f32 %v5026, %v5058
        %v5085 = vmax.f32 %v5028, %v5060
        %v5086 = vmax.f32 %v5030, %v5062
        %v5087 = vmax.f32 %v5032, %v5064
        %v5088 = vmax.f32 %v5034, %v5066
        %v5089 = vmax.f32 %v5036, %v5068
        %v5090 = vmax.f32 %v5038, %v5070
        %v5091 = vmax.f32 %v5040, %v5072
        %v5092 = vmax.f32 %v5042, %v5074
        %v5093 = vmax.f32 %v5044, %v5076
        %v5094 = vmax.f32 %v5046, %v5078
        %s5095 = scalar_lea.vmem [#allocation2], 8
        %v5096 = vld [vmem:[%s5095] ss:$2 sm:$0xf]
        %s5097 = scalar_lea.vmem %s5095, 16 [#allocation2]
        %v5098 = vld [vmem:[%s5097] ss:$2 sm:$0xf]
        %s5099 = scalar_lea.vmem %s5095, 32 [#allocation2]
        %v5100 = vld [vmem:[%s5099] ss:$2 sm:$0xf]
        %s5101 = scalar_lea.vmem %s5095, 48 [#allocation2]
        %v5102 = vld [vmem:[%s5101] ss:$2 sm:$0xf]
        %s5103 = scalar_lea.vmem %s5095, 64 [#allocation2]
        %v5104 = vld [vmem:[%s5103] ss:$2 sm:$0xf]
        %s5105 = scalar_lea.vmem %s5095, 80 [#allocation2]
        %v5106 = vld [vmem:[%s5105] ss:$2 sm:$0xf]
        %s5107 = scalar_lea.vmem %s5095, 96 [#allocation2]
        %v5108 = vld [vmem:[%s5107] ss:$2 sm:$0xf]
        %s5109 = scalar_lea.vmem %s5095, 112 [#allocation2]
        %v5110 = vld [vmem:[%s5109] ss:$2 sm:$0xf]
        %s5111 = scalar_lea.vmem %s5095, 128 [#allocation2]
        %v5112 = vld [vmem:[%s5111] ss:$2 sm:$0xf]
        %s5113 = scalar_lea.vmem %s5095, 144 [#allocation2]
        %v5114 = vld [vmem:[%s5113] ss:$2 sm:$0xf]
        %s5115 = scalar_lea.vmem %s5095, 160 [#allocation2]
        %v5116 = vld [vmem:[%s5115] ss:$2 sm:$0xf]
        %s5117 = scalar_lea.vmem %s5095, 176 [#allocation2]
        %v5118 = vld [vmem:[%s5117] ss:$2 sm:$0xf]
        %s5119 = scalar_lea.vmem %s5095, 192 [#allocation2]
        %v5120 = vld [vmem:[%s5119] ss:$2 sm:$0xf]
        %s5121 = scalar_lea.vmem %s5095, 208 [#allocation2]
        %v5122 = vld [vmem:[%s5121] ss:$2 sm:$0xf]
        %s5123 = scalar_lea.vmem %s5095, 224 [#allocation2]
        %v5124 = vld [vmem:[%s5123] ss:$2 sm:$0xf]
        %s5125 = scalar_lea.vmem %s5095, 240 [#allocation2]
        %v5126 = vld [vmem:[%s5125] ss:$2 sm:$0xf]
        %v5127 = vmax.f32 %v5079, %v5096
        %v5128 = vmax.f32 %v5080, %v5098
        %v5129 = vmax.f32 %v5081, %v5100
        %v5130 = vmax.f32 %v5082, %v5102
        %v5131 = vmax.f32 %v5083, %v5104
        %v5132 = vmax.f32 %v5084, %v5106
        %v5133 = vmax.f32 %v5085, %v5108
        %v5134 = vmax.f32 %v5086, %v5110
        %v5135 = vmax.f32 %v5087, %v5112
        %v5136 = vmax.f32 %v5088, %v5114
        %v5137 = vmax.f32 %v5089, %v5116
        %v5138 = vmax.f32 %v5090, %v5118
        %v5139 = vmax.f32 %v5091, %v5120
        %v5140 = vmax.f32 %v5092, %v5122
        %v5141 = vmax.f32 %v5093, %v5124
        %v5142 = vmax.f32 %v5094, %v5126
        %s5143 = scalar_lea.vmem %s5095, 1 [#allocation2]
        %v5144 = vld [vmem:[%s5143] ss:$2 sm:$0xf]
        %s5145 = scalar_lea.vmem %s5095, 17 [#allocation2]
        %v5146 = vld [vmem:[%s5145] ss:$2 sm:$0xf]
        %s5147 = scalar_lea.vmem %s5095, 33 [#allocation2]
        %v5148 = vld [vmem:[%s5147] ss:$2 sm:$0xf]
        %s5149 = scalar_lea.vmem %s5095, 49 [#allocation2]
        %v5150 = vld [vmem:[%s5149] ss:$2 sm:$0xf]
        %s5151 = scalar_lea.vmem %s5095, 65 [#allocation2]
        %v5152 = vld [vmem:[%s5151] ss:$2 sm:$0xf]
        %s5153 = scalar_lea.vmem %s5095, 81 [#allocation2]
        %v5154 = vld [vmem:[%s5153] ss:$2 sm:$0xf]
        %s5155 = scalar_lea.vmem %s5095, 97 [#allocation2]
        %v5156 = vld [vmem:[%s5155] ss:$2 sm:$0xf]
        %s5157 = scalar_lea.vmem %s5095, 113 [#allocation2]
        %v5158 = vld [vmem:[%s5157] ss:$2 sm:$0xf]
        %s5159 = scalar_lea.vmem %s5095, 129 [#allocation2]
        %v5160 = vld [vmem:[%s5159] ss:$2 sm:$0xf]
        %s5161 = scalar_lea.vmem %s5095, 145 [#allocation2]
        %v5162 = vld [vmem:[%s5161] ss:$2 sm:$0xf]
        %s5163 = scalar_lea.vmem %s5095, 161 [#allocation2]
        %v5164 = vld [vmem:[%s5163] ss:$2 sm:$0xf]
        %s5165 = scalar_lea.vmem %s5095, 177 [#allocation2]
        %v5166 = vld [vmem:[%s5165] ss:$2 sm:$0xf]
        %s5167 = scalar_lea.vmem %s5095, 193 [#allocation2]
        %v5168 = vld [vmem:[%s5167] ss:$2 sm:$0xf]
        %s5169 = scalar_lea.vmem %s5095, 209 [#allocation2]
        %v5170 = vld [vmem:[%s5169] ss:$2 sm:$0xf]
        %s5171 = scalar_lea.vmem %s5095, 225 [#allocation2]
        %v5172 = vld [vmem:[%s5171] ss:$2 sm:$0xf]
        %s5173 = scalar_lea.vmem %s5095, 241 [#allocation2]
        %v5174 = vld [vmem:[%s5173] ss:$2 sm:$0xf]
        %v5175 = vmax.f32 %v5127, %v5144
        %v5176 = vmax.f32 %v5128, %v5146
        %v5177 = vmax.f32 %v5129, %v5148
        %v5178 = vmax.f32 %v5130, %v5150
        %v5179 = vmax.f32 %v5131, %v5152
        %v5180 = vmax.f32 %v5132, %v5154
        %v5181 = vmax.f32 %v5133, %v5156
        %v5182 = vmax.f32 %v5134, %v5158
        %v5183 = vmax.f32 %v5135, %v5160
        %v5184 = vmax.f32 %v5136, %v5162
        %v5185 = vmax.f32 %v5137, %v5164
        %v5186 = vmax.f32 %v5138, %v5166
        %v5187 = vmax.f32 %v5139, %v5168
        %v5188 = vmax.f32 %v5140, %v5170
        %v5189 = vmax.f32 %v5141, %v5172
        %v5190 = vmax.f32 %v5142, %v5174
        %v5191 = vld [vmem:[%s7] sm:$0xff]
        %v5192 = vld [vmem:[%s7 + $0x8] sm:$0xff]
        %v5193 = vld [vmem:[%s8] sm:$0xff]
        %v5194 = vld [vmem:[%s8 + $0x8] sm:$0xff]
        %v5196 = vsel %vm2811, %v5008, 0
        %v5199 = vsel %vm2811, %v5009, 0
        %v5202 = vsel %vm2811, %v5010, 0
        %v5205 = vsel %vm2811, %v5011, 0
        %v5208 = vsel %vm2811, %v5012, 0
        %v5211 = vsel %vm2811, %v5013, 0
        %v5214 = vsel %vm2811, %v5014, 0
        %v5217 = vsel %vm2811, %v5015, 0
        %5219 = vmatprep.subr.mxu0 0.0
        %5220 = vmatpush1.msra.mxu0 0.0
        %5221 = vmatprep.subr.mxu0 0.0
        %5222 = vmatpush1.msra.mxu0 0.0
        %5223 = vmatprep.subr.mxu0 0.0
        %5224 = vmatpush1.msra.mxu0 0.0
        %5225 = vmatprep.subr.mxu0 0.0
        %5226 = vmatpush1.msra.mxu0 0.0
        %5227 = vmatprep.subr.mxu0 0.0
        %5228 = vmatpush1.msra.mxu0 0.0
        %5229 = vmatprep.subr.mxu0 0.0
        %5230 = vmatpush1.msra.mxu0 0.0
        %5231 = vmatprep.subr.mxu0 0.0
        %5232 = vmatpush1.msra.mxu0 0.0
        %5233 = vmatprep.subr.mxu0 0.0
        %5234 = vmatpush1.msra.mxu0 0.0
        %5235 = vmatprep.subr.mxu0 0.0
        %5236 = vmatpush1.msra.mxu0 0.0
        %5237 = vmatprep.subr.mxu0 0.0
        %5238 = vmatpush1.msra.mxu0 0.0
        %5239 = vmatprep.subr.mxu0 0.0
        %5240 = vmatpush1.msra.mxu0 0.0
        %5241 = vmatprep.subr.mxu0 0.0
        %5242 = vmatpush1.msra.mxu0 0.0
        %5243 = vmatprep.subr.mxu0 0.0
        %5244 = vmatpush1.msra.mxu0 0.0
        %5245 = vmatprep.subr.mxu0 0.0
        %5246 = vmatpush1.msra.mxu0 0.0
        %5247 = vmatprep.subr.mxu0 0.0
        %5248 = vmatpush1.msra.mxu0 %v5194
        %5249 = vmatprep.subr.mxu0 0.0
        %5250 = vmatpush1.msra.mxu0 %v5193
        %5251 = vmatprep.subr.mxu0 0.0
        %5252 = vmatpush2.msra.mxu0 0.0
        %5253 = vmatprep.subr.mxu0 0.0
        %5254 = vmatpush2.msra.mxu0 0.0
        %5255 = vmatprep.subr.mxu0 0.0
        %5256 = vmatpush2.msra.mxu0 0.0
        %5257 = vmatprep.subr.mxu0 0.0
        %5258 = vmatpush2.msra.mxu0 0.0
        %5259 = vmatprep.subr.mxu0 0.0
        %5260 = vmatpush2.msra.mxu0 0.0
        %5261 = vmatprep.subr.mxu0 0.0
        %5262 = vmatpush2.msra.mxu0 0.0
        %5263 = vmatprep.subr.mxu0 0.0
        %5264 = vmatpush2.msra.mxu0 0.0
        %5265 = vmatprep.subr.mxu0 0.0
        %5266 = vmatpush2.msra.mxu0 0.0
        %5267 = vmatprep.subr.mxu0 0.0
        %5268 = vmatpush2.msra.mxu0 0.0
        %5269 = vmatprep.subr.mxu0 0.0
        %5270 = vmatpush2.msra.mxu0 0.0
        %5271 = vmatprep.subr.mxu0 0.0
        %5272 = vmatpush2.msra.mxu0 0.0
        %5273 = vmatprep.subr.mxu0 0.0
        %5274 = vmatpush2.msra.mxu0 0.0
        %5275 = vmatprep.subr.mxu0 0.0
        %5276 = vmatpush2.msra.mxu0 0.0
        %5277 = vmatprep.subr.mxu0 0.0
        %5278 = vmatpush2.msra.mxu0 0.0
        %5279 = vmatprep.subr.mxu0 0.0
        %5280 = vmatpush2.msra.mxu0 0.0
        %5281 = vmatprep.subr.mxu0 0.0
        %5282 = vmatpush2.msra.mxu0 0.0
        %5283 = vmatprep.mubr.f32.mxu0 0.0
        %5284 = vmatmul.mubr.f32.gmra.mxu0 %v5196
        %v5285 = vpop.f32.mrf.mxu0
        %v5286 = vadd.f32 0.0, %v5285
        %v5287 = vpop.f32.mrf.mxu0
        %5288 = vmatprep.mubr.f32.mxu0 0.0
        %5289 = vmatmul.mubr.f32.gmra.mxu0 %v5199
        %v5290 = vpop.f32.mrf.mxu0
        %v5291 = vadd.f32 0.0, %v5290
        %v5292 = vpop.f32.mrf.mxu0
        %5293 = vmatprep.mubr.f32.mxu0 0.0
        %5294 = vmatmul.mubr.f32.gmra.mxu0 %v5202
        %v5295 = vpop.f32.mrf.mxu0
        %v5296 = vadd.f32 0.0, %v5295
        %v5297 = vpop.f32.mrf.mxu0
        %5298 = vmatprep.mubr.f32.mxu0 0.0
        %5299 = vmatmul.mubr.f32.gmra.mxu0 %v5205
        %v5300 = vpop.f32.mrf.mxu0
        %v5301 = vadd.f32 0.0, %v5300
        %v5302 = vpop.f32.mrf.mxu0
        %5303 = vmatprep.mubr.f32.mxu0 0.0
        %5304 = vmatmul.mubr.f32.gmra.mxu0 %v5208
        %v5305 = vpop.f32.mrf.mxu0
        %v5306 = vadd.f32 0.0, %v5305
        %v5307 = vpop.f32.mrf.mxu0
        %5308 = vmatprep.mubr.f32.mxu0 0.0
        %5309 = vmatmul.mubr.f32.gmra.mxu0 %v5211
        %v5310 = vpop.f32.mrf.mxu0
        %v5311 = vadd.f32 0.0, %v5310
        %v5312 = vpop.f32.mrf.mxu0
        %5313 = vmatprep.mubr.f32.mxu0 0.0
        %5314 = vmatmul.mubr.f32.gmra.mxu0 %v5214
        %v5315 = vpop.f32.mrf.mxu0
        %v5316 = vadd.f32 0.0, %v5315
        %v5317 = vpop.f32.mrf.mxu0
        %5318 = vmatprep.mubr.f32.mxu0 0.0
        %5319 = vmatmul.mubr.f32.gmra.mxu0 %v5217
        %v5320 = vpop.f32.mrf.mxu0
        %v5321 = vadd.f32 0.0, %v5320
        %v5322 = vpop.f32.mrf.mxu0
        %5323 = vdwg.mxu0
        %v5340 = vcombine.low %v5175, %v5176
        %v5341 = vcombine.low %v5177, %v5178
        %v5342 = vcombine.low %v5179, %v5180
        %v5343 = vcombine.low %v5181, %v5182
        %v5344 = vcombine.low %v5183, %v5184
        %v5345 = vcombine.low %v5185, %v5186
        %v5346 = vcombine.low %v5187, %v5188
        %v5347 = vcombine.low %v5189, %v5190
        %v5348 = vsel %vm2811, %v5340, 0
        %v5350 = vsel %vm2811, %v5341, 0
        %v5352 = vsel %vm2811, %v5342, 0
        %v5354 = vsel %vm2811, %v5343, 0
        %v5356 = vsel %vm2811, %v5344, 0
        %v5358 = vsel %vm2811, %v5345, 0
        %v5360 = vsel %vm2811, %v5346, 0
        %v5362 = vsel %vm2811, %v5347, 0
        %5364 = vmatprep.subr.mxu0 0.0
        %5365 = vmatpush1.msra.mxu0 0.0
        %5366 = vmatprep.subr.mxu0 0.0
        %5367 = vmatpush1.msra.mxu0 0.0
        %5368 = vmatprep.subr.mxu0 0.0
        %5369 = vmatpush1.msra.mxu0 0.0
        %5370 = vmatprep.subr.mxu0 0.0
        %5371 = vmatpush1.msra.mxu0 0.0
        %5372 = vmatprep.subr.mxu0 0.0
        %5373 = vmatpush1.msra.mxu0 0.0
        %5374 = vmatprep.subr.mxu0 0.0
        %5375 = vmatpush1.msra.mxu0 0.0
        %5376 = vmatprep.subr.mxu0 0.0
        %5377 = vmatpush1.msra.mxu0 0.0
        %5378 = vmatprep.subr.mxu0 0.0
        %5379 = vmatpush1.msra.mxu0 0.0
        %5380 = vmatprep.subr.mxu0 0.0
        %5381 = vmatpush1.msra.mxu0 0.0
        %5382 = vmatprep.subr.mxu0 0.0
        %5383 = vmatpush1.msra.mxu0 0.0
        %5384 = vmatprep.subr.mxu0 0.0
        %5385 = vmatpush1.msra.mxu0 0.0
        %5386 = vmatprep.subr.mxu0 0.0
        %5387 = vmatpush1.msra.mxu0 0.0
        %5388 = vmatprep.subr.mxu0 0.0
        %5389 = vmatpush1.msra.mxu0 0.0
        %5390 = vmatprep.subr.mxu0 0.0
        %5391 = vmatpush1.msra.mxu0 0.0
        %5392 = vmatprep.subr.mxu0 0.0
        %5393 = vmatpush1.msra.mxu0 %v5192
        %5394 = vmatprep.subr.mxu0 0.0
        %5395 = vmatpush1.msra.mxu0 %v5191
        %5396 = vmatprep.subr.mxu0 0.0
        %5397 = vmatpush2.msra.mxu0 0.0
        %5398 = vmatprep.subr.mxu0 0.0
        %5399 = vmatpush2.msra.mxu0 0.0
        %5400 = vmatprep.subr.mxu0 0.0
        %5401 = vmatpush2.msra.mxu0 0.0
        %5402 = vmatprep.subr.mxu0 0.0
        %5403 = vmatpush2.msra.mxu0 0.0
        %5404 = vmatprep.subr.mxu0 0.0
        %5405 = vmatpush2.msra.mxu0 0.0
        %5406 = vmatprep.subr.mxu0 0.0
        %5407 = vmatpush2.msra.mxu0 0.0
        %5408 = vmatprep.subr.mxu0 0.0
        %5409 = vmatpush2.msra.mxu0 0.0
        %5410 = vmatprep.subr.mxu0 0.0
        %5411 = vmatpush2.msra.mxu0 0.0
        %5412 = vmatprep.subr.mxu0 0.0
        %5413 = vmatpush2.msra.mxu0 0.0
        %5414 = vmatprep.subr.mxu0 0.0
        %5415 = vmatpush2.msra.mxu0 0.0
        %5416 = vmatprep.subr.mxu0 0.0
        %5417 = vmatpush2.msra.mxu0 0.0
        %5418 = vmatprep.subr.mxu0 0.0
        %5419 = vmatpush2.msra.mxu0 0.0
        %5420 = vmatprep.subr.mxu0 0.0
        %5421 = vmatpush2.msra.mxu0 0.0
        %5422 = vmatprep.subr.mxu0 0.0
        %5423 = vmatpush2.msra.mxu0 0.0
        %5424 = vmatprep.subr.mxu0 0.0
        %5425 = vmatpush2.msra.mxu0 0.0
        %5426 = vmatprep.subr.mxu0 0.0
        %5427 = vmatpush2.msra.mxu0 0.0
        %5428 = vmatprep.mubr.f32.mxu0 0.0
        %5429 = vmatmul.mubr.f32.gmra.mxu0 %v5348
        %v5430 = vpop.f32.mrf.mxu0
        %v5431 = vadd.f32 %v5286, %v5430
        %v5432 = vpop.f32.mrf.mxu0
        %5433 = vmatprep.mubr.f32.mxu0 0.0
        %5434 = vmatmul.mubr.f32.gmra.mxu0 %v5350
        %v5435 = vpop.f32.mrf.mxu0
        %v5436 = vadd.f32 %v5291, %v5435
        %v5437 = vpop.f32.mrf.mxu0
        %5438 = vmatprep.mubr.f32.mxu0 0.0
        %5439 = vmatmul.mubr.f32.gmra.mxu0 %v5352
        %v5440 = vpop.f32.mrf.mxu0
        %v5441 = vadd.f32 %v5296, %v5440
        %v5442 = vpop.f32.mrf.mxu0
        %5443 = vmatprep.mubr.f32.mxu0 0.0
        %5444 = vmatmul.mubr.f32.gmra.mxu0 %v5354
        %v5445 = vpop.f32.mrf.mxu0
        %v5446 = vadd.f32 %v5301, %v5445
        %v5447 = vpop.f32.mrf.mxu0
        %5448 = vmatprep.mubr.f32.mxu0 0.0
        %5449 = vmatmul.mubr.f32.gmra.mxu0 %v5356
        %v5450 = vpop.f32.mrf.mxu0
        %v5451 = vadd.f32 %v5306, %v5450
        %v5452 = vpop.f32.mrf.mxu0
        %5453 = vmatprep.mubr.f32.mxu0 0.0
        %5454 = vmatmul.mubr.f32.gmra.mxu0 %v5358
        %v5455 = vpop.f32.mrf.mxu0
        %v5456 = vadd.f32 %v5311, %v5455
        %v5457 = vpop.f32.mrf.mxu0
        %5458 = vmatprep.mubr.f32.mxu0 0.0
        %5459 = vmatmul.mubr.f32.gmra.mxu0 %v5360
        %v5460 = vpop.f32.mrf.mxu0
        %v5461 = vadd.f32 %v5316, %v5460
        %v5462 = vpop.f32.mrf.mxu0
        %5463 = vmatprep.mubr.f32.mxu0 0.0
        %5464 = vmatmul.mubr.f32.gmra.mxu0 %v5362
        %v5465 = vpop.f32.mrf.mxu0
        %v5466 = vadd.f32 %v5321, %v5465
        %v5467 = vpop.f32.mrf.mxu0
        %5468 = vdwg.mxu0
        %v5469 = vld [vmem:[%s9] sm:$0x1]
        %v5471 = vlaneseq
        %v5472 = vshrl.u32 %v5471, 7
        %v5473 = vsub.s32 0, %v5472
        %v5474 = vrot.slane %v5469, %v5473
        %v5476 = vadd.f32 %v5431, %v5474
        %v5477 = vadd.f32 %v5436, %v5474
        %v5478 = vadd.f32 %v5441, %v5474
        %v5479 = vadd.f32 %v5446, %v5474
        %v5480 = vadd.f32 %v5451, %v5474
        %v5481 = vadd.f32 %v5456, %v5474
        %v5482 = vadd.f32 %v5461, %v5474
        %v5483 = vadd.f32 %v5466, %v5474
        %v5484 = vmax.f32 %v5476, 0.0
        %v5485 = vmax.f32 %v5477, 0.0
        %v5486 = vmax.f32 %v5478, 0.0
        %v5487 = vmax.f32 %v5479, 0.0
        %v5488 = vmax.f32 %v5480, 0.0
        %v5489 = vmax.f32 %v5481, 0.0
        %v5490 = vmax.f32 %v5482, 0.0
        %v5491 = vmax.f32 %v5483, 0.0
        %vm5492 = vcmask 261120
        %5493 = vst.msk [vmem:[%s355] sm:$0xff] %vm5492, %v5484
        %5494 = vst.msk [vmem:[%s355 + $0x8] sm:$0xff] %vm5492, %v5485
        %5495 = vst.msk [vmem:[%s355 + $0x10] sm:$0xff] %vm5492, %v5486
        %5496 = vst.msk [vmem:[%s355 + $0x18] sm:$0xff] %vm5492, %v5487
        %5497 = vst.msk [vmem:[%s355 + $0x20] sm:$0xff] %vm5492, %v5488
        %5498 = vst.msk [vmem:[%s355 + $0x28] sm:$0xff] %vm5492, %v5489
        %5499 = vst.msk [vmem:[%s355 + $0x30] sm:$0xff] %vm5492, %v5490
        %5500 = vst.msk [vmem:[%s355 + $0x38] sm:$0xff] %vm5492, %v5491
        %s5501 = sand.u32 %s247, 1
        %s5502 = scalar_lea.sflag [#allocation5], %s5501
        %s5503 = sand.u32 %s247, 1
        %s5504 = smul.addr %s5503, 64
        %s5505 = scalar_lea.vmem [#allocation4], %s5504
        // Predicated region
        $region61: #{stem_block_pallas.1} parent=59 // pred_check
          %p5506 = pneg %p257
        $region62: #{stem_block_pallas.1} parent=59 // pred_check_branch
          %5508 = sbr.rel (%p5506) target = $region64
        $region63: #{stem_block_pallas.1} parent=59 // pred_region
          %s5509 = smul.u32 4, %s24
          %s5511 = ssub.s32 1024, 1024
          %5512 = vsyncadd %s5502, %s5511
          %s5513 = smul.addr %s5509, 2
          %s5514 = smul.addr %s5513, 128
          %s5515 = scalar_lea.hbm %s10, %s5514
          %s5516 = sshll.u32 %s5505, 4
          %s5517 = int_to_ptr.vmem [resolvable:$true] %s5516
          %5522 = dma.vmem_to_hbm [thread:$0]  %s5517, 1024, %s5515, %s5502, 128, 128, 8
        $region64: #{stem_block_pallas.1} parent=59 // pred_fallthru
          _
      $region60: #{stem_block_pallas.1} parent=5 // pred_fallthru
        _
      %p5523 = scmp.le.s32.totalorder 2, %s19
      // Predicated region
      $region65: #{stem_block_pallas.1} parent=5 // pred_check
        %p5524 = pneg %p5523
      $region66: #{stem_block_pallas.1} parent=5 // pred_check_branch
        %5526 = sbr.rel (%p5524) target = $region68
      $region67: #{stem_block_pallas.1} parent=5 // pred_region
        %s5527 = ssub.s32 %s19, 2
        // Predicated region
        $region69: #{stem_block_pallas.1} parent=67 // pred_check
          %p5528 = pneg %p263
        $region70: #{stem_block_pallas.1} parent=67 // pred_check_branch
          %5530 = sbr.rel (%p5528) target = $region72
        $region71: #{stem_block_pallas.1} parent=67 // pred_region
          %s5531 = sand.u32 %s248, 1
          %s5532 = scalar_lea.sflag [#allocation5], %s5531
          %s5533 = sand.u32 %s248, 1
          %s5534 = smul.addr %s5533, 64
          %s5535 = scalar_lea.vmem [#allocation4], %s5534
          %5536 = dma.done %s5532, 1024
        $region72: #{stem_block_pallas.1} parent=67 // pred_fallthru
          _
      $region68: #{stem_block_pallas.1} parent=5 // pred_fallthru
        _
    $region6: #{stem_block_pallas.1} parent=1 // loop_footer
      %s23 = sadd.s32 1, %s19
    $region7: #{stem_block_pallas.1} parent=1 // loop_footer_branch
      %18 = sbr.rel target = $region3
    $region8: #{stem_block_pallas.1} parent=1 // loop_exit
      _
    %5537 = vsyncpa [#allocation5], 1
    %s5538 = scalar_lea.sflag [#allocation5], 1
    %5539 = vsyncpa %s5538, 1

</llo_original>
